<compile_context>
chip_gen: v6e
topology: v6e:2x2x1
jax: 0.10.0
libtpu: 0.0.40
codegen_flags: <defaults>
</compile_context>

<pallas_src>
import functools

import jax
import jax.numpy as jnp
from jax import lax
from jax.experimental import pallas as pl
from jax.experimental.pallas import tpu as pltpu

EPS = 1e-5  # default eps of GroupNorm / LayerNorm / InstanceNorm1d

# Packed-constant lane offsets (sections that feed matmuls are 128-aligned so
# slicing them out of the packed array needs no relayout).
_W1_OFF, _P4_OFF = 0, 128                                     # wpack16 (16, 144)
_W2_OFF, _W3_OFF, _WF_OFF, _MSK_OFF, _CVEC_OFF = 0, 128, 256, 384, 704  # wpack32 (32, 712)


# --------------------------------------------------------------------------
# Fused kernel: whole forward pass for a block of Bb samples per grid step.
# Activation layout: (channels, Bb*positions) = (sublane, lane); lanes of the
# post-pool stages are 25*s + p (p < 23/21/17 valid per stage, rest masked).
# --------------------------------------------------------------------------
def _fused_kernel(p_ref, wA_ref, wB_ref, ln_ref, m1_ref, e1_ref, mp_ref, ea_ref,
                  wfc1_ref, row_ref, w2r_ref, sel_ref, bfc2_ref, o_ref, *, Bb):
    f32 = jnp.float32
    N25 = Bb * 25
    dot = lambda a, b: jnp.dot(a, b, preferred_element_type=f32)

    # ---- unpack consolidated constants (static slices) ----------------------
    wA = wA_ref[...]
    wB = wB_ref[...]
    w1 = wA[:, _W1_OFF:_W1_OFF + 64]            # (16, 64) conv1
    p4 = wA[:, _P4_OFF:_P4_OFF + 16]            # (16, 16) group membership
    w2 = wB[:, _W2_OFF:_W2_OFF + 48]            # (32, 48) conv2 (taps fused)
    w3 = wB[:, _W3_OFF:_W3_OFF + 96]            # (32, 96) conv3 (taps fused)
    wf = wB[:, _WF_OFF:_WF_OFF + 32]            # (32, 32) convf (1x1)
    msk = wB[:, _MSK_OFF:_MSK_OFF + 320]        # (32, 320) fc2 diag-pick mask
    b1 = wB[0:16, _CVEC_OFF + 0:_CVEC_OFF + 1]  # (16, 1)
    gnw = wB[0:16, _CVEC_OFF + 1:_CVEC_OFF + 2]
    gnb = wB[0:16, _CVEC_OFF + 2:_CVEC_OFF + 3]
    b2 = wB[:, _CVEC_OFF + 3:_CVEC_OFF + 4]     # (32, 1)
    b3 = wB[:, _CVEC_OFF + 4:_CVEC_OFF + 5]
    inw = wB[:, _CVEC_OFF + 5:_CVEC_OFF + 6]
    inb = wB[:, _CVEC_OFF + 6:_CVEC_OFF + 7]
    bf = wB[:, _CVEC_OFF + 7:_CVEC_OFF + 8]

    ln1w = ln_ref[0:32, :]                      # (32, N25) LayerNorm1 affine (padded/tiled)
    ln1b = ln_ref[32:64, :]
    m1 = m1_ref[...]                            # (Bb*100, Bb) sample membership (stage 1)
    e1 = e1_ref[...]                            # (Bb, Bb*100) broadcast back
    m2 = mp_ref[:, 0:Bb]                        # (N25, Bb) valid lanes p < 23
    m3 = mp_ref[:, Bb:2 * Bb]                   # p < 21
    m4 = mp_ref[:, 2 * Bb:3 * Bb]               # p < 17
    ea = ea_ref[...]                            # (Bb, N25) broadcast back
    wfc1 = wfc1_ref[...]                        # (N25, N25) block-diag fc1
    bfc1 = row_ref[0:1, :]                      # (1, N25)
    ln2w = row_ref[1:2, :]
    ln2b = row_ref[2:3, :]
    w2r = w2r_ref[...]                          # (17, 320)
    sel = sel_ref[...]                          # (320, 128) lane-dense selector
    bfc2 = bfc2_ref[...]                        # (1, 128)

    ones_c32 = jnp.ones((1, 32), f32)

    # ---- Stage 1: conv1 + GroupNorm(4,16) + ReLU + max_pool(2,2) ------------
    # lanes of y1: 25*Bb*q + 25*s + cell  (q = pool quadrant, cell = 5*i+j)
    y1 = dot(w1, p_ref[0]) + b1                                  # (16, Bb*100)
    gmean = dot(p4, dot(y1, m1)) * (1.0 / 400.0)                 # (16, Bb) per-group mean
    cen1 = y1 - dot(gmean, e1)
    gvar = dot(p4, dot(cen1 * cen1, m1)) * (1.0 / 400.0)         # two-pass variance
    scl1 = lax.rsqrt(gvar + EPS) * gnw                           # (16, Bb)
    y1r = jnp.maximum(cen1 * dot(scl1, e1) + gnb, 0.0)
    # max_pool2d(2,2): quadrant-grouped lanes -> 3 element-wise maxes.
    x1 = jnp.maximum(jnp.maximum(y1r[:, 0:N25], y1r[:, N25:2 * N25]),
                     jnp.maximum(y1r[:, 2 * N25:3 * N25], y1r[:, 3 * N25:4 * N25]))

    def taps(x):
        # k=3 conv taps for the whole block: shift lanes by 1 and 2 (wrapped
        # lanes only land in per-sample halo positions, masked in the stats).
        xb = jnp.concatenate([x[:, 1:], x[:, :1]], axis=1)
        xc = jnp.concatenate([x[:, 2:], x[:, :2]], axis=1)
        return jnp.concatenate([x, xb, xc], axis=0)

    # ---- Stage 2: conv2 + LayerNorm((32,23)) + ReLU (whole block) -----------
    y2 = dot(w2, taps(x1)) + b2                                  # (32, N25); p<23 valid
    mu2 = dot(ones_c32, dot(y2, m2)) * (1.0 / 736.0)             # (1, Bb)
    cen2 = y2 - dot(mu2, ea)
    v2 = dot(ones_c32, dot(cen2 * cen2, m2)) * (1.0 / 736.0)
    inv2 = lax.rsqrt(v2 + EPS)
    x2 = jnp.maximum(cen2 * dot(inv2, ea) * ln1w + ln1b, 0.0)    # halo lanes -> 0

    # ---- Stage 3: conv3 + InstanceNorm1d(affine) + convf + fc1 --------------
    y3 = dot(w3, taps(x2)) + b3                                  # (32, N25); r<21 valid
    mu3 = dot(y3, m3) * (1.0 / 21.0)                             # (32, Bb)
    cen3 = y3 - dot(mu3, ea)
    v3 = dot(cen3 * cen3, m3) * (1.0 / 21.0)
    scl3 = lax.rsqrt(v3 + EPS) * inw
    y3n = cen3 * dot(scl3, ea) + inb
    z = dot(wf, y3n) + bf                                        # (32, N25)
    t = dot(z, wfc1) + bfc1                                      # (32, N25); f<17 valid

    # ---- Stage 4: LayerNorm(17) ---------------------------------------------
    mu4 = dot(t, m4) * (1.0 / 17.0)                              # (32, Bb)
    cen4 = t - dot(mu4, ea)
    v4 = dot(cen4 * cen4, m4) * (1.0 / 17.0)
    inv4 = lax.rsqrt(v4 + EPS)
    tn = cen4 * dot(inv4, ea) * ln2w + ln2b                      # (32, N25); halo -> 0

    # ---- Stage 5: fc2 (tiny per-sample tail; lane-dense (Bb, 128) output) ---
    rows = []
    for s in range(Bb):                                          # static unroll
        tns = tn[:, 25 * s:25 * s + 17]                          # (32, 17)
        q = dot(tns, w2r)                                        # (32, 320)
        r = dot(ones_c32, q * msk)                               # (1, 320) MXU c-reduce
        rows.append(dot(r, sel))                                 # (1, 128)
    out = rows[0] if Bb == 1 else jnp.concatenate(rows, axis=0)  # (Bb, 128)
    o_ref[0] = out + bfc2                                        # one full-tile store


# --------------------------------------------------------------------------
# Parameters (deterministic, synthetic; mirrors the torch module's shapes)
# --------------------------------------------------------------------------
def init_params(key):
    ks = jax.random.split(key, 20)
    u = lambda k, s: jax.random.uniform(k, s, jnp.float32)        # norm affine: uniform_
    n = lambda k, s, sc: jax.random.normal(k, s, jnp.float32) * sc
    p = {}
    p["conv1_w"] = n(ks[0], (16, 1, 8, 8), 0.1)
    p["conv1_b"] = n(ks[1], (16,), 0.1)
    p["gn1_w"] = u(ks[2], (16,));  p["gn1_b"] = u(ks[3], (16,))
    p["conv2_w"] = n(ks[4], (32, 16, 3), 0.1)
    p["conv2_b"] = n(ks[5], (32,), 0.1)
    p["ln1_w"] = u(ks[6], (32, 23)); p["ln1_b"] = u(ks[7], (32, 23))
    p["conv3_w"] = n(ks[8], (32, 32, 3), 0.1)
    p["conv3_b"] = n(ks[9], (32,), 0.1)
    p["in1_w"] = u(ks[10], (32,));  p["in1_b"] = u(ks[11], (32,))
    p["convf_w"] = n(ks[12], (32, 32, 1), 0.1)   # frozen in torch; inference identical
    p["convf_b"] = n(ks[13], (32,), 0.1)
    p["fc1_w"] = n(ks[14], (17, 21), 0.1)
    p["fc1_b"] = n(ks[15], (17,), 0.1)
    p["ln2_w"] = u(ks[16], (17,));  p["ln2_b"] = u(ks[17], (17,))
    p["fc2_w"] = n(ks[18], (10, 32 * 17), 0.05)
    p["fc2_b"] = n(ks[19], (10,), 0.05)
    return p


def _pick_block(batch):
    # Lane-batch as many samples as possible per grid step (single step for
    # small batches: the grid is a serial loop on v5e/v6e, and at B=2 the
    # second step does not amortize its fixed cost on v7x either).  Cap at 8
    # to bound the block-diagonal fc1 constant and the fc2 tail.
    bb = min(batch, 8)
    while batch % bb:
        bb -= 1
    return bb


# --------------------------------------------------------------------------
# Forward pass (single fused pallas_call)
# --------------------------------------------------------------------------
def sample_conv_net_forward(x, p):
    f32 = jnp.float32
    x = x.astype(f32)
    B = x.shape[0]
    Bb = _pick_block(B)
    nb = B // Bb
    N25, N100 = Bb * 25, Bb * 100

    # ---- conv1 im2col (indexing-only glue; every FLOP runs in the kernel) ----
    cols = []
    for ki in range(8):
        for kj in range(8):
            cols.append(x[:, 0, ki:ki + 28:3, kj:kj + 28:3])      # (B, 10, 10)
    p0 = jnp.stack(cols, axis=1)                                  # (B, 64, oh, ow)
    p0 = p0.reshape(nb, Bb, 64, 5, 2, 5, 2)                       # (b, s, k, i, dh, j, dw)
    p0 = jnp.transpose(p0, (0, 2, 4, 6, 1, 3, 5))                 # (b, k, dh, dw, s, i, j)
    patches = p0.reshape(nb, 64, N100)    # lane = 25*Bb*(2dh+dw) + 25*s + 5*i + j

    # ---- packed constants (weight re-layout; pure XLA glue) ------------------
    z16 = lambda n: jnp.zeros((16, n), f32)
    z32 = lambda n: jnp.zeros((32, n), f32)

    w1 = p["conv1_w"].reshape(16, 64)
    gidx = jnp.arange(16) // 4
    p4 = (gidx[:, None] == gidx[None, :]).astype(f32)             # group membership
    wpack16 = jnp.concatenate([w1, z16(64), p4], axis=1)          # (16, 144)

    w2 = jnp.transpose(p["conv2_w"], (0, 2, 1)).reshape(32, 48)   # col = 16*k + c
    w3 = jnp.transpose(p["conv3_w"], (0, 2, 1)).reshape(32, 96)   # col = 32*k + c
    wf = p["convf_w"][:, :, 0]                                    # (32, 32)
    msk = jnp.repeat(jnp.eye(32, dtype=f32), 10, axis=1)          # (32, 320)
    col16 = lambda v: jnp.concatenate([v.reshape(16, 1), jnp.zeros((16, 1), f32)], axis=0)
    col32 = lambda v: v.reshape(32, 1)
    cvec = jnp.concatenate(
        [col16(p["conv1_b"]), col16(p["gn1_w"]), col16(p["gn1_b"]),
         col32(p["conv2_b"]), col32(p["conv3_b"]),
         col32(p["in1_w"]), col32(p["in1_b"]), col32(p["convf_b"])], axis=1)  # (32, 8)
    wpack32 = jnp.concatenate([w2, z32(80), w3, z32(32), wf, z32(96), msk, cvec],
                              axis=1)                             # (32, 712)

    ln1w_pad = jnp.tile(jnp.pad(p["ln1_w"], ((0, 0), (0, 2))), (1, Bb))  # (32, N25)
    ln1b_pad = jnp.tile(jnp.pad(p["ln1_b"], ((0, 0), (0, 2))), (1, Bb))
    lnpack = jnp.concatenate([ln1w_pad, ln1b_pad], axis=0)               # (64, N25)

    # Sample-membership / validity matrices: all norm stats become matmuls.
    sidx = jnp.arange(Bb)
    lane1 = jnp.arange(N100)
    m1 = (((lane1 % N25) // 25)[:, None] == sidx[None, :]).astype(f32)   # (N100, Bb)
    e1 = m1.T                                                            # (Bb, N100)
    lane2 = jnp.arange(N25)
    smask = ((lane2 // 25)[:, None] == sidx[None, :])                    # (N25, Bb)
    pos2 = lane2 % 25
    m2 = (smask & (pos2 < 23)[:, None]).astype(f32)
    m3 = (smask & (pos2 < 21)[:, None]).astype(f32)
    m4 = (smask & (pos2 < 17)[:, None]).astype(f32)
    mpack = jnp.concatenate([m2, m3, m4], axis=1)                        # (N25, 3*Bb)
    eall = smask.astype(f32).T                                           # (Bb, N25)

    # Block-diagonal fc1 (also zeroes the per-sample halo lanes).
    blk = jnp.pad(p["fc1_w"].T, ((0, 4), (0, 8)))                        # (25, 25)
    wfc1big = jnp.kron(jnp.eye(Bb, dtype=f32), blk)                      # (N25, N25)

    bfc1_row = jnp.tile(jnp.pad(p["fc1_b"], (0, 8)), Bb)                 # (N25,)
    ln2w_row = jnp.tile(jnp.pad(p["ln2_w"], (0, 8)), Bb)
    ln2b_row = jnp.tile(jnp.pad(p["ln2_b"], (0, 8)), Bb)
    rowpack = jnp.stack([bfc1_row, ln2w_row, ln2b_row], axis=0)          # (3, N25)

    # fc2: W2r[f, 10c+o] = W2[o, 17c+f]; selector pre-padded to 128 lanes.
    w2r = p["fc2_w"].reshape(10, 32, 17).transpose(2, 1, 0).reshape(17, 320)
    selpad = jnp.pad(jnp.tile(jnp.eye(10, dtype=f32), (32, 1)), ((0, 0), (0, 118)))
    bfc2pad = jnp.pad(p["fc2_b"], (0, 118)).reshape(1, 128)

    def cspec(a):
        nd = a.ndim
        return pl.BlockSpec(a.shape, lambda b, _n=nd: (0,) * _n)

    consts = (wpack16, wpack32, lnpack, m1, e1, mpack, eall, wfc1big,
              rowpack, w2r, selpad, bfc2pad)

    out = pl.pallas_call(
        functools.partial(_fused_kernel, Bb=Bb),
        out_shape=jax.ShapeDtypeStruct((nb, Bb, 128), f32),
        grid=(nb,),
        in_specs=[pl.BlockSpec((1, 64, N100), lambda b: (b, 0, 0))]
                 + [cspec(c) for c in consts],
        out_specs=pl.BlockSpec((1, Bb, 128), lambda b: (b, 0, 0)),
        compiler_params=pltpu.CompilerParams(dimension_semantics=("parallel",)),
    )(patches, *consts)

    return out.reshape(B, 128)[:, :10]


if __name__ == "__main__":
    key = jax.random.PRNGKey(0)
    kx, kp = jax.random.split(key)
    # Input layout matches PyTorch NCHW: (batch=2, channels=1, 35, 35).
    x = jax.random.normal(kx, (2, 1, 35, 35), jnp.float32)
    params = init_params(kp)

    fwd = jax.jit(functools.partial(sample_conv_net_forward, p=params))
    out = fwd(x)
    jax.block_until_ready(out)
    assert out.shape == (2, 10) and out.dtype == jnp.float32
    assert bool(jnp.all(jnp.isfinite(out)))
    print("KERNEL_OK")
</pallas_src>

<mosaic_0001>
module attributes {stable_mosaic.version = 11 : i64} {
  func.func @_fused_kernel(%arg0: i32, %arg1: memref<1x64x200xf32, #tpu.memory_space<vmem>>, %arg2: memref<16x144xf32, #tpu.memory_space<vmem>>, %arg3: memref<32x712xf32, #tpu.memory_space<vmem>>, %arg4: memref<64x50xf32, #tpu.memory_space<vmem>>, %arg5: memref<200x2xf32, #tpu.memory_space<vmem>>, %arg6: memref<2x200xf32, #tpu.memory_space<vmem>>, %arg7: memref<50x6xf32, #tpu.memory_space<vmem>>, %arg8: memref<2x50xf32, #tpu.memory_space<vmem>>, %arg9: memref<50x50xf32, #tpu.memory_space<vmem>>, %arg10: memref<3x50xf32, #tpu.memory_space<vmem>>, %arg11: memref<17x320xf32, #tpu.memory_space<vmem>>, %arg12: memref<320x128xf32, #tpu.memory_space<vmem>>, %arg13: memref<1x128xf32, #tpu.memory_space<vmem>>, %arg14: memref<1x2x128xf32, #tpu.memory_space<vmem>>) attributes {dimension_semantics = [#tpu.dimension_semantics<parallel>], iteration_bounds = array<i64: 1>, scalar_prefetch = 0 : i64, scratch_operands = 0 : i64, tpu.core_type = #tpu.core_type<tc>, window_params = [{transform_indices = @transform_0, window_bounds = array<i64: 1, 64, 200>}, {pipeline_mode = #tpu.pipeline_mode<synchronous>, transform_indices = @transform_1, window_bounds = array<i64: 16, 144>}, {pipeline_mode = #tpu.pipeline_mode<synchronous>, transform_indices = @transform_2, window_bounds = array<i64: 32, 712>}, {pipeline_mode = #tpu.pipeline_mode<synchronous>, transform_indices = @transform_3, window_bounds = array<i64: 64, 50>}, {pipeline_mode = #tpu.pipeline_mode<synchronous>, transform_indices = @transform_4, window_bounds = array<i64: 200, 2>}, {pipeline_mode = #tpu.pipeline_mode<synchronous>, transform_indices = @transform_5, window_bounds = array<i64: 2, 200>}, {pipeline_mode = #tpu.pipeline_mode<synchronous>, transform_indices = @transform_6, window_bounds = array<i64: 50, 6>}, {pipeline_mode = #tpu.pipeline_mode<synchronous>, transform_indices = @transform_7, window_bounds = array<i64: 2, 50>}, {pipeline_mode = #tpu.pipeline_mode<synchronous>, transform_indices = @transform_8, window_bounds = array<i64: 50, 50>}, {pipeline_mode = #tpu.pipeline_mode<synchronous>, transform_indices = @transform_9, window_bounds = array<i64: 3, 50>}, {pipeline_mode = #tpu.pipeline_mode<synchronous>, transform_indices = @transform_10, window_bounds = array<i64: 17, 320>}, {pipeline_mode = #tpu.pipeline_mode<synchronous>, transform_indices = @transform_11, window_bounds = array<i64: 320, 128>}, {pipeline_mode = #tpu.pipeline_mode<synchronous>, transform_indices = @transform_12, window_bounds = array<i64: 1, 128>}, {transform_indices = @transform_13, window_bounds = array<i64: 1, 2, 128>}]} {
    %c0 = arith.constant 0 : index
    %c0_0 = arith.constant 0 : index
    %0 = vector.load %arg2[%c0, %c0_0] : memref<16x144xf32, #tpu.memory_space<vmem>>, vector<16x144xf32>
    %c0_1 = arith.constant 0 : index
    %c0_2 = arith.constant 0 : index
    %1 = vector.load %arg3[%c0_1, %c0_2] : memref<32x712xf32, #tpu.memory_space<vmem>>, vector<32x712xf32>
    %2 = vector.extract_strided_slice %0 {offsets = [0, 0], sizes = [16, 64], strides = [1, 1]} : vector<16x144xf32> to vector<16x64xf32>
    %3 = vector.extract_strided_slice %0 {offsets = [0, 128], sizes = [16, 16], strides = [1, 1]} : vector<16x144xf32> to vector<16x16xf32>
    %4 = vector.extract_strided_slice %1 {offsets = [0, 0], sizes = [32, 48], strides = [1, 1]} : vector<32x712xf32> to vector<32x48xf32>
    %5 = vector.extract_strided_slice %1 {offsets = [0, 128], sizes = [32, 96], strides = [1, 1]} : vector<32x712xf32> to vector<32x96xf32>
    %6 = vector.extract_strided_slice %1 {offsets = [0, 256], sizes = [32, 32], strides = [1, 1]} : vector<32x712xf32> to vector<32x32xf32>
    %7 = vector.extract_strided_slice %1 {offsets = [0, 384], sizes = [32, 320], strides = [1, 1]} : vector<32x712xf32> to vector<32x320xf32>
    %8 = vector.extract_strided_slice %1 {offsets = [0, 704], sizes = [16, 1], strides = [1, 1]} : vector<32x712xf32> to vector<16x1xf32>
    %9 = vector.extract_strided_slice %1 {offsets = [0, 705], sizes = [16, 1], strides = [1, 1]} : vector<32x712xf32> to vector<16x1xf32>
    %10 = vector.extract_strided_slice %1 {offsets = [0, 706], sizes = [16, 1], strides = [1, 1]} : vector<32x712xf32> to vector<16x1xf32>
    %11 = vector.extract_strided_slice %1 {offsets = [0, 707], sizes = [32, 1], strides = [1, 1]} : vector<32x712xf32> to vector<32x1xf32>
    %12 = vector.extract_strided_slice %1 {offsets = [0, 708], sizes = [32, 1], strides = [1, 1]} : vector<32x712xf32> to vector<32x1xf32>
    %13 = vector.extract_strided_slice %1 {offsets = [0, 709], sizes = [32, 1], strides = [1, 1]} : vector<32x712xf32> to vector<32x1xf32>
    %14 = vector.extract_strided_slice %1 {offsets = [0, 710], sizes = [32, 1], strides = [1, 1]} : vector<32x712xf32> to vector<32x1xf32>
    %15 = vector.extract_strided_slice %1 {offsets = [0, 711], sizes = [32, 1], strides = [1, 1]} : vector<32x712xf32> to vector<32x1xf32>
    %c0_3 = arith.constant 0 : index
    %c0_4 = arith.constant 0 : index
    %16 = vector.load %arg4[%c0_3, %c0_4] : memref<64x50xf32, #tpu.memory_space<vmem>>, vector<32x50xf32>
    %c32 = arith.constant 32 : index
    %c0_5 = arith.constant 0 : index
    %17 = vector.load %arg4[%c32, %c0_5] : memref<64x50xf32, #tpu.memory_space<vmem>>, vector<32x50xf32>
    %c0_6 = arith.constant 0 : index
    %c0_7 = arith.constant 0 : index
    %18 = vector.load %arg5[%c0_6, %c0_7] : memref<200x2xf32, #tpu.memory_space<vmem>>, vector<200x2xf32>
    %c0_8 = arith.constant 0 : index
    %c0_9 = arith.constant 0 : index
    %19 = vector.load %arg6[%c0_8, %c0_9] : memref<2x200xf32, #tpu.memory_space<vmem>>, vector<2x200xf32>
    %c0_10 = arith.constant 0 : index
    %c0_11 = arith.constant 0 : index
    %20 = vector.load %arg7[%c0_10, %c0_11] : memref<50x6xf32, #tpu.memory_space<vmem>>, vector<50x2xf32>
    %c0_12 = arith.constant 0 : index
    %c2 = arith.constant 2 : index
    %21 = vector.load %arg7[%c0_12, %c2] : memref<50x6xf32, #tpu.memory_space<vmem>>, vector<50x2xf32>
    %c0_13 = arith.constant 0 : index
    %c4 = arith.constant 4 : index
    %22 = vector.load %arg7[%c0_13, %c4] : memref<50x6xf32, #tpu.memory_space<vmem>>, vector<50x2xf32>
    %c0_14 = arith.constant 0 : index
    %c0_15 = arith.constant 0 : index
    %23 = vector.load %arg8[%c0_14, %c0_15] : memref<2x50xf32, #tpu.memory_space<vmem>>, vector<2x50xf32>
    %c0_16 = arith.constant 0 : index
    %c0_17 = arith.constant 0 : index
    %24 = vector.load %arg9[%c0_16, %c0_17] : memref<50x50xf32, #tpu.memory_space<vmem>>, vector<50x50xf32>
    %c0_18 = arith.constant 0 : index
    %c0_19 = arith.constant 0 : index
    %25 = vector.load %arg10[%c0_18, %c0_19] : memref<3x50xf32, #tpu.memory_space<vmem>>, vector<1x50xf32>
    %c1 = arith.constant 1 : index
    %c0_20 = arith.constant 0 : index
    %26 = vector.load %arg10[%c1, %c0_20] : memref<3x50xf32, #tpu.memory_space<vmem>>, vector<1x50xf32>
    %c2_21 = arith.constant 2 : index
    %c0_22 = arith.constant 0 : index
    %27 = vector.load %arg10[%c2_21, %c0_22] : memref<3x50xf32, #tpu.memory_space<vmem>>, vector<1x50xf32>
    %c0_23 = arith.constant 0 : index
    %c0_24 = arith.constant 0 : index
    %28 = vector.load %arg11[%c0_23, %c0_24] : memref<17x320xf32, #tpu.memory_space<vmem>>, vector<17x320xf32>
    %c0_25 = arith.constant 0 : index
    %c0_26 = arith.constant 0 : index
    %29 = vector.load %arg12[%c0_25, %c0_26] : memref<320x128xf32, #tpu.memory_space<vmem>>, vector<320x128xf32>
    %c0_27 = arith.constant 0 : index
    %c0_28 = arith.constant 0 : index
    %30 = vector.load %arg13[%c0_27, %c0_28] : memref<1x128xf32, #tpu.memory_space<vmem>>, vector<1x128xf32>
    %cst = arith.constant 1.000000e+00 : f32
    %31 = vector.broadcast %cst : f32 to vector<1x32xf32>
    %c0_29 = arith.constant 0 : index
    %c0_30 = arith.constant 0 : index
    %c0_31 = arith.constant 0 : index
    %32 = vector.load %arg1[%c0_29, %c0_30, %c0_31] : memref<1x64x200xf32, #tpu.memory_space<vmem>>, vector<1x64x200xf32>
    %33 = vector.shape_cast %32 : vector<1x64x200xf32> to vector<64x200xf32>
    %cst_32 = arith.constant dense<0.000000e+00> : vector<16x200xf32>
    %34 = tpu.matmul %2, %33, %cst_32 {dimension_numbers = #tpu.dot_dimension_numbers<[1], [0], [0], [1], [0, 0, 1, 1], [], []>} : vector<16x64xf32>, vector<64x200xf32>, vector<16x200xf32> -> vector<16x200xf32>
    %35 = vector.broadcast %8 : vector<16x1xf32> to vector<16x200xf32>
    %36 = arith.addf %34, %35 : vector<16x200xf32>
    %cst_33 = arith.constant dense<0.000000e+00> : vector<16x2xf32>
    %37 = tpu.matmul %36, %18, %cst_33 {dimension_numbers = #tpu.dot_dimension_numbers<[1], [0], [0], [1], [0, 0, 1, 1], [], []>} : vector<16x200xf32>, vector<200x2xf32>, vector<16x2xf32> -> vector<16x2xf32>
    %cst_34 = arith.constant dense<0.000000e+00> : vector<16x2xf32>
    %38 = tpu.matmul %3, %37, %cst_34 {dimension_numbers = #tpu.dot_dimension_numbers<[1], [0], [0], [1], [0, 0, 1, 1], [], []>} : vector<16x16xf32>, vector<16x2xf32>, vector<16x2xf32> -> vector<16x2xf32>
    %cst_35 = arith.constant 2.500000e-03 : f32
    %39 = vector.broadcast %cst_35 : f32 to vector<16x2xf32>
    %40 = arith.mulf %38, %39 : vector<16x2xf32>
    %cst_36 = arith.constant dense<0.000000e+00> : vector<16x200xf32>
    %41 = tpu.matmul %40, %19, %cst_36 {dimension_numbers = #tpu.dot_dimension_numbers<[1], [0], [0], [1], [0, 0, 1, 1], [], []>} : vector<16x2xf32>, vector<2x200xf32>, vector<16x200xf32> -> vector<16x200xf32>
    %42 = arith.subf %36, %41 : vector<16x200xf32>
    %43 = arith.mulf %42, %42 : vector<16x200xf32>
    %cst_37 = arith.constant dense<0.000000e+00> : vector<16x2xf32>
    %44 = tpu.matmul %43, %18, %cst_37 {dimension_numbers = #tpu.dot_dimension_numbers<[1], [0], [0], [1], [0, 0, 1, 1], [], []>} : vector<16x200xf32>, vector<200x2xf32>, vector<16x2xf32> -> vector<16x2xf32>
    %cst_38 = arith.constant dense<0.000000e+00> : vector<16x2xf32>
    %45 = tpu.matmul %3, %44, %cst_38 {dimension_numbers = #tpu.dot_dimension_numbers<[1], [0], [0], [1], [0, 0, 1, 1], [], []>} : vector<16x16xf32>, vector<16x2xf32>, vector<16x2xf32> -> vector<16x2xf32>
    %cst_39 = arith.constant 2.500000e-03 : f32
    %46 = vector.broadcast %cst_39 : f32 to vector<16x2xf32>
    %47 = arith.mulf %45, %46 : vector<16x2xf32>
    %cst_40 = arith.constant 9.99999974E-6 : f32
    %48 = vector.broadcast %cst_40 : f32 to vector<16x2xf32>
    %49 = arith.addf %47, %48 : vector<16x2xf32>
    %50 = math.rsqrt %49 : vector<16x2xf32>
    %51 = vector.broadcast %9 : vector<16x1xf32> to vector<16x2xf32>
    %52 = arith.mulf %50, %51 : vector<16x2xf32>
    %cst_41 = arith.constant dense<0.000000e+00> : vector<16x200xf32>
    %53 = tpu.matmul %52, %19, %cst_41 {dimension_numbers = #tpu.dot_dimension_numbers<[1], [0], [0], [1], [0, 0, 1, 1], [], []>} : vector<16x2xf32>, vector<2x200xf32>, vector<16x200xf32> -> vector<16x200xf32>
    %54 = arith.mulf %42, %53 : vector<16x200xf32>
    %55 = vector.broadcast %10 : vector<16x1xf32> to vector<16x200xf32>
    %56 = arith.addf %54, %55 : vector<16x200xf32>
    %cst_42 = arith.constant 0.000000e+00 : f32
    %57 = vector.broadcast %cst_42 : f32 to vector<16x200xf32>
    %58 = arith.maximumf %56, %57 : vector<16x200xf32>
    %59 = vector.extract_strided_slice %58 {offsets = [0, 0], sizes = [16, 50], strides = [1, 1]} : vector<16x200xf32> to vector<16x50xf32>
    %60 = vector.extract_strided_slice %58 {offsets = [0, 50], sizes = [16, 50], strides = [1, 1]} : vector<16x200xf32> to vector<16x50xf32>
    %61 = arith.maximumf %59, %60 : vector<16x50xf32>
    %62 = vector.extract_strided_slice %58 {offsets = [0, 100], sizes = [16, 50], strides = [1, 1]} : vector<16x200xf32> to vector<16x50xf32>
    %63 = vector.extract_strided_slice %58 {offsets = [0, 150], sizes = [16, 50], strides = [1, 1]} : vector<16x200xf32> to vector<16x50xf32>
    %64 = arith.maximumf %62, %63 : vector<16x50xf32>
    %65 = arith.maximumf %61, %64 : vector<16x50xf32>
    %66 = vector.extract_strided_slice %65 {offsets = [0, 1], sizes = [16, 49], strides = [1, 1]} : vector<16x50xf32> to vector<16x49xf32>
    %67 = vector.extract_strided_slice %65 {offsets = [0, 0], sizes = [16, 1], strides = [1, 1]} : vector<16x50xf32> to vector<16x1xf32>
    %68 = tpu.concatenate %66, %67 in 1 : vector<16x49xf32>, vector<16x1xf32> -> vector<16x50xf32>
    %69 = vector.extract_strided_slice %65 {offsets = [0, 2], sizes = [16, 48], strides = [1, 1]} : vector<16x50xf32> to vector<16x48xf32>
    %70 = vector.extract_strided_slice %65 {offsets = [0, 0], sizes = [16, 2], strides = [1, 1]} : vector<16x50xf32> to vector<16x2xf32>
    %71 = tpu.concatenate %69, %70 in 1 : vector<16x48xf32>, vector<16x2xf32> -> vector<16x50xf32>
    %72 = tpu.concatenate %65, %68, %71 in 0 : vector<16x50xf32>, vector<16x50xf32>, vector<16x50xf32> -> vector<48x50xf32>
    %cst_43 = arith.constant dense<0.000000e+00> : vector<32x50xf32>
    %73 = tpu.matmul %4, %72, %cst_43 {dimension_numbers = #tpu.dot_dimension_numbers<[1], [0], [0], [1], [0, 0, 1, 1], [], []>} : vector<32x48xf32>, vector<48x50xf32>, vector<32x50xf32> -> vector<32x50xf32>
    %74 = vector.broadcast %11 : vector<32x1xf32> to vector<32x50xf32>
    %75 = arith.addf %73, %74 : vector<32x50xf32>
    %cst_44 = arith.constant dense<0.000000e+00> : vector<32x2xf32>
    %76 = tpu.matmul %75, %20, %cst_44 {dimension_numbers = #tpu.dot_dimension_numbers<[1], [0], [0], [1], [0, 0, 1, 1], [], []>} : vector<32x50xf32>, vector<50x2xf32>, vector<32x2xf32> -> vector<32x2xf32>
    %cst_45 = arith.constant dense<0.000000e+00> : vector<1x2xf32>
    %77 = tpu.matmul %31, %76, %cst_45 {dimension_numbers = #tpu.dot_dimension_numbers<[1], [0], [0], [1], [0, 0, 1, 1], [], []>} : vector<1x32xf32>, vector<32x2xf32>, vector<1x2xf32> -> vector<1x2xf32>
    %cst_46 = arith.constant 0.00135869568 : f32
    %78 = vector.broadcast %cst_46 : f32 to vector<1x2xf32>
    %79 = arith.mulf %77, %78 : vector<1x2xf32>
    %cst_47 = arith.constant dense<0.000000e+00> : vector<1x50xf32>
    %80 = tpu.matmul %79, %23, %cst_47 {dimension_numbers = #tpu.dot_dimension_numbers<[1], [0], [0], [1], [0, 0, 1, 1], [], []>} : vector<1x2xf32>, vector<2x50xf32>, vector<1x50xf32> -> vector<1x50xf32>
    %81 = vector.broadcast %80 : vector<1x50xf32> to vector<32x50xf32>
    %82 = arith.subf %75, %81 : vector<32x50xf32>
    %83 = arith.mulf %82, %82 : vector<32x50xf32>
    %cst_48 = arith.constant dense<0.000000e+00> : vector<32x2xf32>
    %84 = tpu.matmul %83, %20, %cst_48 {dimension_numbers = #tpu.dot_dimension_numbers<[1], [0], [0], [1], [0, 0, 1, 1], [], []>} : vector<32x50xf32>, vector<50x2xf32>, vector<32x2xf32> -> vector<32x2xf32>
    %cst_49 = arith.constant dense<0.000000e+00> : vector<1x2xf32>
    %85 = tpu.matmul %31, %84, %cst_49 {dimension_numbers = #tpu.dot_dimension_numbers<[1], [0], [0], [1], [0, 0, 1, 1], [], []>} : vector<1x32xf32>, vector<32x2xf32>, vector<1x2xf32> -> vector<1x2xf32>
    %cst_50 = arith.constant 0.00135869568 : f32
    %86 = vector.broadcast %cst_50 : f32 to vector<1x2xf32>
    %87 = arith.mulf %85, %86 : vector<1x2xf32>
    %cst_51 = arith.constant 9.99999974E-6 : f32
    %88 = vector.broadcast %cst_51 : f32 to vector<1x2xf32>
    %89 = arith.addf %87, %88 : vector<1x2xf32>
    %90 = math.rsqrt %89 : vector<1x2xf32>
    %cst_52 = arith.constant dense<0.000000e+00> : vector<1x50xf32>
    %91 = tpu.matmul %90, %23, %cst_52 {dimension_numbers = #tpu.dot_dimension_numbers<[1], [0], [0], [1], [0, 0, 1, 1], [], []>} : vector<1x2xf32>, vector<2x50xf32>, vector<1x50xf32> -> vector<1x50xf32>
    %92 = vector.broadcast %91 : vector<1x50xf32> to vector<32x50xf32>
    %93 = arith.mulf %82, %92 : vector<32x50xf32>
    %94 = arith.mulf %93, %16 : vector<32x50xf32>
    %95 = arith.addf %94, %17 : vector<32x50xf32>
    %cst_53 = arith.constant 0.000000e+00 : f32
    %96 = vector.broadcast %cst_53 : f32 to vector<32x50xf32>
    %97 = arith.maximumf %95, %96 : vector<32x50xf32>
    %98 = vector.extract_strided_slice %97 {offsets = [0, 1], sizes = [32, 49], strides = [1, 1]} : vector<32x50xf32> to vector<32x49xf32>
    %99 = vector.extract_strided_slice %97 {offsets = [0, 0], sizes = [32, 1], strides = [1, 1]} : vector<32x50xf32> to vector<32x1xf32>
    %100 = tpu.concatenate %98, %99 in 1 : vector<32x49xf32>, vector<32x1xf32> -> vector<32x50xf32>
    %101 = vector.extract_strided_slice %97 {offsets = [0, 2], sizes = [32, 48], strides = [1, 1]} : vector<32x50xf32> to vector<32x48xf32>
    %102 = vector.extract_strided_slice %97 {offsets = [0, 0], sizes = [32, 2], strides = [1, 1]} : vector<32x50xf32> to vector<32x2xf32>
    %103 = tpu.concatenate %101, %102 in 1 : vector<32x48xf32>, vector<32x2xf32> -> vector<32x50xf32>
    %104 = tpu.concatenate %97, %100, %103 in 0 : vector<32x50xf32>, vector<32x50xf32>, vector<32x50xf32> -> vector<96x50xf32>
    %cst_54 = arith.constant dense<0.000000e+00> : vector<32x50xf32>
    %105 = tpu.matmul %5, %104, %cst_54 {dimension_numbers = #tpu.dot_dimension_numbers<[1], [0], [0], [1], [0, 0, 1, 1], [], []>} : vector<32x96xf32>, vector<96x50xf32>, vector<32x50xf32> -> vector<32x50xf32>
    %106 = vector.broadcast %12 : vector<32x1xf32> to vector<32x50xf32>
    %107 = arith.addf %105, %106 : vector<32x50xf32>
    %cst_55 = arith.constant dense<0.000000e+00> : vector<32x2xf32>
    %108 = tpu.matmul %107, %21, %cst_55 {dimension_numbers = #tpu.dot_dimension_numbers<[1], [0], [0], [1], [0, 0, 1, 1], [], []>} : vector<32x50xf32>, vector<50x2xf32>, vector<32x2xf32> -> vector<32x2xf32>
    %cst_56 = arith.constant 0.0476190485 : f32
    %109 = vector.broadcast %cst_56 : f32 to vector<32x2xf32>
    %110 = arith.mulf %108, %109 : vector<32x2xf32>
    %cst_57 = arith.constant dense<0.000000e+00> : vector<32x50xf32>
    %111 = tpu.matmul %110, %23, %cst_57 {dimension_numbers = #tpu.dot_dimension_numbers<[1], [0], [0], [1], [0, 0, 1, 1], [], []>} : vector<32x2xf32>, vector<2x50xf32>, vector<32x50xf32> -> vector<32x50xf32>
    %112 = arith.subf %107, %111 : vector<32x50xf32>
    %113 = arith.mulf %112, %112 : vector<32x50xf32>
    %cst_58 = arith.constant dense<0.000000e+00> : vector<32x2xf32>
    %114 = tpu.matmul %113, %21, %cst_58 {dimension_numbers = #tpu.dot_dimension_numbers<[1], [0], [0], [1], [0, 0, 1, 1], [], []>} : vector<32x50xf32>, vector<50x2xf32>, vector<32x2xf32> -> vector<32x2xf32>
    %cst_59 = arith.constant 0.0476190485 : f32
    %115 = vector.broadcast %cst_59 : f32 to vector<32x2xf32>
    %116 = arith.mulf %114, %115 : vector<32x2xf32>
    %cst_60 = arith.constant 9.99999974E-6 : f32
    %117 = vector.broadcast %cst_60 : f32 to vector<32x2xf32>
    %118 = arith.addf %116, %117 : vector<32x2xf32>
    %119 = math.rsqrt %118 : vector<32x2xf32>
    %120 = vector.broadcast %13 : vector<32x1xf32> to vector<32x2xf32>
    %121 = arith.mulf %119, %120 : vector<32x2xf32>
    %cst_61 = arith.constant dense<0.000000e+00> : vector<32x50xf32>
    %122 = tpu.matmul %121, %23, %cst_61 {dimension_numbers = #tpu.dot_dimension_numbers<[1], [0], [0], [1], [0, 0, 1, 1], [], []>} : vector<32x2xf32>, vector<2x50xf32>, vector<32x50xf32> -> vector<32x50xf32>
    %123 = arith.mulf %112, %122 : vector<32x50xf32>
    %124 = vector.broadcast %14 : vector<32x1xf32> to vector<32x50xf32>
    %125 = arith.addf %123, %124 : vector<32x50xf32>
    %cst_62 = arith.constant dense<0.000000e+00> : vector<32x50xf32>
    %126 = tpu.matmul %6, %125, %cst_62 {dimension_numbers = #tpu.dot_dimension_numbers<[1], [0], [0], [1], [0, 0, 1, 1], [], []>} : vector<32x32xf32>, vector<32x50xf32>, vector<32x50xf32> -> vector<32x50xf32>
    %127 = vector.broadcast %15 : vector<32x1xf32> to vector<32x50xf32>
    %128 = arith.addf %126, %127 : vector<32x50xf32>
    %cst_63 = arith.constant dense<0.000000e+00> : vector<32x50xf32>
    %129 = tpu.matmul %128, %24, %cst_63 {dimension_numbers = #tpu.dot_dimension_numbers<[1], [0], [0], [1], [0, 0, 1, 1], [], []>} : vector<32x50xf32>, vector<50x50xf32>, vector<32x50xf32> -> vector<32x50xf32>
    %130 = vector.broadcast %25 : vector<1x50xf32> to vector<32x50xf32>
    %131 = arith.addf %129, %130 : vector<32x50xf32>
    %cst_64 = arith.constant dense<0.000000e+00> : vector<32x2xf32>
    %132 = tpu.matmul %131, %22, %cst_64 {dimension_numbers = #tpu.dot_dimension_numbers<[1], [0], [0], [1], [0, 0, 1, 1], [], []>} : vector<32x50xf32>, vector<50x2xf32>, vector<32x2xf32> -> vector<32x2xf32>
    %cst_65 = arith.constant 0.0588235296 : f32
    %133 = vector.broadcast %cst_65 : f32 to vector<32x2xf32>
    %134 = arith.mulf %132, %133 : vector<32x2xf32>
    %cst_66 = arith.constant dense<0.000000e+00> : vector<32x50xf32>
    %135 = tpu.matmul %134, %23, %cst_66 {dimension_numbers = #tpu.dot_dimension_numbers<[1], [0], [0], [1], [0, 0, 1, 1], [], []>} : vector<32x2xf32>, vector<2x50xf32>, vector<32x50xf32> -> vector<32x50xf32>
    %136 = arith.subf %131, %135 : vector<32x50xf32>
    %137 = arith.mulf %136, %136 : vector<32x50xf32>
    %cst_67 = arith.constant dense<0.000000e+00> : vector<32x2xf32>
    %138 = tpu.matmul %137, %22, %cst_67 {dimension_numbers = #tpu.dot_dimension_numbers<[1], [0], [0], [1], [0, 0, 1, 1], [], []>} : vector<32x50xf32>, vector<50x2xf32>, vector<32x2xf32> -> vector<32x2xf32>
    %cst_68 = arith.constant 0.0588235296 : f32
    %139 = vector.broadcast %cst_68 : f32 to vector<32x2xf32>
    %140 = arith.mulf %138, %139 : vector<32x2xf32>
    %cst_69 = arith.constant 9.99999974E-6 : f32
    %141 = vector.broadcast %cst_69 : f32 to vector<32x2xf32>
    %142 = arith.addf %140, %141 : vector<32x2xf32>
    %143 = math.rsqrt %142 : vector<32x2xf32>
    %cst_70 = arith.constant dense<0.000000e+00> : vector<32x50xf32>
    %144 = tpu.matmul %143, %23, %cst_70 {dimension_numbers = #tpu.dot_dimension_numbers<[1], [0], [0], [1], [0, 0, 1, 1], [], []>} : vector<32x2xf32>, vector<2x50xf32>, vector<32x50xf32> -> vector<32x50xf32>
    %145 = arith.mulf %136, %144 : vector<32x50xf32>
    %146 = vector.broadcast %26 : vector<1x50xf32> to vector<32x50xf32>
    %147 = arith.mulf %145, %146 : vector<32x50xf32>
    %148 = vector.broadcast %27 : vector<1x50xf32> to vector<32x50xf32>
    %149 = arith.addf %147, %148 : vector<32x50xf32>
    %150 = vector.extract_strided_slice %149 {offsets = [0, 0], sizes = [32, 17], strides = [1, 1]} : vector<32x50xf32> to vector<32x17xf32>
    %cst_71 = arith.constant dense<0.000000e+00> : vector<32x320xf32>
    %151 = tpu.matmul %150, %28, %cst_71 {dimension_numbers = #tpu.dot_dimension_numbers<[1], [0], [0], [1], [0, 0, 1, 1], [], []>} : vector<32x17xf32>, vector<17x320xf32>, vector<32x320xf32> -> vector<32x320xf32>
    %152 = arith.mulf %151, %7 : vector<32x320xf32>
    %cst_72 = arith.constant dense<0.000000e+00> : vector<1x320xf32>
    %153 = tpu.matmul %31, %152, %cst_72 {dimension_numbers = #tpu.dot_dimension_numbers<[1], [0], [0], [1], [0, 0, 1, 1], [], []>} : vector<1x32xf32>, vector<32x320xf32>, vector<1x320xf32> -> vector<1x320xf32>
    %cst_73 = arith.constant dense<0.000000e+00> : vector<1x128xf32>
    %154 = tpu.matmul %153, %29, %cst_73 {dimension_numbers = #tpu.dot_dimension_numbers<[1], [0], [0], [1], [0, 0, 1, 1], [], []>} : vector<1x320xf32>, vector<320x128xf32>, vector<1x128xf32> -> vector<1x128xf32>
    %155 = vector.extract_strided_slice %149 {offsets = [0, 25], sizes = [32, 17], strides = [1, 1]} : vector<32x50xf32> to vector<32x17xf32>
    %cst_74 = arith.constant dense<0.000000e+00> : vector<32x320xf32>
    %156 = tpu.matmul %155, %28, %cst_74 {dimension_numbers = #tpu.dot_dimension_numbers<[1], [0], [0], [1], [0, 0, 1, 1], [], []>} : vector<32x17xf32>, vector<17x320xf32>, vector<32x320xf32> -> vector<32x320xf32>
    %157 = arith.mulf %156, %7 : vector<32x320xf32>
    %cst_75 = arith.constant dense<0.000000e+00> : vector<1x320xf32>
    %158 = tpu.matmul %31, %157, %cst_75 {dimension_numbers = #tpu.dot_dimension_numbers<[1], [0], [0], [1], [0, 0, 1, 1], [], []>} : vector<1x32xf32>, vector<32x320xf32>, vector<1x320xf32> -> vector<1x320xf32>
    %cst_76 = arith.constant dense<0.000000e+00> : vector<1x128xf32>
    %159 = tpu.matmul %158, %29, %cst_76 {dimension_numbers = #tpu.dot_dimension_numbers<[1], [0], [0], [1], [0, 0, 1, 1], [], []>} : vector<1x320xf32>, vector<320x128xf32>, vector<1x128xf32> -> vector<1x128xf32>
    %160 = tpu.concatenate %154, %159 in 0 : vector<1x128xf32>, vector<1x128xf32> -> vector<2x128xf32>
    %161 = vector.broadcast %30 : vector<1x128xf32> to vector<2x128xf32>
    %162 = arith.addf %160, %161 : vector<2x128xf32>
    %c0_77 = arith.constant 0 : index
    %c0_78 = arith.constant 0 : index
    %c0_79 = arith.constant 0 : index
    %163 = vector.load %arg14[%c0_77, %c0_78, %c0_79] : memref<1x2x128xf32, #tpu.memory_space<vmem>>, vector<1x2x128xf32>
    %164 = vector.shape_cast %163 : vector<1x2x128xf32> to vector<2x128xf32>
    %165 = vector.shape_cast %162 : vector<2x128xf32> to vector<1x2x128xf32>
    tpu.vector_store %arg14[%c0_77, %c0_78, %c0_79], %165 {strides = array<i32>} : memref<1x2x128xf32, #tpu.memory_space<vmem>>, vector<1x2x128xf32>,
    return
  }
  func.func @transform_0(%arg0: i32) -> (i32, i32, i32) {
    %c0_i32 = arith.constant 0 : i32
    %c0_i32_0 = arith.constant 0 : i32
    %c0_i32_1 = arith.constant 0 : i32
    return %arg0, %c0_i32, %c0_i32_0 : i32, i32, i32
  }
  func.func @transform_1(%arg0: i32) -> (i32, i32) {
    %c0_i32 = arith.constant 0 : i32
    %c0_i32_0 = arith.constant 0 : i32
    %c0_i32_1 = arith.constant 0 : i32
    return %c0_i32, %c0_i32_0 : i32, i32
  }
  func.func @transform_2(%arg0: i32) -> (i32, i32) {
    %c0_i32 = arith.constant 0 : i32
    %c0_i32_0 = arith.constant 0 : i32
    %c0_i32_1 = arith.constant 0 : i32
    return %c0_i32, %c0_i32_0 : i32, i32
  }
  func.func @transform_3(%arg0: i32) -> (i32, i32) {
    %c0_i32 = arith.constant 0 : i32
    %c0_i32_0 = arith.constant 0 : i32
    %c0_i32_1 = arith.constant 0 : i32
    return %c0_i32, %c0_i32_0 : i32, i32
  }
  func.func @transform_4(%arg0: i32) -> (i32, i32) {
    %c0_i32 = arith.constant 0 : i32
    %c0_i32_0 = arith.constant 0 : i32
    %c0_i32_1 = arith.constant 0 : i32
    return %c0_i32, %c0_i32_0 : i32, i32
  }
  func.func @transform_5(%arg0: i32) -> (i32, i32) {
    %c0_i32 = arith.constant 0 : i32
    %c0_i32_0 = arith.constant 0 : i32
    %c0_i32_1 = arith.constant 0 : i32
    return %c0_i32, %c0_i32_0 : i32, i32
  }
  func.func @transform_6(%arg0: i32) -> (i32, i32) {
    %c0_i32 = arith.constant 0 : i32
    %c0_i32_0 = arith.constant 0 : i32
    %c0_i32_1 = arith.constant 0 : i32
    return %c0_i32, %c0_i32_0 : i32, i32
  }
  func.func @transform_7(%arg0: i32) -> (i32, i32) {
    %c0_i32 = arith.constant 0 : i32
    %c0_i32_0 = arith.constant 0 : i32
    %c0_i32_1 = arith.constant 0 : i32
    return %c0_i32, %c0_i32_0 : i32, i32
  }
  func.func @transform_8(%arg0: i32) -> (i32, i32) {
    %c0_i32 = arith.constant 0 : i32
    %c0_i32_0 = arith.constant 0 : i32
    %c0_i32_1 = arith.constant 0 : i32
    return %c0_i32, %c0_i32_0 : i32, i32
  }
  func.func @transform_9(%arg0: i32) -> (i32, i32) {
    %c0_i32 = arith.constant 0 : i32
    %c0_i32_0 = arith.constant 0 : i32
    %c0_i32_1 = arith.constant 0 : i32
    return %c0_i32, %c0_i32_0 : i32, i32
  }
  func.func @transform_10(%arg0: i32) -> (i32, i32) {
    %c0_i32 = arith.constant 0 : i32
    %c0_i32_0 = arith.constant 0 : i32
    %c0_i32_1 = arith.constant 0 : i32
    return %c0_i32, %c0_i32_0 : i32, i32
  }
  func.func @transform_11(%arg0: i32) -> (i32, i32) {
    %c0_i32 = arith.constant 0 : i32
    %c0_i32_0 = arith.constant 0 : i32
    %c0_i32_1 = arith.constant 0 : i32
    return %c0_i32, %c0_i32_0 : i32, i32
  }
  func.func @transform_12(%arg0: i32) -> (i32, i32) {
    %c0_i32 = arith.constant 0 : i32
    %c0_i32_0 = arith.constant 0 : i32
    %c0_i32_1 = arith.constant 0 : i32
    return %c0_i32, %c0_i32_0 : i32, i32
  }
  func.func @transform_13(%arg0: i32) -> (i32, i32, i32) {
    %c0_i32 = arith.constant 0 : i32
    %c0_i32_0 = arith.constant 0 : i32
    %c0_i32_1 = arith.constant 0 : i32
    return %arg0, %c0_i32, %c0_i32_0 : i32, i32, i32
  }
}

</mosaic_0001>

<llo_original>
// kernel: tile.39
$region0: #{tile.39}
  %s0 = inlined_call_operand.vmem [shape: f32[32,2,25], index: 0, kind: input, shape index: {}]
  %s1 = inlined_call_operand.vmem [shape: f32[32,50], index: 1, kind: output, shape index: {}]
  $region1: #{tile.39} parent=0
    #allocation0 [shape = 'u8[131072]{0}', space=vmem, size = 0x20000, scoped, tag = 'scoped mem for input reshape']
    %s3 = sshll.u32 1, 2
    %s4 = ssub.s32 %s3, 1
    %s5 = smul.addr 2, 31
    %s6 = scalar_lea.vmem %s0, %s5
    %v7 = vld [vmem:[%s6] sm:%s4]
    %s8 = scalar_lea.vmem [#allocation0], 248
    %9 = vst [vmem:[%s8] sm:%s4] %v7
    %s10 = smul.addr 2, 30
    %s11 = scalar_lea.vmem %s0, %s10
    %v12 = vld [vmem:[%s11] sm:%s4]
    %s13 = scalar_lea.vmem [#allocation0], 240
    %14 = vst [vmem:[%s13] sm:%s4] %v12
    %s15 = smul.addr 2, 29
    %s16 = scalar_lea.vmem %s0, %s15
    %v17 = vld [vmem:[%s16] sm:%s4]
    %s18 = scalar_lea.vmem [#allocation0], 232
    %19 = vst [vmem:[%s18] sm:%s4] %v17
    %s20 = smul.addr 2, 28
    %s21 = scalar_lea.vmem %s0, %s20
    %v22 = vld [vmem:[%s21] sm:%s4]
    %s23 = scalar_lea.vmem [#allocation0], 224
    %24 = vst [vmem:[%s23] sm:%s4] %v22
    %s25 = smul.addr 2, 27
    %s26 = scalar_lea.vmem %s0, %s25
    %v27 = vld [vmem:[%s26] sm:%s4]
    %s28 = scalar_lea.vmem [#allocation0], 216
    %29 = vst [vmem:[%s28] sm:%s4] %v27
    %s30 = smul.addr 2, 26
    %s31 = scalar_lea.vmem %s0, %s30
    %v32 = vld [vmem:[%s31] sm:%s4]
    %s33 = scalar_lea.vmem [#allocation0], 208
    %34 = vst [vmem:[%s33] sm:%s4] %v32
    %s35 = smul.addr 2, 25
    %s36 = scalar_lea.vmem %s0, %s35
    %v37 = vld [vmem:[%s36] sm:%s4]
    %s38 = scalar_lea.vmem [#allocation0], 200
    %39 = vst [vmem:[%s38] sm:%s4] %v37
    %s40 = smul.addr 2, 24
    %s41 = scalar_lea.vmem %s0, %s40
    %v42 = vld [vmem:[%s41] sm:%s4]
    %s43 = scalar_lea.vmem [#allocation0], 192
    %44 = vst [vmem:[%s43] sm:%s4] %v42
    %s45 = smul.addr 2, 23
    %s46 = scalar_lea.vmem %s0, %s45
    %v47 = vld [vmem:[%s46] sm:%s4]
    %s48 = scalar_lea.vmem [#allocation0], 184
    %49 = vst [vmem:[%s48] sm:%s4] %v47
    %s50 = smul.addr 2, 22
    %s51 = scalar_lea.vmem %s0, %s50
    %v52 = vld [vmem:[%s51] sm:%s4]
    %s53 = scalar_lea.vmem [#allocation0], 176
    %54 = vst [vmem:[%s53] sm:%s4] %v52
    %s55 = smul.addr 2, 21
    %s56 = scalar_lea.vmem %s0, %s55
    %v57 = vld [vmem:[%s56] sm:%s4]
    %s58 = scalar_lea.vmem [#allocation0], 168
    %59 = vst [vmem:[%s58] sm:%s4] %v57
    %s60 = smul.addr 2, 20
    %s61 = scalar_lea.vmem %s0, %s60
    %v62 = vld [vmem:[%s61] sm:%s4]
    %s63 = scalar_lea.vmem [#allocation0], 160
    %64 = vst [vmem:[%s63] sm:%s4] %v62
    %s65 = smul.addr 2, 19
    %s66 = scalar_lea.vmem %s0, %s65
    %v67 = vld [vmem:[%s66] sm:%s4]
    %s68 = scalar_lea.vmem [#allocation0], 152
    %69 = vst [vmem:[%s68] sm:%s4] %v67
    %s70 = smul.addr 2, 18
    %s71 = scalar_lea.vmem %s0, %s70
    %v72 = vld [vmem:[%s71] sm:%s4]
    %s73 = scalar_lea.vmem [#allocation0], 144
    %74 = vst [vmem:[%s73] sm:%s4] %v72
    %s75 = smul.addr 2, 17
    %s76 = scalar_lea.vmem %s0, %s75
    %v77 = vld [vmem:[%s76] sm:%s4]
    %s78 = scalar_lea.vmem [#allocation0], 136
    %79 = vst [vmem:[%s78] sm:%s4] %v77
    %s80 = smul.addr 2, 16
    %s81 = scalar_lea.vmem %s0, %s80
    %v82 = vld [vmem:[%s81] sm:%s4]
    %s83 = scalar_lea.vmem [#allocation0], 128
    %84 = vst [vmem:[%s83] sm:%s4] %v82
    %s85 = smul.addr 2, 15
    %s86 = scalar_lea.vmem %s0, %s85
    %v87 = vld [vmem:[%s86] sm:%s4]
    %s88 = scalar_lea.vmem [#allocation0], 120
    %89 = vst [vmem:[%s88] sm:%s4] %v87
    %s90 = smul.addr 2, 14
    %s91 = scalar_lea.vmem %s0, %s90
    %v92 = vld [vmem:[%s91] sm:%s4]
    %s93 = scalar_lea.vmem [#allocation0], 112
    %94 = vst [vmem:[%s93] sm:%s4] %v92
    %s95 = smul.addr 2, 13
    %s96 = scalar_lea.vmem %s0, %s95
    %v97 = vld [vmem:[%s96] sm:%s4]
    %s98 = scalar_lea.vmem [#allocation0], 104
    %99 = vst [vmem:[%s98] sm:%s4] %v97
    %s100 = smul.addr 2, 12
    %s101 = scalar_lea.vmem %s0, %s100
    %v102 = vld [vmem:[%s101] sm:%s4]
    %s103 = scalar_lea.vmem [#allocation0], 96
    %104 = vst [vmem:[%s103] sm:%s4] %v102
    %s105 = smul.addr 2, 11
    %s106 = scalar_lea.vmem %s0, %s105
    %v107 = vld [vmem:[%s106] sm:%s4]
    %s108 = scalar_lea.vmem [#allocation0], 88
    %109 = vst [vmem:[%s108] sm:%s4] %v107
    %s110 = smul.addr 2, 10
    %s111 = scalar_lea.vmem %s0, %s110
    %v112 = vld [vmem:[%s111] sm:%s4]
    %s113 = scalar_lea.vmem [#allocation0], 80
    %114 = vst [vmem:[%s113] sm:%s4] %v112
    %s115 = smul.addr 2, 9
    %s116 = scalar_lea.vmem %s0, %s115
    %v117 = vld [vmem:[%s116] sm:%s4]
    %s118 = scalar_lea.vmem [#allocation0], 72
    %119 = vst [vmem:[%s118] sm:%s4] %v117
    %s120 = smul.addr 2, 8
    %s121 = scalar_lea.vmem %s0, %s120
    %v122 = vld [vmem:[%s121] sm:%s4]
    %s123 = scalar_lea.vmem [#allocation0], 64
    %124 = vst [vmem:[%s123] sm:%s4] %v122
    %s125 = smul.addr 2, 7
    %s126 = scalar_lea.vmem %s0, %s125
    %v127 = vld [vmem:[%s126] sm:%s4]
    %s128 = scalar_lea.vmem [#allocation0], 56
    %129 = vst [vmem:[%s128] sm:%s4] %v127
    %s130 = smul.addr 2, 6
    %s131 = scalar_lea.vmem %s0, %s130
    %v132 = vld [vmem:[%s131] sm:%s4]
    %s133 = scalar_lea.vmem [#allocation0], 48
    %134 = vst [vmem:[%s133] sm:%s4] %v132
    %s135 = smul.addr 2, 5
    %s136 = scalar_lea.vmem %s0, %s135
    %v137 = vld [vmem:[%s136] sm:%s4]
    %s138 = scalar_lea.vmem [#allocation0], 40
    %139 = vst [vmem:[%s138] sm:%s4] %v137
    %s140 = smul.addr 2, 4
    %s141 = scalar_lea.vmem %s0, %s140
    %v142 = vld [vmem:[%s141] sm:%s4]
    %s143 = scalar_lea.vmem [#allocation0], 32
    %144 = vst [vmem:[%s143] sm:%s4] %v142
    %s145 = smul.addr 2, 3
    %s146 = scalar_lea.vmem %s0, %s145
    %v147 = vld [vmem:[%s146] sm:%s4]
    %s148 = scalar_lea.vmem [#allocation0], 24
    %149 = vst [vmem:[%s148] sm:%s4] %v147
    %s150 = smul.addr 2, 2
    %s151 = scalar_lea.vmem %s0, %s150
    %v152 = vld [vmem:[%s151] sm:%s4]
    %s153 = scalar_lea.vmem [#allocation0], 16
    %154 = vst [vmem:[%s153] sm:%s4] %v152
    %s155 = scalar_lea.vmem %s0, 2
    %v156 = vld [vmem:[%s155] sm:%s4]
    %s157 = scalar_lea.vmem [#allocation0], 8
    %158 = vst [vmem:[%s157] sm:%s4] %v156
    %v159 = vld [vmem:[%s0] sm:%s4]
    %160 = vst [vmem:[#allocation0] sm:%s4] %v159
    %v161 = vld [vmem:[#allocation0] ss:$8 sm:$0xf]
    %v162 = vld [vmem:[#allocation0] ss:$8 sm:$0xf0]
    %vm163 = vcmask 1047556
    %v164 = vsel %vm163, %v162, %v161
    %vm165 = vcmask 203776
    %166 = vst.msk [vmem:[%s1] sm:$0xff] %vm165, %v164
    %s167 = scalar_lea.vmem [#allocation0], 64
    %v168 = vld [vmem:[%s167] ss:$8 sm:$0xf]
    %s169 = scalar_lea.vmem [#allocation0], 64
    %v170 = vld [vmem:[%s169] ss:$8 sm:$0xf0]
    %vm171 = vcmask 1047556
    %v172 = vsel %vm171, %v170, %v168
    %vm173 = vcmask 203776
    %s174 = scalar_lea.vmem %s1, 8
    %175 = vst.msk [vmem:[%s174] sm:$0xff] %vm173, %v172
    %s176 = scalar_lea.vmem [#allocation0], 128
    %v177 = vld [vmem:[%s176] ss:$8 sm:$0xf]
    %s178 = scalar_lea.vmem [#allocation0], 128
    %v179 = vld [vmem:[%s178] ss:$8 sm:$0xf0]
    %vm180 = vcmask 1047556
    %v181 = vsel %vm180, %v179, %v177
    %vm182 = vcmask 203776
    %s183 = scalar_lea.vmem %s1, 16
    %184 = vst.msk [vmem:[%s183] sm:$0xff] %vm182, %v181
    %s185 = scalar_lea.vmem [#allocation0], 192
    %v186 = vld [vmem:[%s185] ss:$8 sm:$0xf]
    %s187 = scalar_lea.vmem [#allocation0], 192
    %v188 = vld [vmem:[%s187] ss:$8 sm:$0xf0]
    %vm189 = vcmask 1047556
    %v190 = vsel %vm189, %v188, %v186
    %vm191 = vcmask 203776
    %s192 = scalar_lea.vmem %s1, 24
    %193 = vst.msk [vmem:[%s192] sm:$0xff] %vm191, %v190
    %s194 = scalar_lea.vmem [#allocation0], 1
    %v195 = vld [vmem:[%s194] ss:$8 sm:$0xf]
    %s196 = scalar_lea.vmem [#allocation0], 1
    %v197 = vld [vmem:[%s196] ss:$8 sm:$0xf0]
    %vm198 = vcmask 1047556
    %v199 = vsel %vm198, %v197, %v195
    %200 = vrot.lane.b32.xlu0 %v199, 25
    %v201 = vpop.permute.xlu0 %200
    %vm202 = vcmask 408776
    %203 = vst.msk [vmem:[%s1] sm:$0xff] %vm202, %v201
    %s204 = scalar_lea.vmem [#allocation0], 65
    %v205 = vld [vmem:[%s204] ss:$8 sm:$0xf]
    %s206 = scalar_lea.vmem [#allocation0], 65
    %v207 = vld [vmem:[%s206] ss:$8 sm:$0xf0]
    %vm208 = vcmask 1047556
    %v209 = vsel %vm208, %v207, %v205
    %210 = vrot.lane.b32.xlu0 %v209, 25
    %v211 = vpop.permute.xlu0 %210
    %vm212 = vcmask 408776
    %s213 = scalar_lea.vmem %s1, 8
    %214 = vst.msk [vmem:[%s213] sm:$0xff] %vm212, %v211
    %s215 = scalar_lea.vmem [#allocation0], 129
    %v216 = vld [vmem:[%s215] ss:$8 sm:$0xf]
    %s217 = scalar_lea.vmem [#allocation0], 129
    %v218 = vld [vmem:[%s217] ss:$8 sm:$0xf0]
    %vm219 = vcmask 1047556
    %v220 = vsel %vm219, %v218, %v216
    %221 = vrot.lane.b32.xlu0 %v220, 25
    %v222 = vpop.permute.xlu0 %221
    %vm223 = vcmask 408776
    %s224 = scalar_lea.vmem %s1, 16
    %225 = vst.msk [vmem:[%s224] sm:$0xff] %vm223, %v222
    %s226 = scalar_lea.vmem [#allocation0], 193
    %v227 = vld [vmem:[%s226] ss:$8 sm:$0xf]
    %s228 = scalar_lea.vmem [#allocation0], 193
    %v229 = vld [vmem:[%s228] ss:$8 sm:$0xf0]
    %vm230 = vcmask 1047556
    %v231 = vsel %vm230, %v229, %v227
    %232 = vrot.lane.b32.xlu0 %v231, 25
    %v233 = vpop.permute.xlu0 %232
    %vm234 = vcmask 408776
    %s235 = scalar_lea.vmem %s1, 24
    %236 = vst.msk [vmem:[%s235] sm:$0xff] %vm234, %v233

// kernel: tile.51
$region0: #{tile.51}
  #allocation0 [shape = 's32[1]{0}', space=sflag, size = 0x4, scoped, tag = 'scoped memory for tile.51']
  %s0 = inlined_call_operand.vmem [shape: f32[25], index: 0, kind: input, shape index: {}]
  %s1 = inlined_call_operand.vmem [shape: f32[2,25], index: 1, kind: output, shape index: {}]
  // Predicated region
  $region2: #{tile.51} parent=0 // pred_check
    _
  $region3: #{tile.51} parent=0 // pred_check_branch
    %3 = sbr.rel (0) target = $region5
  $region4: #{tile.51} parent=0 // pred_region
    _
  $region5: #{tile.51} parent=0 // pred_fallthru
    _
  %v4 = vld [vmem:[%s0] ss:$0 sm:$0xff]
  %5 = vst [vmem:[%s1] sm:$0x3] %v4

// kernel: tile.54
$region0: #{tile.54}
  %s0 = inlined_call_operand.vmem [shape: f32[2,25], index: 0, kind: input, shape index: {}]
  %s1 = inlined_call_operand.vmem [shape: f32[1,50], index: 1, kind: output, shape index: {}]
  $region1: #{tile.54} parent=0
    #allocation0 [shape = 'u8[4096]{0}', space=vmem, size = 0x1000, scoped, tag = 'scoped mem for output reshape']
    #allocation1 [shape = 'u8[4096]{0}', space=vmem, size = 0x1000, scoped, tag = 'scoped mem for input reshape']
    %s3 = sshll.u32 1, 2
    %s4 = ssub.s32 %s3, 1
    %v5 = vld [vmem:[%s0] sm:%s4]
    %6 = vst [vmem:[#allocation1] sm:%s4] %v5
    %v7 = vld [vmem:[#allocation1] sm:$0x1]
    %vm8 = vcmask 203776
    %9 = vst.msk [vmem:[#allocation0] sm:$0x1] %vm8, %v7
    %s10 = scalar_lea.vmem [#allocation1], 1
    %v11 = vld [vmem:[%s10] sm:$0x1]
    %12 = vrot.lane.b32.xlu0 %v11, 25
    %v13 = vpop.permute.xlu0 %12
    %vm14 = vcmask 408776
    %15 = vst.msk [vmem:[#allocation0] sm:$0x1] %vm14, %v13
    %s17 = sshll.u32 1, 1
    %s18 = ssub.s32 %s17, 1
    %v20 = vld [vmem:[#allocation0] sm:%s18]
    %s21 = sshll.u32 1, 1
    %s22 = ssub.s32 %s21, 1
    %23 = vst [vmem:[%s1] sm:%s22] %v20

// kernel: tile.59
$region0: #{tile.59}
  %s0 = inlined_call_operand.vmem [shape: f32[32,10,10], index: 0, kind: input, shape index: {}]
  %s1 = inlined_call_operand.vmem [shape: f32[320,10], index: 1, kind: output, shape index: {}]
  %v2 = vld [vmem:[%s0] sm:$0x1]
  %s3 = scalar_lea.vmem %s0, 31
  %v4 = vld [vmem:[%s3] sm:$0x2]
  %vm5 = vcmask 1041409
  %v6 = vsel %vm5, %v4, %v2
  %s7 = scalar_lea.vmem %s0, 62
  %v8 = vld [vmem:[%s7] sm:$0x4]
  %vm9 = vcmask 1042434
  %v10 = vsel %vm9, %v8, %v6
  %s11 = scalar_lea.vmem %s0, 93
  %v12 = vld [vmem:[%s11] sm:$0x8]
  %vm13 = vcmask 1043459
  %v14 = vsel %vm13, %v12, %v10
  %s15 = scalar_lea.vmem %s0, 124
  %v16 = vld [vmem:[%s15] sm:$0x10]
  %vm17 = vcmask 1044484
  %v18 = vsel %vm17, %v16, %v14
  %s19 = scalar_lea.vmem %s0, 155
  %v20 = vld [vmem:[%s19] sm:$0x20]
  %vm21 = vcmask 1045509
  %v22 = vsel %vm21, %v20, %v18
  %s23 = scalar_lea.vmem %s0, 186
  %v24 = vld [vmem:[%s23] sm:$0x40]
  %vm25 = vcmask 1046534
  %v26 = vsel %vm25, %v24, %v22
  %s27 = scalar_lea.vmem %s0, 217
  %v28 = vld [vmem:[%s27] sm:$0x80]
  %vm29 = vcmask 1047559
  %v30 = vsel %vm29, %v28, %v26
  %vm31 = vcmask 80896
  %32 = vst.msk [vmem:[%s1] sm:$0xff] %vm31, %v30
  %s33 = scalar_lea.vmem %s0, 256
  %v34 = vld [vmem:[%s33] sm:$0x1]
  %s35 = scalar_lea.vmem %s0, 287
  %v36 = vld [vmem:[%s35] sm:$0x2]
  %vm37 = vcmask 1041409
  %v38 = vsel %vm37, %v36, %v34
  %vm39 = vcmask 80896
  %s40 = scalar_lea.vmem %s1, 24
  %41 = vst.msk [vmem:[%s40] sm:$0x3] %vm39, %v38
  %s42 = scalar_lea.vmem %s0, 281
  %v43 = vld [vmem:[%s42] sm:$0x1]
  %s44 = scalar_lea.vmem %s0, 312
  %v45 = vld [vmem:[%s44] sm:$0x2]
  %vm46 = vcmask 1041409
  %v47 = vsel %vm46, %v45, %v43
  %s48 = scalar_lea.vmem %s0, 23
  %v49 = vld [vmem:[%s48] sm:$0x4]
  %vm50 = vcmask 1042434
  %v51 = vsel %vm50, %v49, %v47
  %s52 = scalar_lea.vmem %s0, 54
  %v53 = vld [vmem:[%s52] sm:$0x8]
  %vm54 = vcmask 1043459
  %v55 = vsel %vm54, %v53, %v51
  %s56 = scalar_lea.vmem %s0, 85
  %v57 = vld [vmem:[%s56] sm:$0x10]
  %vm58 = vcmask 1044484
  %v59 = vsel %vm58, %v57, %v55
  %s60 = scalar_lea.vmem %s0, 116
  %v61 = vld [vmem:[%s60] sm:$0x20]
  %vm62 = vcmask 1045509
  %v63 = vsel %vm62, %v61, %v59
  %s64 = scalar_lea.vmem %s0, 147
  %v65 = vld [vmem:[%s64] sm:$0x40]
  %vm66 = vcmask 1046534
  %v67 = vsel %vm66, %v65, %v63
  %s68 = scalar_lea.vmem %s0, 178
  %v69 = vld [vmem:[%s68] sm:$0x80]
  %vm70 = vcmask 1047559
  %v71 = vsel %vm70, %v69, %v67
  %72 = vrot.lane.b32.xlu0 %v71, 122
  %v73 = vpop.permute.xlu0 %72
  %vm74 = vcmask 31744
  %s75 = scalar_lea.vmem %s1, 40
  %76 = vst.msk [vmem:[%s75] sm:$0x3] %vm74, %v73
  %s77 = scalar_lea.vmem %s1, 14
  %78 = vst.msk [vmem:[%s77] sm:$0xfc] %vm74, %v73
  %s79 = scalar_lea.vmem %s0, 281
  %v80 = vld [vmem:[%s79] sm:$0x1]
  %s81 = scalar_lea.vmem %s0, 312
  %v82 = vld [vmem:[%s81] sm:$0x2]
  %vm83 = vcmask 1041409
  %v84 = vsel %vm83, %v82, %v80
  %s85 = scalar_lea.vmem %s0, 23
  %v86 = vld [vmem:[%s85] sm:$0x4]
  %vm87 = vcmask 1042434
  %v88 = vsel %vm87, %v86, %v84
  %s89 = scalar_lea.vmem %s0, 54
  %v90 = vld [vmem:[%s89] sm:$0x8]
  %vm91 = vcmask 1043459
  %v92 = vsel %vm91, %v90, %v88
  %s93 = scalar_lea.vmem %s0, 85
  %v94 = vld [vmem:[%s93] sm:$0x10]
  %vm95 = vcmask 1044484
  %v96 = vsel %vm95, %v94, %v92
  %s97 = scalar_lea.vmem %s0, 116
  %v98 = vld [vmem:[%s97] sm:$0x20]
  %vm99 = vcmask 1045509
  %v100 = vsel %vm99, %v98, %v96
  %s101 = scalar_lea.vmem %s0, 147
  %v102 = vld [vmem:[%s101] sm:$0x40]
  %vm103 = vcmask 1046534
  %v104 = vsel %vm103, %v102, %v100
  %s105 = scalar_lea.vmem %s0, 178
  %v106 = vld [vmem:[%s105] sm:$0x80]
  %vm107 = vcmask 1047559
  %v108 = vsel %vm107, %v106, %v104
  %109 = vrot.lane.b32.xlu0 %v108, 122
  %v110 = vpop.permute.xlu0 %109
  %vm111 = vcmask 1048528
  %s112 = scalar_lea.vmem %s1, 32
  %113 = vst.msk [vmem:[%s112] sm:$0x3] %vm111, %v110
  %s114 = scalar_lea.vmem %s1, 6
  %115 = vst.msk [vmem:[%s114] sm:$0xfc] %vm111, %v110
  %s116 = scalar_lea.vmem %s0, 217
  %v117 = vld [vmem:[%s116] sm:$0x1]
  %s118 = scalar_lea.vmem %s0, 248
  %v119 = vld [vmem:[%s118] sm:$0x2]
  %vm120 = vcmask 1041409
  %v121 = vsel %vm120, %v119, %v117
  %s122 = scalar_lea.vmem %s0, 217
  %v123 = vld [vmem:[%s122] sm:$0x1]
  %s124 = scalar_lea.vmem %s0, 248
  %v125 = vld [vmem:[%s124] sm:$0x2]
  %vm126 = vcmask 1041409
  %v127 = vsel %vm126, %v125, %v123
  %vm128 = vcmask 48128
  %v129 = vsel %vm128, %v127, %v121
  %130 = vrot.lane.b32.xlu0 %v129, 122
  %v131 = vpop.permute.xlu0 %130
  %vm132 = vcmask 31744
  %s133 = scalar_lea.vmem %s1, 22
  %134 = vst.msk [vmem:[%s133] sm:$0x3] %vm132, %v131
  %vm135 = vcmask 1048528
  %s136 = scalar_lea.vmem %s1, 14
  %137 = vst.msk [vmem:[%s136] sm:$0x3] %vm135, %v131
  %s138 = scalar_lea.vmem %s0, 268
  %v139 = vld [vmem:[%s138] sm:$0x1]
  %s140 = scalar_lea.vmem %s0, 299
  %v141 = vld [vmem:[%s140] sm:$0x2]
  %vm142 = vcmask 1041409
  %v143 = vsel %vm142, %v141, %v139
  %s144 = scalar_lea.vmem %s0, 10
  %v145 = vld [vmem:[%s144] sm:$0x4]
  %vm146 = vcmask 1042434
  %v147 = vsel %vm146, %v145, %v143
  %s148 = scalar_lea.vmem %s0, 41
  %v149 = vld [vmem:[%s148] sm:$0x8]
  %vm150 = vcmask 1043459
  %v151 = vsel %vm150, %v149, %v147
  %s152 = scalar_lea.vmem %s0, 72
  %v153 = vld [vmem:[%s152] sm:$0x10]
  %vm154 = vcmask 1044484
  %v155 = vsel %vm154, %v153, %v151
  %s156 = scalar_lea.vmem %s0, 103
  %v157 = vld [vmem:[%s156] sm:$0x20]
  %vm158 = vcmask 1045509
  %v159 = vsel %vm158, %v157, %v155
  %s160 = scalar_lea.vmem %s0, 134
  %v161 = vld [vmem:[%s160] sm:$0x40]
  %vm162 = vcmask 1046534
  %v163 = vsel %vm162, %v161, %v159
  %s164 = scalar_lea.vmem %s0, 165
  %v165 = vld [vmem:[%s164] sm:$0x80]
  %vm166 = vcmask 1047559
  %v167 = vsel %vm166, %v165, %v163
  %168 = vrot.lane.b32.xlu0 %v167, 120
  %v169 = vpop.permute.xlu0 %168
  %vm170 = vcmask 15360
  %s171 = scalar_lea.vmem %s1, 32
  %172 = vst.msk [vmem:[%s171] sm:$0x3] %vm170, %v169
  %s173 = scalar_lea.vmem %s1, 6
  %174 = vst.msk [vmem:[%s173] sm:$0xfc] %vm170, %v169
  %s175 = scalar_lea.vmem %s0, 12
  %v176 = vld [vmem:[%s175] sm:$0x1]
  %s177 = scalar_lea.vmem %s0, 43
  %v178 = vld [vmem:[%s177] sm:$0x2]
  %vm179 = vcmask 1041409
  %v180 = vsel %vm179, %v178, %v176
  %s181 = scalar_lea.vmem %s0, 74
  %v182 = vld [vmem:[%s181] sm:$0x4]
  %vm183 = vcmask 1042434
  %v184 = vsel %vm183, %v182, %v180
  %s185 = scalar_lea.vmem %s0, 105
  %v186 = vld [vmem:[%s185] sm:$0x8]
  %vm187 = vcmask 1043459
  %v188 = vsel %vm187, %v186, %v184
  %s189 = scalar_lea.vmem %s0, 136
  %v190 = vld [vmem:[%s189] sm:$0x10]
  %vm191 = vcmask 1044484
  %v192 = vsel %vm191, %v190, %v188
  %s193 = scalar_lea.vmem %s0, 167
  %v194 = vld [vmem:[%s193] sm:$0x20]
  %vm195 = vcmask 1045509
  %v196 = vsel %vm195, %v194, %v192
  %s197 = scalar_lea.vmem %s0, 198
  %v198 = vld [vmem:[%s197] sm:$0x40]
  %vm199 = vcmask 1046534
  %v200 = vsel %vm199, %v198, %v196
  %s201 = scalar_lea.vmem %s0, 229
  %v202 = vld [vmem:[%s201] sm:$0x80]
  %vm203 = vcmask 1047559
  %v204 = vsel %vm203, %v202, %v200
  %205 = vrot.lane.b32.xlu0 %v204, 120
  %v206 = vpop.permute.xlu0 %205
  %vm207 = vcmask 1048512
  %208 = vst.msk [vmem:[%s1] sm:$0xff] %vm207, %v206
  %s209 = scalar_lea.vmem %s0, 204
  %v210 = vld [vmem:[%s209] sm:$0x1]
  %s211 = scalar_lea.vmem %s0, 235
  %v212 = vld [vmem:[%s211] sm:$0x2]
  %vm213 = vcmask 1041409
  %v214 = vsel %vm213, %v212, %v210
  %s215 = scalar_lea.vmem %s0, 268
  %v216 = vld [vmem:[%s215] sm:$0x1]
  %s217 = scalar_lea.vmem %s0, 299
  %v218 = vld [vmem:[%s217] sm:$0x2]
  %vm219 = vcmask 1041409
  %v220 = vsel %vm219, %v218, %v216
  %vm221 = vcmask 64512
  %v222 = vsel %vm221, %v220, %v214
  %223 = vrot.lane.b32.xlu0 %v222, 120
  %v224 = vpop.permute.xlu0 %223
  %vm225 = vcmask 15360
  %s226 = scalar_lea.vmem %s1, 14
  %227 = vst.msk [vmem:[%s226] sm:$0x3] %vm225, %v224
  %vm228 = vcmask 1048512
  %s229 = scalar_lea.vmem %s1, 24
  %230 = vst.msk [vmem:[%s229] sm:$0x3] %vm228, %v224
  %s231 = scalar_lea.vmem %s0, 280
  %v232 = vld [vmem:[%s231] sm:$0x1]
  %s233 = scalar_lea.vmem %s0, 311
  %v234 = vld [vmem:[%s233] sm:$0x2]
  %vm235 = vcmask 1041409
  %v236 = vsel %vm235, %v234, %v232
  %s237 = scalar_lea.vmem %s0, 22
  %v238 = vld [vmem:[%s237] sm:$0x4]
  %vm239 = vcmask 1042434
  %v240 = vsel %vm239, %v238, %v236
  %s241 = scalar_lea.vmem %s0, 53
  %v242 = vld [vmem:[%s241] sm:$0x8]
  %vm243 = vcmask 1043459
  %v244 = vsel %vm243, %v242, %v240
  %s245 = scalar_lea.vmem %s0, 84
  %v246 = vld [vmem:[%s245] sm:$0x10]
  %vm247 = vcmask 1044484
  %v248 = vsel %vm247, %v246, %v244
  %s249 = scalar_lea.vmem %s0, 115
  %v250 = vld [vmem:[%s249] sm:$0x20]
  %vm251 = vcmask 1045509
  %v252 = vsel %vm251, %v250, %v248
  %s253 = scalar_lea.vmem %s0, 146
  %v254 = vld [vmem:[%s253] sm:$0x40]
  %vm255 = vcmask 1046534
  %v256 = vsel %vm255, %v254, %v252
  %s257 = scalar_lea.vmem %s0, 177
  %v258 = vld [vmem:[%s257] sm:$0x80]
  %vm259 = vcmask 1047559
  %v260 = vsel %vm259, %v258, %v256
  %261 = vrot.lane.b32.xlu0 %v260, 112
  %v262 = vpop.permute.xlu0 %261
  %vm263 = vcmask 999296
  %s264 = scalar_lea.vmem %s1, 32
  %265 = vst.msk [vmem:[%s264] sm:$0x3] %vm263, %v262
  %s266 = scalar_lea.vmem %s1, 6
  %267 = vst.msk [vmem:[%s266] sm:$0xfc] %vm263, %v262
  %s268 = scalar_lea.vmem %s0, 216
  %v269 = vld [vmem:[%s268] sm:$0x1]
  %s270 = scalar_lea.vmem %s0, 247
  %v271 = vld [vmem:[%s270] sm:$0x2]
  %vm272 = vcmask 1041409
  %v273 = vsel %vm272, %v271, %v269
  %274 = vrot.lane.b32.xlu0 %v273, 112
  %v275 = vpop.permute.xlu0 %274
  %vm276 = vcmask 999296
  %s277 = scalar_lea.vmem %s1, 14
  %278 = vst.msk [vmem:[%s277] sm:$0x3] %vm276, %v275
  %s279 = scalar_lea.vmem %s0, 11
  %v280 = vld [vmem:[%s279] sm:$0x1]
  %s281 = scalar_lea.vmem %s0, 42
  %v282 = vld [vmem:[%s281] sm:$0x2]
  %vm283 = vcmask 1041409
  %v284 = vsel %vm283, %v282, %v280
  %s285 = scalar_lea.vmem %s0, 73
  %v286 = vld [vmem:[%s285] sm:$0x4]
  %vm287 = vcmask 1042434
  %v288 = vsel %vm287, %v286, %v284
  %s289 = scalar_lea.vmem %s0, 104
  %v290 = vld [vmem:[%s289] sm:$0x8]
  %vm291 = vcmask 1043459
  %v292 = vsel %vm291, %v290, %v288
  %s293 = scalar_lea.vmem %s0, 135
  %v294 = vld [vmem:[%s293] sm:$0x10]
  %vm295 = vcmask 1044484
  %v296 = vsel %vm295, %v294, %v292
  %s297 = scalar_lea.vmem %s0, 166
  %v298 = vld [vmem:[%s297] sm:$0x20]
  %vm299 = vcmask 1045509
  %v300 = vsel %vm299, %v298, %v296
  %s301 = scalar_lea.vmem %s0, 197
  %v302 = vld [vmem:[%s301] sm:$0x40]
  %vm303 = vcmask 1046534
  %v304 = vsel %vm303, %v302, %v300
  %s305 = scalar_lea.vmem %s0, 228
  %v306 = vld [vmem:[%s305] sm:$0x80]
  %vm307 = vcmask 1047559
  %v308 = vsel %vm307, %v306, %v304
  %309 = vrot.lane.b32.xlu0 %v308, 110
  %v310 = vpop.permute.xlu0 %309
  %vm311 = vcmask 982896
  %312 = vst.msk [vmem:[%s1] sm:$0xff] %vm311, %v310
  %s313 = scalar_lea.vmem %s0, 267
  %v314 = vld [vmem:[%s313] sm:$0x1]
  %s315 = scalar_lea.vmem %s0, 298
  %v316 = vld [vmem:[%s315] sm:$0x2]
  %vm317 = vcmask 1041409
  %v318 = vsel %vm317, %v316, %v314
  %319 = vrot.lane.b32.xlu0 %v318, 110
  %v320 = vpop.permute.xlu0 %319
  %vm321 = vcmask 982896
  %s322 = scalar_lea.vmem %s1, 24
  %323 = vst.msk [vmem:[%s322] sm:$0x3] %vm321, %v320
  %s324 = scalar_lea.vmem %s0, 279
  %v325 = vld [vmem:[%s324] sm:$0x1]
  %s326 = scalar_lea.vmem %s0, 310
  %v327 = vld [vmem:[%s326] sm:$0x2]
  %vm328 = vcmask 1041409
  %v329 = vsel %vm328, %v327, %v325
  %s330 = scalar_lea.vmem %s0, 21
  %v331 = vld [vmem:[%s330] sm:$0x4]
  %vm332 = vcmask 1042434
  %v333 = vsel %vm332, %v331, %v329
  %s334 = scalar_lea.vmem %s0, 52
  %v335 = vld [vmem:[%s334] sm:$0x8]
  %vm336 = vcmask 1043459
  %v337 = vsel %vm336, %v335, %v333
  %s338 = scalar_lea.vmem %s0, 83
  %v339 = vld [vmem:[%s338] sm:$0x10]
  %vm340 = vcmask 1044484
  %v341 = vsel %vm340, %v339, %v337
  %s342 = scalar_lea.vmem %s0, 114
  %v343 = vld [vmem:[%s342] sm:$0x20]
  %vm344 = vcmask 1045509
  %v345 = vsel %vm344, %v343, %v341
  %s346 = scalar_lea.vmem %s0, 145
  %v347 = vld [vmem:[%s346] sm:$0x40]
  %vm348 = vcmask 1046534
  %v349 = vsel %vm348, %v347, %v345
  %s350 = scalar_lea.vmem %s0, 176
  %v351 = vld [vmem:[%s350] sm:$0x80]
  %vm352 = vcmask 1047559
  %v353 = vsel %vm352, %v351, %v349
  %354 = vrot.lane.b32.xlu0 %v353, 102
  %v355 = vpop.permute.xlu0 %354
  %vm356 = vcmask 917296
  %s357 = scalar_lea.vmem %s1, 32
  %358 = vst.msk [vmem:[%s357] sm:$0x3] %vm356, %v355
  %s359 = scalar_lea.vmem %s1, 6
  %360 = vst.msk [vmem:[%s359] sm:$0xfc] %vm356, %v355
  %s361 = scalar_lea.vmem %s0, 215
  %v362 = vld [vmem:[%s361] sm:$0x1]
  %s363 = scalar_lea.vmem %s0, 246
  %v364 = vld [vmem:[%s363] sm:$0x2]
  %vm365 = vcmask 1041409
  %v366 = vsel %vm365, %v364, %v362
  %367 = vrot.lane.b32.xlu0 %v366, 102
  %v368 = vpop.permute.xlu0 %367
  %vm369 = vcmask 917296
  %s370 = scalar_lea.vmem %s1, 14
  %371 = vst.msk [vmem:[%s370] sm:$0x3] %vm369, %v368
  %s372 = scalar_lea.vmem %s0, 10
  %v373 = vld [vmem:[%s372] sm:$0x1]
  %s374 = scalar_lea.vmem %s0, 41
  %v375 = vld [vmem:[%s374] sm:$0x2]
  %vm376 = vcmask 1041409
  %v377 = vsel %vm376, %v375, %v373
  %s378 = scalar_lea.vmem %s0, 72
  %v379 = vld [vmem:[%s378] sm:$0x4]
  %vm380 = vcmask 1042434
  %v381 = vsel %vm380, %v379, %v377
  %s382 = scalar_lea.vmem %s0, 103
  %v383 = vld [vmem:[%s382] sm:$0x8]
  %vm384 = vcmask 1043459
  %v385 = vsel %vm384, %v383, %v381
  %s386 = scalar_lea.vmem %s0, 134
  %v387 = vld [vmem:[%s386] sm:$0x10]
  %vm388 = vcmask 1044484
  %v389 = vsel %vm388, %v387, %v385
  %s390 = scalar_lea.vmem %s0, 165
  %v391 = vld [vmem:[%s390] sm:$0x20]
  %vm392 = vcmask 1045509
  %v393 = vsel %vm392, %v391, %v389
  %s394 = scalar_lea.vmem %s0, 196
  %v395 = vld [vmem:[%s394] sm:$0x40]
  %vm396 = vcmask 1046534
  %v397 = vsel %vm396, %v395, %v393
  %s398 = scalar_lea.vmem %s0, 227
  %v399 = vld [vmem:[%s398] sm:$0x80]
  %vm400 = vcmask 1047559
  %v401 = vsel %vm400, %v399, %v397
  %402 = vrot.lane.b32.xlu0 %v401, 100
  %v403 = vpop.permute.xlu0 %402
  %vm404 = vcmask 900896
  %405 = vst.msk [vmem:[%s1] sm:$0xff] %vm404, %v403
  %s406 = scalar_lea.vmem %s0, 266
  %v407 = vld [vmem:[%s406] sm:$0x1]
  %s408 = scalar_lea.vmem %s0, 297
  %v409 = vld [vmem:[%s408] sm:$0x2]
  %vm410 = vcmask 1041409
  %v411 = vsel %vm410, %v409, %v407
  %412 = vrot.lane.b32.xlu0 %v411, 100
  %v413 = vpop.permute.xlu0 %412
  %vm414 = vcmask 900896
  %s415 = scalar_lea.vmem %s1, 24
  %416 = vst.msk [vmem:[%s415] sm:$0x3] %vm414, %v413
  %s417 = scalar_lea.vmem %s0, 278
  %v418 = vld [vmem:[%s417] sm:$0x1]
  %s419 = scalar_lea.vmem %s0, 309
  %v420 = vld [vmem:[%s419] sm:$0x2]
  %vm421 = vcmask 1041409
  %v422 = vsel %vm421, %v420, %v418
  %s423 = scalar_lea.vmem %s0, 20
  %v424 = vld [vmem:[%s423] sm:$0x4]
  %vm425 = vcmask 1042434
  %v426 = vsel %vm425, %v424, %v422
  %s427 = scalar_lea.vmem %s0, 51
  %v428 = vld [vmem:[%s427] sm:$0x8]
  %vm429 = vcmask 1043459
  %v430 = vsel %vm429, %v428, %v426
  %s431 = scalar_lea.vmem %s0, 82
  %v432 = vld [vmem:[%s431] sm:$0x10]
  %vm433 = vcmask 1044484
  %v434 = vsel %vm433, %v432, %v430
  %s435 = scalar_lea.vmem %s0, 113
  %v436 = vld [vmem:[%s435] sm:$0x20]
  %vm437 = vcmask 1045509
  %v438 = vsel %vm437, %v436, %v434
  %s439 = scalar_lea.vmem %s0, 144
  %v440 = vld [vmem:[%s439] sm:$0x40]
  %vm441 = vcmask 1046534
  %v442 = vsel %vm441, %v440, %v438
  %s443 = scalar_lea.vmem %s0, 175
  %v444 = vld [vmem:[%s443] sm:$0x80]
  %vm445 = vcmask 1047559
  %v446 = vsel %vm445, %v444, %v442
  %447 = vrot.lane.b32.xlu0 %v446, 92
  %v448 = vpop.permute.xlu0 %447
  %vm449 = vcmask 835296
  %s450 = scalar_lea.vmem %s1, 32
  %451 = vst.msk [vmem:[%s450] sm:$0x3] %vm449, %v448
  %s452 = scalar_lea.vmem %s1, 6
  %453 = vst.msk [vmem:[%s452] sm:$0xfc] %vm449, %v448
  %s454 = scalar_lea.vmem %s0, 214
  %v455 = vld [vmem:[%s454] sm:$0x1]
  %s456 = scalar_lea.vmem %s0, 245
  %v457 = vld [vmem:[%s456] sm:$0x2]
  %vm458 = vcmask 1041409
  %v459 = vsel %vm458, %v457, %v455
  %460 = vrot.lane.b32.xlu0 %v459, 92
  %v461 = vpop.permute.xlu0 %460
  %vm462 = vcmask 835296
  %s463 = scalar_lea.vmem %s1, 14
  %464 = vst.msk [vmem:[%s463] sm:$0x3] %vm462, %v461
  %s465 = scalar_lea.vmem %s0, 9
  %v466 = vld [vmem:[%s465] sm:$0x1]
  %s467 = scalar_lea.vmem %s0, 40
  %v468 = vld [vmem:[%s467] sm:$0x2]
  %vm469 = vcmask 1041409
  %v470 = vsel %vm469, %v468, %v466
  %s471 = scalar_lea.vmem %s0, 71
  %v472 = vld [vmem:[%s471] sm:$0x4]
  %vm473 = vcmask 1042434
  %v474 = vsel %vm473, %v472, %v470
  %s475 = scalar_lea.vmem %s0, 102
  %v476 = vld [vmem:[%s475] sm:$0x8]
  %vm477 = vcmask 1043459
  %v478 = vsel %vm477, %v476, %v474
  %s479 = scalar_lea.vmem %s0, 133
  %v480 = vld [vmem:[%s479] sm:$0x10]
  %vm481 = vcmask 1044484
  %v482 = vsel %vm481, %v480, %v478
  %s483 = scalar_lea.vmem %s0, 164
  %v484 = vld [vmem:[%s483] sm:$0x20]
  %vm485 = vcmask 1045509
  %v486 = vsel %vm485, %v484, %v482
  %s487 = scalar_lea.vmem %s0, 195
  %v488 = vld [vmem:[%s487] sm:$0x40]
  %vm489 = vcmask 1046534
  %v490 = vsel %vm489, %v488, %v486
  %s491 = scalar_lea.vmem %s0, 226
  %v492 = vld [vmem:[%s491] sm:$0x80]
  %vm493 = vcmask 1047559
  %v494 = vsel %vm493, %v492, %v490
  %495 = vrot.lane.b32.xlu0 %v494, 90
  %v496 = vpop.permute.xlu0 %495
  %vm497 = vcmask 818896
  %498 = vst.msk [vmem:[%s1] sm:$0xff] %vm497, %v496
  %s499 = scalar_lea.vmem %s0, 265
  %v500 = vld [vmem:[%s499] sm:$0x1]
  %s501 = scalar_lea.vmem %s0, 296
  %v502 = vld [vmem:[%s501] sm:$0x2]
  %vm503 = vcmask 1041409
  %v504 = vsel %vm503, %v502, %v500
  %505 = vrot.lane.b32.xlu0 %v504, 90
  %v506 = vpop.permute.xlu0 %505
  %vm507 = vcmask 818896
  %s508 = scalar_lea.vmem %s1, 24
  %509 = vst.msk [vmem:[%s508] sm:$0x3] %vm507, %v506
  %s510 = scalar_lea.vmem %s0, 277
  %v511 = vld [vmem:[%s510] sm:$0x1]
  %s512 = scalar_lea.vmem %s0, 308
  %v513 = vld [vmem:[%s512] sm:$0x2]
  %vm514 = vcmask 1041409
  %v515 = vsel %vm514, %v513, %v511
  %s516 = scalar_lea.vmem %s0, 19
  %v517 = vld [vmem:[%s516] sm:$0x4]
  %vm518 = vcmask 1042434
  %v519 = vsel %vm518, %v517, %v515
  %s520 = scalar_lea.vmem %s0, 50
  %v521 = vld [vmem:[%s520] sm:$0x8]
  %vm522 = vcmask 1043459
  %v523 = vsel %vm522, %v521, %v519
  %s524 = scalar_lea.vmem %s0, 81
  %v525 = vld [vmem:[%s524] sm:$0x10]
  %vm526 = vcmask 1044484
  %v527 = vsel %vm526, %v525, %v523
  %s528 = scalar_lea.vmem %s0, 112
  %v529 = vld [vmem:[%s528] sm:$0x20]
  %vm530 = vcmask 1045509
  %v531 = vsel %vm530, %v529, %v527
  %s532 = scalar_lea.vmem %s0, 143
  %v533 = vld [vmem:[%s532] sm:$0x40]
  %vm534 = vcmask 1046534
  %v535 = vsel %vm534, %v533, %v531
  %s536 = scalar_lea.vmem %s0, 174
  %v537 = vld [vmem:[%s536] sm:$0x80]
  %vm538 = vcmask 1047559
  %v539 = vsel %vm538, %v537, %v535
  %540 = vrot.lane.b32.xlu0 %v539, 82
  %v541 = vpop.permute.xlu0 %540
  %vm542 = vcmask 753296
  %s543 = scalar_lea.vmem %s1, 32
  %544 = vst.msk [vmem:[%s543] sm:$0x3] %vm542, %v541
  %s545 = scalar_lea.vmem %s1, 6
  %546 = vst.msk [vmem:[%s545] sm:$0xfc] %vm542, %v541
  %s547 = scalar_lea.vmem %s0, 213
  %v548 = vld [vmem:[%s547] sm:$0x1]
  %s549 = scalar_lea.vmem %s0, 244
  %v550 = vld [vmem:[%s549] sm:$0x2]
  %vm551 = vcmask 1041409
  %v552 = vsel %vm551, %v550, %v548
  %553 = vrot.lane.b32.xlu0 %v552, 82
  %v554 = vpop.permute.xlu0 %553
  %vm555 = vcmask 753296
  %s556 = scalar_lea.vmem %s1, 14
  %557 = vst.msk [vmem:[%s556] sm:$0x3] %vm555, %v554
  %s558 = scalar_lea.vmem %s0, 8
  %v559 = vld [vmem:[%s558] sm:$0x1]
  %s560 = scalar_lea.vmem %s0, 39
  %v561 = vld [vmem:[%s560] sm:$0x2]
  %vm562 = vcmask 1041409
  %v563 = vsel %vm562, %v561, %v559
  %s564 = scalar_lea.vmem %s0, 70
  %v565 = vld [vmem:[%s564] sm:$0x4]
  %vm566 = vcmask 1042434
  %v567 = vsel %vm566, %v565, %v563
  %s568 = scalar_lea.vmem %s0, 101
  %v569 = vld [vmem:[%s568] sm:$0x8]
  %vm570 = vcmask 1043459
  %v571 = vsel %vm570, %v569, %v567
  %s572 = scalar_lea.vmem %s0, 132
  %v573 = vld [vmem:[%s572] sm:$0x10]
  %vm574 = vcmask 1044484
  %v575 = vsel %vm574, %v573, %v571
  %s576 = scalar_lea.vmem %s0, 163
  %v577 = vld [vmem:[%s576] sm:$0x20]
  %vm578 = vcmask 1045509
  %v579 = vsel %vm578, %v577, %v575
  %s580 = scalar_lea.vmem %s0, 194
  %v581 = vld [vmem:[%s580] sm:$0x40]
  %vm582 = vcmask 1046534
  %v583 = vsel %vm582, %v581, %v579
  %s584 = scalar_lea.vmem %s0, 225
  %v585 = vld [vmem:[%s584] sm:$0x80]
  %vm586 = vcmask 1047559
  %v587 = vsel %vm586, %v585, %v583
  %588 = vrot.lane.b32.xlu0 %v587, 80
  %v589 = vpop.permute.xlu0 %588
  %vm590 = vcmask 736896
  %591 = vst.msk [vmem:[%s1] sm:$0xff] %vm590, %v589
  %s592 = scalar_lea.vmem %s0, 264
  %v593 = vld [vmem:[%s592] sm:$0x1]
  %s594 = scalar_lea.vmem %s0, 295
  %v595 = vld [vmem:[%s594] sm:$0x2]
  %vm596 = vcmask 1041409
  %v597 = vsel %vm596, %v595, %v593
  %598 = vrot.lane.b32.xlu0 %v597, 80
  %v599 = vpop.permute.xlu0 %598
  %vm600 = vcmask 736896
  %s601 = scalar_lea.vmem %s1, 24
  %602 = vst.msk [vmem:[%s601] sm:$0x3] %vm600, %v599
  %s603 = scalar_lea.vmem %s0, 276
  %v604 = vld [vmem:[%s603] sm:$0x1]
  %s605 = scalar_lea.vmem %s0, 307
  %v606 = vld [vmem:[%s605] sm:$0x2]
  %vm607 = vcmask 1041409
  %v608 = vsel %vm607, %v606, %v604
  %s609 = scalar_lea.vmem %s0, 18
  %v610 = vld [vmem:[%s609] sm:$0x4]
  %vm611 = vcmask 1042434
  %v612 = vsel %vm611, %v610, %v608
  %s613 = scalar_lea.vmem %s0, 49
  %v614 = vld [vmem:[%s613] sm:$0x8]
  %vm615 = vcmask 1043459
  %v616 = vsel %vm615, %v614, %v612
  %s617 = scalar_lea.vmem %s0, 80
  %v618 = vld [vmem:[%s617] sm:$0x10]
  %vm619 = vcmask 1044484
  %v620 = vsel %vm619, %v618, %v616
  %s621 = scalar_lea.vmem %s0, 111
  %v622 = vld [vmem:[%s621] sm:$0x20]
  %vm623 = vcmask 1045509
  %v624 = vsel %vm623, %v622, %v620
  %s625 = scalar_lea.vmem %s0, 142
  %v626 = vld [vmem:[%s625] sm:$0x40]
  %vm627 = vcmask 1046534
  %v628 = vsel %vm627, %v626, %v624
  %s629 = scalar_lea.vmem %s0, 173
  %v630 = vld [vmem:[%s629] sm:$0x80]
  %vm631 = vcmask 1047559
  %v632 = vsel %vm631, %v630, %v628
  %633 = vrot.lane.b32.xlu0 %v632, 72
  %v634 = vpop.permute.xlu0 %633
  %vm635 = vcmask 671296
  %s636 = scalar_lea.vmem %s1, 32
  %637 = vst.msk [vmem:[%s636] sm:$0x3] %vm635, %v634
  %s638 = scalar_lea.vmem %s1, 6
  %639 = vst.msk [vmem:[%s638] sm:$0xfc] %vm635, %v634
  %s640 = scalar_lea.vmem %s0, 212
  %v641 = vld [vmem:[%s640] sm:$0x1]
  %s642 = scalar_lea.vmem %s0, 243
  %v643 = vld [vmem:[%s642] sm:$0x2]
  %vm644 = vcmask 1041409
  %v645 = vsel %vm644, %v643, %v641
  %646 = vrot.lane.b32.xlu0 %v645, 72
  %v647 = vpop.permute.xlu0 %646
  %vm648 = vcmask 671296
  %s649 = scalar_lea.vmem %s1, 14
  %650 = vst.msk [vmem:[%s649] sm:$0x3] %vm648, %v647
  %s651 = scalar_lea.vmem %s0, 7
  %v652 = vld [vmem:[%s651] sm:$0x1]
  %s653 = scalar_lea.vmem %s0, 38
  %v654 = vld [vmem:[%s653] sm:$0x2]
  %vm655 = vcmask 1041409
  %v656 = vsel %vm655, %v654, %v652
  %s657 = scalar_lea.vmem %s0, 69
  %v658 = vld [vmem:[%s657] sm:$0x4]
  %vm659 = vcmask 1042434
  %v660 = vsel %vm659, %v658, %v656
  %s661 = scalar_lea.vmem %s0, 100
  %v662 = vld [vmem:[%s661] sm:$0x8]
  %vm663 = vcmask 1043459
  %v664 = vsel %vm663, %v662, %v660
  %s665 = scalar_lea.vmem %s0, 131
  %v666 = vld [vmem:[%s665] sm:$0x10]
  %vm667 = vcmask 1044484
  %v668 = vsel %vm667, %v666, %v664
  %s669 = scalar_lea.vmem %s0, 162
  %v670 = vld [vmem:[%s669] sm:$0x20]
  %vm671 = vcmask 1045509
  %v672 = vsel %vm671, %v670, %v668
  %s673 = scalar_lea.vmem %s0, 193
  %v674 = vld [vmem:[%s673] sm:$0x40]
  %vm675 = vcmask 1046534
  %v676 = vsel %vm675, %v674, %v672
  %s677 = scalar_lea.vmem %s0, 224
  %v678 = vld [vmem:[%s677] sm:$0x80]
  %vm679 = vcmask 1047559
  %v680 = vsel %vm679, %v678, %v676
  %681 = vrot.lane.b32.xlu0 %v680, 70
  %v682 = vpop.permute.xlu0 %681
  %vm683 = vcmask 654896
  %684 = vst.msk [vmem:[%s1] sm:$0xff] %vm683, %v682
  %s685 = scalar_lea.vmem %s0, 263
  %v686 = vld [vmem:[%s685] sm:$0x1]
  %s687 = scalar_lea.vmem %s0, 294
  %v688 = vld [vmem:[%s687] sm:$0x2]
  %vm689 = vcmask 1041409
  %v690 = vsel %vm689, %v688, %v686
  %691 = vrot.lane.b32.xlu0 %v690, 70
  %v692 = vpop.permute.xlu0 %691
  %vm693 = vcmask 654896
  %s694 = scalar_lea.vmem %s1, 24
  %695 = vst.msk [vmem:[%s694] sm:$0x3] %vm693, %v692
  %s696 = scalar_lea.vmem %s0, 275
  %v697 = vld [vmem:[%s696] sm:$0x1]
  %s698 = scalar_lea.vmem %s0, 306
  %v699 = vld [vmem:[%s698] sm:$0x2]
  %vm700 = vcmask 1041409
  %v701 = vsel %vm700, %v699, %v697
  %s702 = scalar_lea.vmem %s0, 17
  %v703 = vld [vmem:[%s702] sm:$0x4]
  %vm704 = vcmask 1042434
  %v705 = vsel %vm704, %v703, %v701
  %s706 = scalar_lea.vmem %s0, 48
  %v707 = vld [vmem:[%s706] sm:$0x8]
  %vm708 = vcmask 1043459
  %v709 = vsel %vm708, %v707, %v705
  %s710 = scalar_lea.vmem %s0, 79
  %v711 = vld [vmem:[%s710] sm:$0x10]
  %vm712 = vcmask 1044484
  %v713 = vsel %vm712, %v711, %v709
  %s714 = scalar_lea.vmem %s0, 110
  %v715 = vld [vmem:[%s714] sm:$0x20]
  %vm716 = vcmask 1045509
  %v717 = vsel %vm716, %v715, %v713
  %s718 = scalar_lea.vmem %s0, 141
  %v719 = vld [vmem:[%s718] sm:$0x40]
  %vm720 = vcmask 1046534
  %v721 = vsel %vm720, %v719, %v717
  %s722 = scalar_lea.vmem %s0, 172
  %v723 = vld [vmem:[%s722] sm:$0x80]
  %vm724 = vcmask 1047559
  %v725 = vsel %vm724, %v723, %v721
  %726 = vrot.lane.b32.xlu0 %v725, 62
  %v727 = vpop.permute.xlu0 %726
  %vm728 = vcmask 589296
  %s729 = scalar_lea.vmem %s1, 32
  %730 = vst.msk [vmem:[%s729] sm:$0x3] %vm728, %v727
  %s731 = scalar_lea.vmem %s1, 6
  %732 = vst.msk [vmem:[%s731] sm:$0xfc] %vm728, %v727
  %s733 = scalar_lea.vmem %s0, 211
  %v734 = vld [vmem:[%s733] sm:$0x1]
  %s735 = scalar_lea.vmem %s0, 242
  %v736 = vld [vmem:[%s735] sm:$0x2]
  %vm737 = vcmask 1041409
  %v738 = vsel %vm737, %v736, %v734
  %739 = vrot.lane.b32.xlu0 %v738, 62
  %v740 = vpop.permute.xlu0 %739
  %vm741 = vcmask 589296
  %s742 = scalar_lea.vmem %s1, 14
  %743 = vst.msk [vmem:[%s742] sm:$0x3] %vm741, %v740
  %s744 = scalar_lea.vmem %s0, 6
  %v745 = vld [vmem:[%s744] sm:$0x1]
  %s746 = scalar_lea.vmem %s0, 37
  %v747 = vld [vmem:[%s746] sm:$0x2]
  %vm748 = vcmask 1041409
  %v749 = vsel %vm748, %v747, %v745
  %s750 = scalar_lea.vmem %s0, 68
  %v751 = vld [vmem:[%s750] sm:$0x4]
  %vm752 = vcmask 1042434
  %v753 = vsel %vm752, %v751, %v749
  %s754 = scalar_lea.vmem %s0, 99
  %v755 = vld [vmem:[%s754] sm:$0x8]
  %vm756 = vcmask 1043459
  %v757 = vsel %vm756, %v755, %v753
  %s758 = scalar_lea.vmem %s0, 130
  %v759 = vld [vmem:[%s758] sm:$0x10]
  %vm760 = vcmask 1044484
  %v761 = vsel %vm760, %v759, %v757
  %s762 = scalar_lea.vmem %s0, 161
  %v763 = vld [vmem:[%s762] sm:$0x20]
  %vm764 = vcmask 1045509
  %v765 = vsel %vm764, %v763, %v761
  %s766 = scalar_lea.vmem %s0, 192
  %v767 = vld [vmem:[%s766] sm:$0x40]
  %vm768 = vcmask 1046534
  %v769 = vsel %vm768, %v767, %v765
  %s770 = scalar_lea.vmem %s0, 223
  %v771 = vld [vmem:[%s770] sm:$0x80]
  %vm772 = vcmask 1047559
  %v773 = vsel %vm772, %v771, %v769
  %774 = vrot.lane.b32.xlu0 %v773, 60
  %v775 = vpop.permute.xlu0 %774
  %vm776 = vcmask 572896
  %777 = vst.msk [vmem:[%s1] sm:$0xff] %vm776, %v775
  %s778 = scalar_lea.vmem %s0, 262
  %v779 = vld [vmem:[%s778] sm:$0x1]
  %s780 = scalar_lea.vmem %s0, 293
  %v781 = vld [vmem:[%s780] sm:$0x2]
  %vm782 = vcmask 1041409
  %v783 = vsel %vm782, %v781, %v779
  %784 = vrot.lane.b32.xlu0 %v783, 60
  %v785 = vpop.permute.xlu0 %784
  %vm786 = vcmask 572896
  %s787 = scalar_lea.vmem %s1, 24
  %788 = vst.msk [vmem:[%s787] sm:$0x3] %vm786, %v785
  %s789 = scalar_lea.vmem %s0, 287
  %v790 = vld [vmem:[%s789] sm:$0x1]
  %s791 = scalar_lea.vmem %s0, 318
  %v792 = vld [vmem:[%s791] sm:$0x2]
  %vm793 = vcmask 1041409
  %v794 = vsel %vm793, %v792, %v790
  %s795 = scalar_lea.vmem %s0, 29
  %v796 = vld [vmem:[%s795] sm:$0x4]
  %vm797 = vcmask 1042434
  %v798 = vsel %vm797, %v796, %v794
  %s799 = scalar_lea.vmem %s0, 60
  %v800 = vld [vmem:[%s799] sm:$0x8]
  %vm801 = vcmask 1043459
  %v802 = vsel %vm801, %v800, %v798
  %s803 = scalar_lea.vmem %s0, 91
  %v804 = vld [vmem:[%s803] sm:$0x10]
  %vm805 = vcmask 1044484
  %v806 = vsel %vm805, %v804, %v802
  %s807 = scalar_lea.vmem %s0, 122
  %v808 = vld [vmem:[%s807] sm:$0x20]
  %vm809 = vcmask 1045509
  %v810 = vsel %vm809, %v808, %v806
  %s811 = scalar_lea.vmem %s0, 153
  %v812 = vld [vmem:[%s811] sm:$0x40]
  %vm813 = vcmask 1046534
  %v814 = vsel %vm813, %v812, %v810
  %s815 = scalar_lea.vmem %s0, 184
  %v816 = vld [vmem:[%s815] sm:$0x80]
  %vm817 = vcmask 1047559
  %v818 = vsel %vm817, %v816, %v814
  %819 = vrot.lane.b32.xlu0 %v818, 54
  %v820 = vpop.permute.xlu0 %819
  %vm821 = vcmask 523696
  %s822 = scalar_lea.vmem %s1, 40
  %823 = vst.msk [vmem:[%s822] sm:$0x3] %vm821, %v820
  %s824 = scalar_lea.vmem %s1, 14
  %825 = vst.msk [vmem:[%s824] sm:$0xfc] %vm821, %v820
  %s826 = scalar_lea.vmem %s0, 223
  %v827 = vld [vmem:[%s826] sm:$0x1]
  %s828 = scalar_lea.vmem %s0, 254
  %v829 = vld [vmem:[%s828] sm:$0x2]
  %vm830 = vcmask 1041409
  %v831 = vsel %vm830, %v829, %v827
  %832 = vrot.lane.b32.xlu0 %v831, 54
  %v833 = vpop.permute.xlu0 %832
  %vm834 = vcmask 523696
  %s835 = scalar_lea.vmem %s1, 22
  %836 = vst.msk [vmem:[%s835] sm:$0x3] %vm834, %v833
  %s837 = scalar_lea.vmem %s0, 274
  %v838 = vld [vmem:[%s837] sm:$0x1]
  %s839 = scalar_lea.vmem %s0, 305
  %v840 = vld [vmem:[%s839] sm:$0x2]
  %vm841 = vcmask 1041409
  %v842 = vsel %vm841, %v840, %v838
  %s843 = scalar_lea.vmem %s0, 16
  %v844 = vld [vmem:[%s843] sm:$0x4]
  %vm845 = vcmask 1042434
  %v846 = vsel %vm845, %v844, %v842
  %s847 = scalar_lea.vmem %s0, 47
  %v848 = vld [vmem:[%s847] sm:$0x8]
  %vm849 = vcmask 1043459
  %v850 = vsel %vm849, %v848, %v846
  %s851 = scalar_lea.vmem %s0, 78
  %v852 = vld [vmem:[%s851] sm:$0x10]
  %vm853 = vcmask 1044484
  %v854 = vsel %vm853, %v852, %v850
  %s855 = scalar_lea.vmem %s0, 109
  %v856 = vld [vmem:[%s855] sm:$0x20]
  %vm857 = vcmask 1045509
  %v858 = vsel %vm857, %v856, %v854
  %s859 = scalar_lea.vmem %s0, 140
  %v860 = vld [vmem:[%s859] sm:$0x40]
  %vm861 = vcmask 1046534
  %v862 = vsel %vm861, %v860, %v858
  %s863 = scalar_lea.vmem %s0, 171
  %v864 = vld [vmem:[%s863] sm:$0x80]
  %vm865 = vcmask 1047559
  %v866 = vsel %vm865, %v864, %v862
  %867 = vrot.lane.b32.xlu0 %v866, 52
  %v868 = vpop.permute.xlu0 %867
  %vm869 = vcmask 507296
  %s870 = scalar_lea.vmem %s1, 32
  %871 = vst.msk [vmem:[%s870] sm:$0x3] %vm869, %v868
  %s872 = scalar_lea.vmem %s1, 6
  %873 = vst.msk [vmem:[%s872] sm:$0xfc] %vm869, %v868
  %s874 = scalar_lea.vmem %s0, 210
  %v875 = vld [vmem:[%s874] sm:$0x1]
  %s876 = scalar_lea.vmem %s0, 241
  %v877 = vld [vmem:[%s876] sm:$0x2]
  %vm878 = vcmask 1041409
  %v879 = vsel %vm878, %v877, %v875
  %880 = vrot.lane.b32.xlu0 %v879, 52
  %v881 = vpop.permute.xlu0 %880
  %vm882 = vcmask 507296
  %s883 = scalar_lea.vmem %s1, 14
  %884 = vst.msk [vmem:[%s883] sm:$0x3] %vm882, %v881
  %s885 = scalar_lea.vmem %s0, 5
  %v886 = vld [vmem:[%s885] sm:$0x1]
  %s887 = scalar_lea.vmem %s0, 36
  %v888 = vld [vmem:[%s887] sm:$0x2]
  %vm889 = vcmask 1041409
  %v890 = vsel %vm889, %v888, %v886
  %s891 = scalar_lea.vmem %s0, 67
  %v892 = vld [vmem:[%s891] sm:$0x4]
  %vm893 = vcmask 1042434
  %v894 = vsel %vm893, %v892, %v890
  %s895 = scalar_lea.vmem %s0, 98
  %v896 = vld [vmem:[%s895] sm:$0x8]
  %vm897 = vcmask 1043459
  %v898 = vsel %vm897, %v896, %v894
  %s899 = scalar_lea.vmem %s0, 129
  %v900 = vld [vmem:[%s899] sm:$0x10]
  %vm901 = vcmask 1044484
  %v902 = vsel %vm901, %v900, %v898
  %s903 = scalar_lea.vmem %s0, 160
  %v904 = vld [vmem:[%s903] sm:$0x20]
  %vm905 = vcmask 1045509
  %v906 = vsel %vm905, %v904, %v902
  %s907 = scalar_lea.vmem %s0, 191
  %v908 = vld [vmem:[%s907] sm:$0x40]
  %vm909 = vcmask 1046534
  %v910 = vsel %vm909, %v908, %v906
  %s911 = scalar_lea.vmem %s0, 222
  %v912 = vld [vmem:[%s911] sm:$0x80]
  %vm913 = vcmask 1047559
  %v914 = vsel %vm913, %v912, %v910
  %915 = vrot.lane.b32.xlu0 %v914, 50
  %v916 = vpop.permute.xlu0 %915
  %vm917 = vcmask 490896
  %918 = vst.msk [vmem:[%s1] sm:$0xff] %vm917, %v916
  %s919 = scalar_lea.vmem %s0, 261
  %v920 = vld [vmem:[%s919] sm:$0x1]
  %s921 = scalar_lea.vmem %s0, 292
  %v922 = vld [vmem:[%s921] sm:$0x2]
  %vm923 = vcmask 1041409
  %v924 = vsel %vm923, %v922, %v920
  %925 = vrot.lane.b32.xlu0 %v924, 50
  %v926 = vpop.permute.xlu0 %925
  %vm927 = vcmask 490896
  %s928 = scalar_lea.vmem %s1, 24
  %929 = vst.msk [vmem:[%s928] sm:$0x3] %vm927, %v926
  %s930 = scalar_lea.vmem %s0, 286
  %v931 = vld [vmem:[%s930] sm:$0x1]
  %s932 = scalar_lea.vmem %s0, 317
  %v933 = vld [vmem:[%s932] sm:$0x2]
  %vm934 = vcmask 1041409
  %v935 = vsel %vm934, %v933, %v931
  %s936 = scalar_lea.vmem %s0, 28
  %v937 = vld [vmem:[%s936] sm:$0x4]
  %vm938 = vcmask 1042434
  %v939 = vsel %vm938, %v937, %v935
  %s940 = scalar_lea.vmem %s0, 59
  %v941 = vld [vmem:[%s940] sm:$0x8]
  %vm942 = vcmask 1043459
  %v943 = vsel %vm942, %v941, %v939
  %s944 = scalar_lea.vmem %s0, 90
  %v945 = vld [vmem:[%s944] sm:$0x10]
  %vm946 = vcmask 1044484
  %v947 = vsel %vm946, %v945, %v943
  %s948 = scalar_lea.vmem %s0, 121
  %v949 = vld [vmem:[%s948] sm:$0x20]
  %vm950 = vcmask 1045509
  %v951 = vsel %vm950, %v949, %v947
  %s952 = scalar_lea.vmem %s0, 152
  %v953 = vld [vmem:[%s952] sm:$0x40]
  %vm954 = vcmask 1046534
  %v955 = vsel %vm954, %v953, %v951
  %s956 = scalar_lea.vmem %s0, 183
  %v957 = vld [vmem:[%s956] sm:$0x80]
  %vm958 = vcmask 1047559
  %v959 = vsel %vm958, %v957, %v955
  %960 = vrot.lane.b32.xlu0 %v959, 44
  %v961 = vpop.permute.xlu0 %960
  %vm962 = vcmask 441696
  %s963 = scalar_lea.vmem %s1, 40
  %964 = vst.msk [vmem:[%s963] sm:$0x3] %vm962, %v961
  %s965 = scalar_lea.vmem %s1, 14
  %966 = vst.msk [vmem:[%s965] sm:$0xfc] %vm962, %v961
  %s967 = scalar_lea.vmem %s0, 222
  %v968 = vld [vmem:[%s967] sm:$0x1]
  %s969 = scalar_lea.vmem %s0, 253
  %v970 = vld [vmem:[%s969] sm:$0x2]
  %vm971 = vcmask 1041409
  %v972 = vsel %vm971, %v970, %v968
  %973 = vrot.lane.b32.xlu0 %v972, 44
  %v974 = vpop.permute.xlu0 %973
  %vm975 = vcmask 441696
  %s976 = scalar_lea.vmem %s1, 22
  %977 = vst.msk [vmem:[%s976] sm:$0x3] %vm975, %v974
  %s978 = scalar_lea.vmem %s0, 273
  %v979 = vld [vmem:[%s978] sm:$0x1]
  %s980 = scalar_lea.vmem %s0, 304
  %v981 = vld [vmem:[%s980] sm:$0x2]
  %vm982 = vcmask 1041409
  %v983 = vsel %vm982, %v981, %v979
  %s984 = scalar_lea.vmem %s0, 15
  %v985 = vld [vmem:[%s984] sm:$0x4]
  %vm986 = vcmask 1042434
  %v987 = vsel %vm986, %v985, %v983
  %s988 = scalar_lea.vmem %s0, 46
  %v989 = vld [vmem:[%s988] sm:$0x8]
  %vm990 = vcmask 1043459
  %v991 = vsel %vm990, %v989, %v987
  %s992 = scalar_lea.vmem %s0, 77
  %v993 = vld [vmem:[%s992] sm:$0x10]
  %vm994 = vcmask 1044484
  %v995 = vsel %vm994, %v993, %v991
  %s996 = scalar_lea.vmem %s0, 108
  %v997 = vld [vmem:[%s996] sm:$0x20]
  %vm998 = vcmask 1045509
  %v999 = vsel %vm998, %v997, %v995
  %s1000 = scalar_lea.vmem %s0, 139
  %v1001 = vld [vmem:[%s1000] sm:$0x40]
  %vm1002 = vcmask 1046534
  %v1003 = vsel %vm1002, %v1001, %v999
  %s1004 = scalar_lea.vmem %s0, 170
  %v1005 = vld [vmem:[%s1004] sm:$0x80]
  %vm1006 = vcmask 1047559
  %v1007 = vsel %vm1006, %v1005, %v1003
  %1008 = vrot.lane.b32.xlu0 %v1007, 42
  %v1009 = vpop.permute.xlu0 %1008
  %vm1010 = vcmask 425296
  %s1011 = scalar_lea.vmem %s1, 32
  %1012 = vst.msk [vmem:[%s1011] sm:$0x3] %vm1010, %v1009
  %s1013 = scalar_lea.vmem %s1, 6
  %1014 = vst.msk [vmem:[%s1013] sm:$0xfc] %vm1010, %v1009
  %s1015 = scalar_lea.vmem %s0, 209
  %v1016 = vld [vmem:[%s1015] sm:$0x1]
  %s1017 = scalar_lea.vmem %s0, 240
  %v1018 = vld [vmem:[%s1017] sm:$0x2]
  %vm1019 = vcmask 1041409
  %v1020 = vsel %vm1019, %v1018, %v1016
  %1021 = vrot.lane.b32.xlu0 %v1020, 42
  %v1022 = vpop.permute.xlu0 %1021
  %vm1023 = vcmask 425296
  %s1024 = scalar_lea.vmem %s1, 14
  %1025 = vst.msk [vmem:[%s1024] sm:$0x3] %vm1023, %v1022
  %s1026 = scalar_lea.vmem %s0, 4
  %v1027 = vld [vmem:[%s1026] sm:$0x1]
  %s1028 = scalar_lea.vmem %s0, 35
  %v1029 = vld [vmem:[%s1028] sm:$0x2]
  %vm1030 = vcmask 1041409
  %v1031 = vsel %vm1030, %v1029, %v1027
  %s1032 = scalar_lea.vmem %s0, 66
  %v1033 = vld [vmem:[%s1032] sm:$0x4]
  %vm1034 = vcmask 1042434
  %v1035 = vsel %vm1034, %v1033, %v1031
  %s1036 = scalar_lea.vmem %s0, 97
  %v1037 = vld [vmem:[%s1036] sm:$0x8]
  %vm1038 = vcmask 1043459
  %v1039 = vsel %vm1038, %v1037, %v1035
  %s1040 = scalar_lea.vmem %s0, 128
  %v1041 = vld [vmem:[%s1040] sm:$0x10]
  %vm1042 = vcmask 1044484
  %v1043 = vsel %vm1042, %v1041, %v1039
  %s1044 = scalar_lea.vmem %s0, 159
  %v1045 = vld [vmem:[%s1044] sm:$0x20]
  %vm1046 = vcmask 1045509
  %v1047 = vsel %vm1046, %v1045, %v1043
  %s1048 = scalar_lea.vmem %s0, 190
  %v1049 = vld [vmem:[%s1048] sm:$0x40]
  %vm1050 = vcmask 1046534
  %v1051 = vsel %vm1050, %v1049, %v1047
  %s1052 = scalar_lea.vmem %s0, 221
  %v1053 = vld [vmem:[%s1052] sm:$0x80]
  %vm1054 = vcmask 1047559
  %v1055 = vsel %vm1054, %v1053, %v1051
  %1056 = vrot.lane.b32.xlu0 %v1055, 40
  %v1057 = vpop.permute.xlu0 %1056
  %vm1058 = vcmask 408896
  %1059 = vst.msk [vmem:[%s1] sm:$0xff] %vm1058, %v1057
  %s1060 = scalar_lea.vmem %s0, 260
  %v1061 = vld [vmem:[%s1060] sm:$0x1]
  %s1062 = scalar_lea.vmem %s0, 291
  %v1063 = vld [vmem:[%s1062] sm:$0x2]
  %vm1064 = vcmask 1041409
  %v1065 = vsel %vm1064, %v1063, %v1061
  %1066 = vrot.lane.b32.xlu0 %v1065, 40
  %v1067 = vpop.permute.xlu0 %1066
  %vm1068 = vcmask 408896
  %s1069 = scalar_lea.vmem %s1, 24
  %1070 = vst.msk [vmem:[%s1069] sm:$0x3] %vm1068, %v1067
  %s1071 = scalar_lea.vmem %s0, 285
  %v1072 = vld [vmem:[%s1071] sm:$0x1]
  %s1073 = scalar_lea.vmem %s0, 316
  %v1074 = vld [vmem:[%s1073] sm:$0x2]
  %vm1075 = vcmask 1041409
  %v1076 = vsel %vm1075, %v1074, %v1072
  %s1077 = scalar_lea.vmem %s0, 27
  %v1078 = vld [vmem:[%s1077] sm:$0x4]
  %vm1079 = vcmask 1042434
  %v1080 = vsel %vm1079, %v1078, %v1076
  %s1081 = scalar_lea.vmem %s0, 58
  %v1082 = vld [vmem:[%s1081] sm:$0x8]
  %vm1083 = vcmask 1043459
  %v1084 = vsel %vm1083, %v1082, %v1080
  %s1085 = scalar_lea.vmem %s0, 89
  %v1086 = vld [vmem:[%s1085] sm:$0x10]
  %vm1087 = vcmask 1044484
  %v1088 = vsel %vm1087, %v1086, %v1084
  %s1089 = scalar_lea.vmem %s0, 120
  %v1090 = vld [vmem:[%s1089] sm:$0x20]
  %vm1091 = vcmask 1045509
  %v1092 = vsel %vm1091, %v1090, %v1088
  %s1093 = scalar_lea.vmem %s0, 151
  %v1094 = vld [vmem:[%s1093] sm:$0x40]
  %vm1095 = vcmask 1046534
  %v1096 = vsel %vm1095, %v1094, %v1092
  %s1097 = scalar_lea.vmem %s0, 182
  %v1098 = vld [vmem:[%s1097] sm:$0x80]
  %vm1099 = vcmask 1047559
  %v1100 = vsel %vm1099, %v1098, %v1096
  %1101 = vrot.lane.b32.xlu0 %v1100, 34
  %v1102 = vpop.permute.xlu0 %1101
  %vm1103 = vcmask 359696
  %s1104 = scalar_lea.vmem %s1, 40
  %1105 = vst.msk [vmem:[%s1104] sm:$0x3] %vm1103, %v1102
  %s1106 = scalar_lea.vmem %s1, 14
  %1107 = vst.msk [vmem:[%s1106] sm:$0xfc] %vm1103, %v1102
  %s1108 = scalar_lea.vmem %s0, 221
  %v1109 = vld [vmem:[%s1108] sm:$0x1]
  %s1110 = scalar_lea.vmem %s0, 252
  %v1111 = vld [vmem:[%s1110] sm:$0x2]
  %vm1112 = vcmask 1041409
  %v1113 = vsel %vm1112, %v1111, %v1109
  %1114 = vrot.lane.b32.xlu0 %v1113, 34
  %v1115 = vpop.permute.xlu0 %1114
  %vm1116 = vcmask 359696
  %s1117 = scalar_lea.vmem %s1, 22
  %1118 = vst.msk [vmem:[%s1117] sm:$0x3] %vm1116, %v1115
  %s1119 = scalar_lea.vmem %s0, 272
  %v1120 = vld [vmem:[%s1119] sm:$0x1]
  %s1121 = scalar_lea.vmem %s0, 303
  %v1122 = vld [vmem:[%s1121] sm:$0x2]
  %vm1123 = vcmask 1041409
  %v1124 = vsel %vm1123, %v1122, %v1120
  %s1125 = scalar_lea.vmem %s0, 14
  %v1126 = vld [vmem:[%s1125] sm:$0x4]
  %vm1127 = vcmask 1042434
  %v1128 = vsel %vm1127, %v1126, %v1124
  %s1129 = scalar_lea.vmem %s0, 45
  %v1130 = vld [vmem:[%s1129] sm:$0x8]
  %vm1131 = vcmask 1043459
  %v1132 = vsel %vm1131, %v1130, %v1128
  %s1133 = scalar_lea.vmem %s0, 76
  %v1134 = vld [vmem:[%s1133] sm:$0x10]
  %vm1135 = vcmask 1044484
  %v1136 = vsel %vm1135, %v1134, %v1132
  %s1137 = scalar_lea.vmem %s0, 107
  %v1138 = vld [vmem:[%s1137] sm:$0x20]
  %vm1139 = vcmask 1045509
  %v1140 = vsel %vm1139, %v1138, %v1136
  %s1141 = scalar_lea.vmem %s0, 138
  %v1142 = vld [vmem:[%s1141] sm:$0x40]
  %vm1143 = vcmask 1046534
  %v1144 = vsel %vm1143, %v1142, %v1140
  %s1145 = scalar_lea.vmem %s0, 169
  %v1146 = vld [vmem:[%s1145] sm:$0x80]
  %vm1147 = vcmask 1047559
  %v1148 = vsel %vm1147, %v1146, %v1144
  %1149 = vrot.lane.b32.xlu0 %v1148, 32
  %v1150 = vpop.permute.xlu0 %1149
  %vm1151 = vcmask 343296
  %s1152 = scalar_lea.vmem %s1, 32
  %1153 = vst.msk [vmem:[%s1152] sm:$0x3] %vm1151, %v1150
  %s1154 = scalar_lea.vmem %s1, 6
  %1155 = vst.msk [vmem:[%s1154] sm:$0xfc] %vm1151, %v1150
  %s1156 = scalar_lea.vmem %s0, 208
  %v1157 = vld [vmem:[%s1156] sm:$0x1]
  %s1158 = scalar_lea.vmem %s0, 239
  %v1159 = vld [vmem:[%s1158] sm:$0x2]
  %vm1160 = vcmask 1041409
  %v1161 = vsel %vm1160, %v1159, %v1157
  %1162 = vrot.lane.b32.xlu0 %v1161, 32
  %v1163 = vpop.permute.xlu0 %1162
  %vm1164 = vcmask 343296
  %s1165 = scalar_lea.vmem %s1, 14
  %1166 = vst.msk [vmem:[%s1165] sm:$0x3] %vm1164, %v1163
  %s1167 = scalar_lea.vmem %s0, 3
  %v1168 = vld [vmem:[%s1167] sm:$0x1]
  %s1169 = scalar_lea.vmem %s0, 34
  %v1170 = vld [vmem:[%s1169] sm:$0x2]
  %vm1171 = vcmask 1041409
  %v1172 = vsel %vm1171, %v1170, %v1168
  %s1173 = scalar_lea.vmem %s0, 65
  %v1174 = vld [vmem:[%s1173] sm:$0x4]
  %vm1175 = vcmask 1042434
  %v1176 = vsel %vm1175, %v1174, %v1172
  %s1177 = scalar_lea.vmem %s0, 96
  %v1178 = vld [vmem:[%s1177] sm:$0x8]
  %vm1179 = vcmask 1043459
  %v1180 = vsel %vm1179, %v1178, %v1176
  %s1181 = scalar_lea.vmem %s0, 127
  %v1182 = vld [vmem:[%s1181] sm:$0x10]
  %vm1183 = vcmask 1044484
  %v1184 = vsel %vm1183, %v1182, %v1180
  %s1185 = scalar_lea.vmem %s0, 158
  %v1186 = vld [vmem:[%s1185] sm:$0x20]
  %vm1187 = vcmask 1045509
  %v1188 = vsel %vm1187, %v1186, %v1184
  %s1189 = scalar_lea.vmem %s0, 189
  %v1190 = vld [vmem:[%s1189] sm:$0x40]
  %vm1191 = vcmask 1046534
  %v1192 = vsel %vm1191, %v1190, %v1188
  %s1193 = scalar_lea.vmem %s0, 220
  %v1194 = vld [vmem:[%s1193] sm:$0x80]
  %vm1195 = vcmask 1047559
  %v1196 = vsel %vm1195, %v1194, %v1192
  %1197 = vrot.lane.b32.xlu0 %v1196, 30
  %v1198 = vpop.permute.xlu0 %1197
  %vm1199 = vcmask 326896
  %1200 = vst.msk [vmem:[%s1] sm:$0xff] %vm1199, %v1198
  %s1201 = scalar_lea.vmem %s0, 259
  %v1202 = vld [vmem:[%s1201] sm:$0x1]
  %s1203 = scalar_lea.vmem %s0, 290
  %v1204 = vld [vmem:[%s1203] sm:$0x2]
  %vm1205 = vcmask 1041409
  %v1206 = vsel %vm1205, %v1204, %v1202
  %1207 = vrot.lane.b32.xlu0 %v1206, 30
  %v1208 = vpop.permute.xlu0 %1207
  %vm1209 = vcmask 326896
  %s1210 = scalar_lea.vmem %s1, 24
  %1211 = vst.msk [vmem:[%s1210] sm:$0x3] %vm1209, %v1208
  %s1212 = scalar_lea.vmem %s0, 284
  %v1213 = vld [vmem:[%s1212] sm:$0x1]
  %s1214 = scalar_lea.vmem %s0, 315
  %v1215 = vld [vmem:[%s1214] sm:$0x2]
  %vm1216 = vcmask 1041409
  %v1217 = vsel %vm1216, %v1215, %v1213
  %s1218 = scalar_lea.vmem %s0, 26
  %v1219 = vld [vmem:[%s1218] sm:$0x4]
  %vm1220 = vcmask 1042434
  %v1221 = vsel %vm1220, %v1219, %v1217
  %s1222 = scalar_lea.vmem %s0, 57
  %v1223 = vld [vmem:[%s1222] sm:$0x8]
  %vm1224 = vcmask 1043459
  %v1225 = vsel %vm1224, %v1223, %v1221
  %s1226 = scalar_lea.vmem %s0, 88
  %v1227 = vld [vmem:[%s1226] sm:$0x10]
  %vm1228 = vcmask 1044484
  %v1229 = vsel %vm1228, %v1227, %v1225
  %s1230 = scalar_lea.vmem %s0, 119
  %v1231 = vld [vmem:[%s1230] sm:$0x20]
  %vm1232 = vcmask 1045509
  %v1233 = vsel %vm1232, %v1231, %v1229
  %s1234 = scalar_lea.vmem %s0, 150
  %v1235 = vld [vmem:[%s1234] sm:$0x40]
  %vm1236 = vcmask 1046534
  %v1237 = vsel %vm1236, %v1235, %v1233
  %s1238 = scalar_lea.vmem %s0, 181
  %v1239 = vld [vmem:[%s1238] sm:$0x80]
  %vm1240 = vcmask 1047559
  %v1241 = vsel %vm1240, %v1239, %v1237
  %1242 = vrot.lane.b32.xlu0 %v1241, 24
  %v1243 = vpop.permute.xlu0 %1242
  %vm1244 = vcmask 277696
  %s1245 = scalar_lea.vmem %s1, 40
  %1246 = vst.msk [vmem:[%s1245] sm:$0x3] %vm1244, %v1243
  %s1247 = scalar_lea.vmem %s1, 14
  %1248 = vst.msk [vmem:[%s1247] sm:$0xfc] %vm1244, %v1243
  %s1249 = scalar_lea.vmem %s0, 220
  %v1250 = vld [vmem:[%s1249] sm:$0x1]
  %s1251 = scalar_lea.vmem %s0, 251
  %v1252 = vld [vmem:[%s1251] sm:$0x2]
  %vm1253 = vcmask 1041409
  %v1254 = vsel %vm1253, %v1252, %v1250
  %1255 = vrot.lane.b32.xlu0 %v1254, 24
  %v1256 = vpop.permute.xlu0 %1255
  %vm1257 = vcmask 277696
  %s1258 = scalar_lea.vmem %s1, 22
  %1259 = vst.msk [vmem:[%s1258] sm:$0x3] %vm1257, %v1256
  %s1260 = scalar_lea.vmem %s0, 271
  %v1261 = vld [vmem:[%s1260] sm:$0x1]
  %s1262 = scalar_lea.vmem %s0, 302
  %v1263 = vld [vmem:[%s1262] sm:$0x2]
  %vm1264 = vcmask 1041409
  %v1265 = vsel %vm1264, %v1263, %v1261
  %s1266 = scalar_lea.vmem %s0, 13
  %v1267 = vld [vmem:[%s1266] sm:$0x4]
  %vm1268 = vcmask 1042434
  %v1269 = vsel %vm1268, %v1267, %v1265
  %s1270 = scalar_lea.vmem %s0, 44
  %v1271 = vld [vmem:[%s1270] sm:$0x8]
  %vm1272 = vcmask 1043459
  %v1273 = vsel %vm1272, %v1271, %v1269
  %s1274 = scalar_lea.vmem %s0, 75
  %v1275 = vld [vmem:[%s1274] sm:$0x10]
  %vm1276 = vcmask 1044484
  %v1277 = vsel %vm1276, %v1275, %v1273
  %s1278 = scalar_lea.vmem %s0, 106
  %v1279 = vld [vmem:[%s1278] sm:$0x20]
  %vm1280 = vcmask 1045509
  %v1281 = vsel %vm1280, %v1279, %v1277
  %s1282 = scalar_lea.vmem %s0, 137
  %v1283 = vld [vmem:[%s1282] sm:$0x40]
  %vm1284 = vcmask 1046534
  %v1285 = vsel %vm1284, %v1283, %v1281
  %s1286 = scalar_lea.vmem %s0, 168
  %v1287 = vld [vmem:[%s1286] sm:$0x80]
  %vm1288 = vcmask 1047559
  %v1289 = vsel %vm1288, %v1287, %v1285
  %1290 = vrot.lane.b32.xlu0 %v1289, 22
  %v1291 = vpop.permute.xlu0 %1290
  %vm1292 = vcmask 261296
  %s1293 = scalar_lea.vmem %s1, 32
  %1294 = vst.msk [vmem:[%s1293] sm:$0x3] %vm1292, %v1291
  %s1295 = scalar_lea.vmem %s1, 6
  %1296 = vst.msk [vmem:[%s1295] sm:$0xfc] %vm1292, %v1291
  %s1297 = scalar_lea.vmem %s0, 207
  %v1298 = vld [vmem:[%s1297] sm:$0x1]
  %s1299 = scalar_lea.vmem %s0, 238
  %v1300 = vld [vmem:[%s1299] sm:$0x2]
  %vm1301 = vcmask 1041409
  %v1302 = vsel %vm1301, %v1300, %v1298
  %1303 = vrot.lane.b32.xlu0 %v1302, 22
  %v1304 = vpop.permute.xlu0 %1303
  %vm1305 = vcmask 261296
  %s1306 = scalar_lea.vmem %s1, 14
  %1307 = vst.msk [vmem:[%s1306] sm:$0x3] %vm1305, %v1304
  %s1308 = scalar_lea.vmem %s0, 2
  %v1309 = vld [vmem:[%s1308] sm:$0x1]
  %s1310 = scalar_lea.vmem %s0, 33
  %v1311 = vld [vmem:[%s1310] sm:$0x2]
  %vm1312 = vcmask 1041409
  %v1313 = vsel %vm1312, %v1311, %v1309
  %s1314 = scalar_lea.vmem %s0, 64
  %v1315 = vld [vmem:[%s1314] sm:$0x4]
  %vm1316 = vcmask 1042434
  %v1317 = vsel %vm1316, %v1315, %v1313
  %s1318 = scalar_lea.vmem %s0, 95
  %v1319 = vld [vmem:[%s1318] sm:$0x8]
  %vm1320 = vcmask 1043459
  %v1321 = vsel %vm1320, %v1319, %v1317
  %s1322 = scalar_lea.vmem %s0, 126
  %v1323 = vld [vmem:[%s1322] sm:$0x10]
  %vm1324 = vcmask 1044484
  %v1325 = vsel %vm1324, %v1323, %v1321
  %s1326 = scalar_lea.vmem %s0, 157
  %v1327 = vld [vmem:[%s1326] sm:$0x20]
  %vm1328 = vcmask 1045509
  %v1329 = vsel %vm1328, %v1327, %v1325
  %s1330 = scalar_lea.vmem %s0, 188
  %v1331 = vld [vmem:[%s1330] sm:$0x40]
  %vm1332 = vcmask 1046534
  %v1333 = vsel %vm1332, %v1331, %v1329
  %s1334 = scalar_lea.vmem %s0, 219
  %v1335 = vld [vmem:[%s1334] sm:$0x80]
  %vm1336 = vcmask 1047559
  %v1337 = vsel %vm1336, %v1335, %v1333
  %1338 = vrot.lane.b32.xlu0 %v1337, 20
  %v1339 = vpop.permute.xlu0 %1338
  %vm1340 = vcmask 244896
  %1341 = vst.msk [vmem:[%s1] sm:$0xff] %vm1340, %v1339
  %s1342 = scalar_lea.vmem %s0, 258
  %v1343 = vld [vmem:[%s1342] sm:$0x1]
  %s1344 = scalar_lea.vmem %s0, 289
  %v1345 = vld [vmem:[%s1344] sm:$0x2]
  %vm1346 = vcmask 1041409
  %v1347 = vsel %vm1346, %v1345, %v1343
  %1348 = vrot.lane.b32.xlu0 %v1347, 20
  %v1349 = vpop.permute.xlu0 %1348
  %vm1350 = vcmask 244896
  %s1351 = scalar_lea.vmem %s1, 24
  %1352 = vst.msk [vmem:[%s1351] sm:$0x3] %vm1350, %v1349
  %s1353 = scalar_lea.vmem %s0, 283
  %v1354 = vld [vmem:[%s1353] sm:$0x1]
  %s1355 = scalar_lea.vmem %s0, 314
  %v1356 = vld [vmem:[%s1355] sm:$0x2]
  %vm1357 = vcmask 1041409
  %v1358 = vsel %vm1357, %v1356, %v1354
  %s1359 = scalar_lea.vmem %s0, 25
  %v1360 = vld [vmem:[%s1359] sm:$0x4]
  %vm1361 = vcmask 1042434
  %v1362 = vsel %vm1361, %v1360, %v1358
  %s1363 = scalar_lea.vmem %s0, 56
  %v1364 = vld [vmem:[%s1363] sm:$0x8]
  %vm1365 = vcmask 1043459
  %v1366 = vsel %vm1365, %v1364, %v1362
  %s1367 = scalar_lea.vmem %s0, 87
  %v1368 = vld [vmem:[%s1367] sm:$0x10]
  %vm1369 = vcmask 1044484
  %v1370 = vsel %vm1369, %v1368, %v1366
  %s1371 = scalar_lea.vmem %s0, 118
  %v1372 = vld [vmem:[%s1371] sm:$0x20]
  %vm1373 = vcmask 1045509
  %v1374 = vsel %vm1373, %v1372, %v1370
  %s1375 = scalar_lea.vmem %s0, 149
  %v1376 = vld [vmem:[%s1375] sm:$0x40]
  %vm1377 = vcmask 1046534
  %v1378 = vsel %vm1377, %v1376, %v1374
  %s1379 = scalar_lea.vmem %s0, 180
  %v1380 = vld [vmem:[%s1379] sm:$0x80]
  %vm1381 = vcmask 1047559
  %v1382 = vsel %vm1381, %v1380, %v1378
  %1383 = vrot.lane.b32.xlu0 %v1382, 14
  %v1384 = vpop.permute.xlu0 %1383
  %vm1385 = vcmask 195696
  %s1386 = scalar_lea.vmem %s1, 40
  %1387 = vst.msk [vmem:[%s1386] sm:$0x3] %vm1385, %v1384
  %s1388 = scalar_lea.vmem %s1, 14
  %1389 = vst.msk [vmem:[%s1388] sm:$0xfc] %vm1385, %v1384
  %s1390 = scalar_lea.vmem %s0, 219
  %v1391 = vld [vmem:[%s1390] sm:$0x1]
  %s1392 = scalar_lea.vmem %s0, 250
  %v1393 = vld [vmem:[%s1392] sm:$0x2]
  %vm1394 = vcmask 1041409
  %v1395 = vsel %vm1394, %v1393, %v1391
  %1396 = vrot.lane.b32.xlu0 %v1395, 14
  %v1397 = vpop.permute.xlu0 %1396
  %vm1398 = vcmask 195696
  %s1399 = scalar_lea.vmem %s1, 22
  %1400 = vst.msk [vmem:[%s1399] sm:$0x3] %vm1398, %v1397
  %s1401 = scalar_lea.vmem %s0, 270
  %v1402 = vld [vmem:[%s1401] sm:$0x1]
  %s1403 = scalar_lea.vmem %s0, 301
  %v1404 = vld [vmem:[%s1403] sm:$0x2]
  %vm1405 = vcmask 1041409
  %v1406 = vsel %vm1405, %v1404, %v1402
  %s1407 = scalar_lea.vmem %s0, 12
  %v1408 = vld [vmem:[%s1407] sm:$0x4]
  %vm1409 = vcmask 1042434
  %v1410 = vsel %vm1409, %v1408, %v1406
  %s1411 = scalar_lea.vmem %s0, 43
  %v1412 = vld [vmem:[%s1411] sm:$0x8]
  %vm1413 = vcmask 1043459
  %v1414 = vsel %vm1413, %v1412, %v1410
  %s1415 = scalar_lea.vmem %s0, 74
  %v1416 = vld [vmem:[%s1415] sm:$0x10]
  %vm1417 = vcmask 1044484
  %v1418 = vsel %vm1417, %v1416, %v1414
  %s1419 = scalar_lea.vmem %s0, 105
  %v1420 = vld [vmem:[%s1419] sm:$0x20]
  %vm1421 = vcmask 1045509
  %v1422 = vsel %vm1421, %v1420, %v1418
  %s1423 = scalar_lea.vmem %s0, 136
  %v1424 = vld [vmem:[%s1423] sm:$0x40]
  %vm1425 = vcmask 1046534
  %v1426 = vsel %vm1425, %v1424, %v1422
  %s1427 = scalar_lea.vmem %s0, 167
  %v1428 = vld [vmem:[%s1427] sm:$0x80]
  %vm1429 = vcmask 1047559
  %v1430 = vsel %vm1429, %v1428, %v1426
  %1431 = vrot.lane.b32.xlu0 %v1430, 12
  %v1432 = vpop.permute.xlu0 %1431
  %vm1433 = vcmask 179296
  %s1434 = scalar_lea.vmem %s1, 32
  %1435 = vst.msk [vmem:[%s1434] sm:$0x3] %vm1433, %v1432
  %s1436 = scalar_lea.vmem %s1, 6
  %1437 = vst.msk [vmem:[%s1436] sm:$0xfc] %vm1433, %v1432
  %s1438 = scalar_lea.vmem %s0, 206
  %v1439 = vld [vmem:[%s1438] sm:$0x1]
  %s1440 = scalar_lea.vmem %s0, 237
  %v1441 = vld [vmem:[%s1440] sm:$0x2]
  %vm1442 = vcmask 1041409
  %v1443 = vsel %vm1442, %v1441, %v1439
  %1444 = vrot.lane.b32.xlu0 %v1443, 12
  %v1445 = vpop.permute.xlu0 %1444
  %vm1446 = vcmask 179296
  %s1447 = scalar_lea.vmem %s1, 14
  %1448 = vst.msk [vmem:[%s1447] sm:$0x3] %vm1446, %v1445
  %s1449 = scalar_lea.vmem %s0, 1
  %v1450 = vld [vmem:[%s1449] sm:$0x1]
  %s1451 = scalar_lea.vmem %s0, 32
  %v1452 = vld [vmem:[%s1451] sm:$0x2]
  %vm1453 = vcmask 1041409
  %v1454 = vsel %vm1453, %v1452, %v1450
  %s1455 = scalar_lea.vmem %s0, 63
  %v1456 = vld [vmem:[%s1455] sm:$0x4]
  %vm1457 = vcmask 1042434
  %v1458 = vsel %vm1457, %v1456, %v1454
  %s1459 = scalar_lea.vmem %s0, 94
  %v1460 = vld [vmem:[%s1459] sm:$0x8]
  %vm1461 = vcmask 1043459
  %v1462 = vsel %vm1461, %v1460, %v1458
  %s1463 = scalar_lea.vmem %s0, 125
  %v1464 = vld [vmem:[%s1463] sm:$0x10]
  %vm1465 = vcmask 1044484
  %v1466 = vsel %vm1465, %v1464, %v1462
  %s1467 = scalar_lea.vmem %s0, 156
  %v1468 = vld [vmem:[%s1467] sm:$0x20]
  %vm1469 = vcmask 1045509
  %v1470 = vsel %vm1469, %v1468, %v1466
  %s1471 = scalar_lea.vmem %s0, 187
  %v1472 = vld [vmem:[%s1471] sm:$0x40]
  %vm1473 = vcmask 1046534
  %v1474 = vsel %vm1473, %v1472, %v1470
  %s1475 = scalar_lea.vmem %s0, 218
  %v1476 = vld [vmem:[%s1475] sm:$0x80]
  %vm1477 = vcmask 1047559
  %v1478 = vsel %vm1477, %v1476, %v1474
  %1479 = vrot.lane.b32.xlu0 %v1478, 10
  %v1480 = vpop.permute.xlu0 %1479
  %vm1481 = vcmask 162896
  %1482 = vst.msk [vmem:[%s1] sm:$0xff] %vm1481, %v1480
  %s1483 = scalar_lea.vmem %s0, 257
  %v1484 = vld [vmem:[%s1483] sm:$0x1]
  %s1485 = scalar_lea.vmem %s0, 288
  %v1486 = vld [vmem:[%s1485] sm:$0x2]
  %vm1487 = vcmask 1041409
  %v1488 = vsel %vm1487, %v1486, %v1484
  %1489 = vrot.lane.b32.xlu0 %v1488, 10
  %v1490 = vpop.permute.xlu0 %1489
  %vm1491 = vcmask 162896
  %s1492 = scalar_lea.vmem %s1, 24
  %1493 = vst.msk [vmem:[%s1492] sm:$0x3] %vm1491, %v1490
  %s1494 = scalar_lea.vmem %s0, 282
  %v1495 = vld [vmem:[%s1494] sm:$0x1]
  %s1496 = scalar_lea.vmem %s0, 313
  %v1497 = vld [vmem:[%s1496] sm:$0x2]
  %vm1498 = vcmask 1041409
  %v1499 = vsel %vm1498, %v1497, %v1495
  %s1500 = scalar_lea.vmem %s0, 24
  %v1501 = vld [vmem:[%s1500] sm:$0x4]
  %vm1502 = vcmask 1042434
  %v1503 = vsel %vm1502, %v1501, %v1499
  %s1504 = scalar_lea.vmem %s0, 55
  %v1505 = vld [vmem:[%s1504] sm:$0x8]
  %vm1506 = vcmask 1043459
  %v1507 = vsel %vm1506, %v1505, %v1503
  %s1508 = scalar_lea.vmem %s0, 86
  %v1509 = vld [vmem:[%s1508] sm:$0x10]
  %vm1510 = vcmask 1044484
  %v1511 = vsel %vm1510, %v1509, %v1507
  %s1512 = scalar_lea.vmem %s0, 117
  %v1513 = vld [vmem:[%s1512] sm:$0x20]
  %vm1514 = vcmask 1045509
  %v1515 = vsel %vm1514, %v1513, %v1511
  %s1516 = scalar_lea.vmem %s0, 148
  %v1517 = vld [vmem:[%s1516] sm:$0x40]
  %vm1518 = vcmask 1046534
  %v1519 = vsel %vm1518, %v1517, %v1515
  %s1520 = scalar_lea.vmem %s0, 179
  %v1521 = vld [vmem:[%s1520] sm:$0x80]
  %vm1522 = vcmask 1047559
  %v1523 = vsel %vm1522, %v1521, %v1519
  %1524 = vrot.lane.b32.xlu0 %v1523, 4
  %v1525 = vpop.permute.xlu0 %1524
  %vm1526 = vcmask 113696
  %s1527 = scalar_lea.vmem %s1, 40
  %1528 = vst.msk [vmem:[%s1527] sm:$0x3] %vm1526, %v1525
  %s1529 = scalar_lea.vmem %s1, 14
  %1530 = vst.msk [vmem:[%s1529] sm:$0xfc] %vm1526, %v1525
  %s1531 = scalar_lea.vmem %s0, 218
  %v1532 = vld [vmem:[%s1531] sm:$0x1]
  %s1533 = scalar_lea.vmem %s0, 249
  %v1534 = vld [vmem:[%s1533] sm:$0x2]
  %vm1535 = vcmask 1041409
  %v1536 = vsel %vm1535, %v1534, %v1532
  %1537 = vrot.lane.b32.xlu0 %v1536, 4
  %v1538 = vpop.permute.xlu0 %1537
  %vm1539 = vcmask 113696
  %s1540 = scalar_lea.vmem %s1, 22
  %1541 = vst.msk [vmem:[%s1540] sm:$0x3] %vm1539, %v1538
  %s1542 = scalar_lea.vmem %s0, 269
  %v1543 = vld [vmem:[%s1542] sm:$0x1]
  %s1544 = scalar_lea.vmem %s0, 300
  %v1545 = vld [vmem:[%s1544] sm:$0x2]
  %vm1546 = vcmask 1041409
  %v1547 = vsel %vm1546, %v1545, %v1543
  %s1548 = scalar_lea.vmem %s0, 11
  %v1549 = vld [vmem:[%s1548] sm:$0x4]
  %vm1550 = vcmask 1042434
  %v1551 = vsel %vm1550, %v1549, %v1547
  %s1552 = scalar_lea.vmem %s0, 42
  %v1553 = vld [vmem:[%s1552] sm:$0x8]
  %vm1554 = vcmask 1043459
  %v1555 = vsel %vm1554, %v1553, %v1551
  %s1556 = scalar_lea.vmem %s0, 73
  %v1557 = vld [vmem:[%s1556] sm:$0x10]
  %vm1558 = vcmask 1044484
  %v1559 = vsel %vm1558, %v1557, %v1555
  %s1560 = scalar_lea.vmem %s0, 104
  %v1561 = vld [vmem:[%s1560] sm:$0x20]
  %vm1562 = vcmask 1045509
  %v1563 = vsel %vm1562, %v1561, %v1559
  %s1564 = scalar_lea.vmem %s0, 135
  %v1565 = vld [vmem:[%s1564] sm:$0x40]
  %vm1566 = vcmask 1046534
  %v1567 = vsel %vm1566, %v1565, %v1563
  %s1568 = scalar_lea.vmem %s0, 166
  %v1569 = vld [vmem:[%s1568] sm:$0x80]
  %vm1570 = vcmask 1047559
  %v1571 = vsel %vm1570, %v1569, %v1567
  %1572 = vrot.lane.b32.xlu0 %v1571, 2
  %v1573 = vpop.permute.xlu0 %1572
  %vm1574 = vcmask 97296
  %s1575 = scalar_lea.vmem %s1, 32
  %1576 = vst.msk [vmem:[%s1575] sm:$0x3] %vm1574, %v1573
  %s1577 = scalar_lea.vmem %s1, 6
  %1578 = vst.msk [vmem:[%s1577] sm:$0xfc] %vm1574, %v1573
  %s1579 = scalar_lea.vmem %s0, 205
  %v1580 = vld [vmem:[%s1579] sm:$0x1]
  %s1581 = scalar_lea.vmem %s0, 236
  %v1582 = vld [vmem:[%s1581] sm:$0x2]
  %vm1583 = vcmask 1041409
  %v1584 = vsel %vm1583, %v1582, %v1580
  %1585 = vrot.lane.b32.xlu0 %v1584, 2
  %v1586 = vpop.permute.xlu0 %1585
  %vm1587 = vcmask 97296
  %s1588 = scalar_lea.vmem %s1, 14
  %1589 = vst.msk [vmem:[%s1588] sm:$0x3] %vm1587, %v1586

// kernel: sample_conv_net_forward.1
$region0: #{sample_conv_net_forward.1}
  #allocation0 [shape = 'u32[]', space=smem, size = 0x4, offset = 0x4, fixed_abs, tag = 'smem constant byte address 0x4 - core index']
  #allocation1 [shape = 'u32[144,128]{1,0:T(1,128)}', space=vmem, size = 0x12000, scoped, tag = 'internal scratch']
  %s0 = inlined_call_operand.vmem [shape: f32[1,64,200], index: 0, kind: input, shape index: {}]
  %s1 = inlined_call_operand.vmem [shape: f32[16,144], index: 1, kind: input, shape index: {}]
  %s2 = inlined_call_operand.vmem [shape: f32[32,712], index: 2, kind: input, shape index: {}]
  %s3 = inlined_call_operand.vmem [shape: f32[64,50], index: 3, kind: input, shape index: {}]
  %s4 = inlined_call_operand.vmem [shape: f32[200,2], index: 4, kind: input, shape index: {}]
  %s5 = inlined_call_operand.vmem [shape: f32[2,200], index: 5, kind: input, shape index: {}]
  %s6 = inlined_call_operand.vmem [shape: f32[50,6], index: 6, kind: input, shape index: {}]
  %s7 = inlined_call_operand.vmem [shape: f32[2,50], index: 7, kind: input, shape index: {}]
  %s8 = inlined_call_operand.vmem [shape: f32[50,50], index: 8, kind: input, shape index: {}]
  %s9 = inlined_call_operand.vmem [shape: f32[3,50], index: 9, kind: input, shape index: {}]
  %s10 = inlined_call_operand.vmem [shape: f32[17,320], index: 10, kind: input, shape index: {}]
  %s11 = inlined_call_operand.vmem [shape: f32[320,128], index: 11, kind: input, shape index: {}]
  %s12 = inlined_call_operand.vmem [shape: f32[1,128], index: 12, kind: input, shape index: {}]
  %s13 = inlined_call_operand.hbm [shape: f32[1,2,128], index: 13, kind: output, shape index: {}]
  %s14 = sld [smem:[#allocation0]]
  $region62: #{sample_conv_net_forward.1} parent=0
    _
  %s16 = ssub.s32 1, %s14
  %s17 = scalar_select 0, %s16, %s14
  $region1: #{sample_conv_net_forward.1} parent=0
    #allocation2 [shape = 'u8[1024]{0}', space=vmem, size = 0x400, scoped, tag = 'output window, operand 0, single buffered']
    #allocation3 [shape = 's32[1]{0}', space=sflag, size = 0x4, scoped, tag = 'scoped memory for sample_conv_net_forward.1']
    %18 = vsyncpa [#allocation3], 0
    // Predicated region
    $region2: #{sample_conv_net_forward.1} parent=1 // pred_check
      _
    $region3: #{sample_conv_net_forward.1} parent=1 // pred_check_branch
      %20 = sbr.rel (0) target = $region5
    $region4: #{sample_conv_net_forward.1} parent=1 // pred_region
      _
    $region5: #{sample_conv_net_forward.1} parent=1 // pred_fallthru
      _
    // Predicated region
    $region6: #{sample_conv_net_forward.1} parent=1 // pred_check
      _
    $region7: #{sample_conv_net_forward.1} parent=1 // pred_check_branch
      %22 = sbr.rel (0) target = $region9
    $region8: #{sample_conv_net_forward.1} parent=1 // pred_region
      _
    $region9: #{sample_conv_net_forward.1} parent=1 // pred_fallthru
      _
    // Predicated region
    $region10: #{sample_conv_net_forward.1} parent=1 // pred_check
      _
    $region11: #{sample_conv_net_forward.1} parent=1 // pred_check_branch
      %24 = sbr.rel (0) target = $region13
    $region12: #{sample_conv_net_forward.1} parent=1 // pred_region
      _
    $region13: #{sample_conv_net_forward.1} parent=1 // pred_fallthru
      _
    // Predicated region
    $region14: #{sample_conv_net_forward.1} parent=1 // pred_check
      _
    $region15: #{sample_conv_net_forward.1} parent=1 // pred_check_branch
      %26 = sbr.rel (0) target = $region17
    $region16: #{sample_conv_net_forward.1} parent=1 // pred_region
      _
    $region17: #{sample_conv_net_forward.1} parent=1 // pred_fallthru
      _
    // Predicated region
    $region18: #{sample_conv_net_forward.1} parent=1 // pred_check
      _
    $region19: #{sample_conv_net_forward.1} parent=1 // pred_check_branch
      %28 = sbr.rel (0) target = $region21
    $region20: #{sample_conv_net_forward.1} parent=1 // pred_region
      _
    $region21: #{sample_conv_net_forward.1} parent=1 // pred_fallthru
      _
    // Predicated region
    $region22: #{sample_conv_net_forward.1} parent=1 // pred_check
      _
    $region23: #{sample_conv_net_forward.1} parent=1 // pred_check_branch
      %30 = sbr.rel (0) target = $region25
    $region24: #{sample_conv_net_forward.1} parent=1 // pred_region
      _
    $region25: #{sample_conv_net_forward.1} parent=1 // pred_fallthru
      _
    // Predicated region
    $region26: #{sample_conv_net_forward.1} parent=1 // pred_check
      _
    $region27: #{sample_conv_net_forward.1} parent=1 // pred_check_branch
      %32 = sbr.rel (0) target = $region29
    $region28: #{sample_conv_net_forward.1} parent=1 // pred_region
      _
    $region29: #{sample_conv_net_forward.1} parent=1 // pred_fallthru
      _
    // Predicated region
    $region30: #{sample_conv_net_forward.1} parent=1 // pred_check
      _
    $region31: #{sample_conv_net_forward.1} parent=1 // pred_check_branch
      %34 = sbr.rel (0) target = $region33
    $region32: #{sample_conv_net_forward.1} parent=1 // pred_region
      _
    $region33: #{sample_conv_net_forward.1} parent=1 // pred_fallthru
      _
    // Predicated region
    $region34: #{sample_conv_net_forward.1} parent=1 // pred_check
      _
    $region35: #{sample_conv_net_forward.1} parent=1 // pred_check_branch
      %36 = sbr.rel (0) target = $region37
    $region36: #{sample_conv_net_forward.1} parent=1 // pred_region
      _
    $region37: #{sample_conv_net_forward.1} parent=1 // pred_fallthru
      _
    // Predicated region
    $region38: #{sample_conv_net_forward.1} parent=1 // pred_check
      _
    $region39: #{sample_conv_net_forward.1} parent=1 // pred_check_branch
      %38 = sbr.rel (0) target = $region41
    $region40: #{sample_conv_net_forward.1} parent=1 // pred_region
      _
    $region41: #{sample_conv_net_forward.1} parent=1 // pred_fallthru
      _
    // Predicated region
    $region42: #{sample_conv_net_forward.1} parent=1 // pred_check
      _
    $region43: #{sample_conv_net_forward.1} parent=1 // pred_check_branch
      %40 = sbr.rel (0) target = $region45
    $region44: #{sample_conv_net_forward.1} parent=1 // pred_region
      _
    $region45: #{sample_conv_net_forward.1} parent=1 // pred_fallthru
      _
    // Predicated region
    $region46: #{sample_conv_net_forward.1} parent=1 // pred_check
      _
    $region47: #{sample_conv_net_forward.1} parent=1 // pred_check_branch
      %42 = sbr.rel (0) target = $region49
    $region48: #{sample_conv_net_forward.1} parent=1 // pred_region
      _
    $region49: #{sample_conv_net_forward.1} parent=1 // pred_fallthru
      _
    // Predicated region
    $region50: #{sample_conv_net_forward.1} parent=1 // pred_check
      _
    $region51: #{sample_conv_net_forward.1} parent=1 // pred_check_branch
      %44 = sbr.rel (0) target = $region53
    $region52: #{sample_conv_net_forward.1} parent=1 // pred_region
      _
    $region53: #{sample_conv_net_forward.1} parent=1 // pred_fallthru
      _
    %v45 = vld [vmem:[%s1] sm:$0xff]
    %v46 = vld [vmem:[%s1 + $0x8] sm:$0xff]
    %v47 = vld [vmem:[%s1 + $0x10] sm:$0xff]
    %v48 = vld [vmem:[%s1 + $0x18] sm:$0xff]
    %v49 = vld [vmem:[%s2] sm:$0xff]
    %v50 = vld [vmem:[%s2 + $0x8] sm:$0xff]
    %v51 = vld [vmem:[%s2 + $0x10] sm:$0xff]
    %v52 = vld [vmem:[%s2 + $0x18] sm:$0xff]
    %v53 = vld [vmem:[%s2 + $0x20] sm:$0xff]
    %v54 = vld [vmem:[%s2 + $0x28] sm:$0xff]
    %v55 = vld [vmem:[%s2 + $0x30] sm:$0xff]
    %v56 = vld [vmem:[%s2 + $0x38] sm:$0xff]
    %v57 = vld [vmem:[%s2 + $0x40] sm:$0xff]
    %v58 = vld [vmem:[%s2 + $0x48] sm:$0xff]
    %v59 = vld [vmem:[%s2 + $0x50] sm:$0xff]
    %v60 = vld [vmem:[%s2 + $0x58] sm:$0xff]
    %v61 = vld [vmem:[%s2 + $0x60] sm:$0xff]
    %v62 = vld [vmem:[%s2 + $0x68] sm:$0xff]
    %v63 = vld [vmem:[%s2 + $0x70] sm:$0xff]
    %v64 = vld [vmem:[%s2 + $0x78] sm:$0xff]
    %v65 = vld [vmem:[%s2 + $0x80] sm:$0xff]
    %v66 = vld [vmem:[%s2 + $0x88] sm:$0xff]
    %v67 = vld [vmem:[%s2 + $0x90] sm:$0xff]
    %v68 = vld [vmem:[%s2 + $0x98] sm:$0xff]
    %v69 = vld [vmem:[%s2 + $0xa0] sm:$0xff]
    %v70 = vld [vmem:[%s2 + $0xa8] sm:$0xff]
    %v71 = vld [vmem:[%s2 + $0xb0] sm:$0xff]
    %v72 = vld [vmem:[%s2 + $0xb8] sm:$0xff]
    %v73 = vld [vmem:[%s3] sm:$0xff]
    %v74 = vld [vmem:[%s3 + $0x8] sm:$0xff]
    %v75 = vld [vmem:[%s3 + $0x10] sm:$0xff]
    %v76 = vld [vmem:[%s3 + $0x18] sm:$0xff]
    %v77 = vld [vmem:[%s3 + $0x20] sm:$0xff]
    %v78 = vld [vmem:[%s3 + $0x28] sm:$0xff]
    %v79 = vld [vmem:[%s3 + $0x30] sm:$0xff]
    %v80 = vld [vmem:[%s3 + $0x38] sm:$0xff]
    %v81 = vld [vmem:[%s4] sm:$0xff]
    %v82 = vld [vmem:[%s4 + $0x8] sm:$0xff]
    %v83 = vld [vmem:[%s4 + $0x10] sm:$0xff]
    %v84 = vld [vmem:[%s4 + $0x18] sm:$0xff]
    %v85 = vld [vmem:[%s4 + $0x20] sm:$0xff]
    %v86 = vld [vmem:[%s4 + $0x28] sm:$0xff]
    %v87 = vld [vmem:[%s4 + $0x30] sm:$0xff]
    %v88 = vld [vmem:[%s4 + $0x38] sm:$0xff]
    %v89 = vld [vmem:[%s4 + $0x40] sm:$0xff]
    %v90 = vld [vmem:[%s4 + $0x48] sm:$0xff]
    %v91 = vld [vmem:[%s4 + $0x50] sm:$0xff]
    %v92 = vld [vmem:[%s4 + $0x58] sm:$0xff]
    %v93 = vld [vmem:[%s4 + $0x60] sm:$0xff]
    %v94 = vld [vmem:[%s4 + $0x68] sm:$0xff]
    %v95 = vld [vmem:[%s4 + $0x70] sm:$0xff]
    %v96 = vld [vmem:[%s4 + $0x78] sm:$0xff]
    %v97 = vld [vmem:[%s4 + $0x80] sm:$0xff]
    %v98 = vld [vmem:[%s4 + $0x88] sm:$0xff]
    %v99 = vld [vmem:[%s4 + $0x90] sm:$0xff]
    %v100 = vld [vmem:[%s4 + $0x98] sm:$0xff]
    %v101 = vld [vmem:[%s4 + $0xa0] sm:$0xff]
    %v102 = vld [vmem:[%s4 + $0xa8] sm:$0xff]
    %v103 = vld [vmem:[%s4 + $0xb0] sm:$0xff]
    %v104 = vld [vmem:[%s4 + $0xb8] sm:$0xff]
    %v105 = vld [vmem:[%s4 + $0xc0] sm:$0xff]
    %v106 = vld [vmem:[%s5] sm:$0xf]
    %v107 = vld [vmem:[%s6] sm:$0xff]
    %v108 = vld [vmem:[%s6 + $0x8] sm:$0xff]
    %v109 = vld [vmem:[%s6 + $0x10] sm:$0xff]
    %v110 = vld [vmem:[%s6 + $0x18] sm:$0xff]
    %v111 = vld [vmem:[%s6 + $0x20] sm:$0xff]
    %v112 = vld [vmem:[%s6 + $0x28] sm:$0xff]
    %v113 = vld [vmem:[%s6 + $0x30] sm:$0x3]
    %v114 = vld [vmem:[%s7] sm:$0x3]
    %v115 = vld [vmem:[%s8] sm:$0xff]
    %v116 = vld [vmem:[%s8 + $0x8] sm:$0xff]
    %v117 = vld [vmem:[%s8 + $0x10] sm:$0xff]
    %v118 = vld [vmem:[%s8 + $0x18] sm:$0xff]
    %v119 = vld [vmem:[%s8 + $0x20] sm:$0xff]
    %v120 = vld [vmem:[%s8 + $0x28] sm:$0xff]
    %v121 = vld [vmem:[%s8 + $0x30] sm:$0x3]
    %v122 = vld [vmem:[%s9] sm:$0x1]
    %v123 = vld [vmem:[%s9 + $0x1] sm:$0x1]
    %v124 = vld [vmem:[%s9 + $0x2] sm:$0x1]
    %v125 = vld [vmem:[%s10] sm:$0xff]
    %v126 = vld [vmem:[%s10 + $0x8] sm:$0xff]
    %v127 = vld [vmem:[%s10 + $0x10] sm:$0xff]
    %v128 = vld [vmem:[%s10 + $0x18] sm:$0xff]
    %v129 = vld [vmem:[%s10 + $0x20] sm:$0xff]
    %v130 = vld [vmem:[%s10 + $0x28] sm:$0xff]
    %v131 = vld [vmem:[%s10 + $0x30] sm:$0x1]
    %v132 = vld [vmem:[%s10 + $0x38] sm:$0x1]
    %v133 = vld [vmem:[%s10 + $0x40] sm:$0x1]
    %v134 = vld [vmem:[%s11] sm:$0xff]
    %v135 = vld [vmem:[%s11 + $0x8] sm:$0xff]
    %v136 = vld [vmem:[%s11 + $0x10] sm:$0xff]
    %v137 = vld [vmem:[%s11 + $0x18] sm:$0xff]
    %v138 = vld [vmem:[%s11 + $0x20] sm:$0xff]
    %v139 = vld [vmem:[%s11 + $0x28] sm:$0xff]
    %v140 = vld [vmem:[%s11 + $0x30] sm:$0xff]
    %v141 = vld [vmem:[%s11 + $0x38] sm:$0xff]
    %v142 = vld [vmem:[%s11 + $0x40] sm:$0xff]
    %v143 = vld [vmem:[%s11 + $0x48] sm:$0xff]
    %v144 = vld [vmem:[%s11 + $0x50] sm:$0xff]
    %v145 = vld [vmem:[%s11 + $0x58] sm:$0xff]
    %v146 = vld [vmem:[%s11 + $0x60] sm:$0xff]
    %v147 = vld [vmem:[%s11 + $0x68] sm:$0xff]
    %v148 = vld [vmem:[%s11 + $0x70] sm:$0xff]
    %v149 = vld [vmem:[%s11 + $0x78] sm:$0xff]
    %v150 = vld [vmem:[%s11 + $0x80] sm:$0xff]
    %v151 = vld [vmem:[%s11 + $0x88] sm:$0xff]
    %v152 = vld [vmem:[%s11 + $0x90] sm:$0xff]
    %v153 = vld [vmem:[%s11 + $0x98] sm:$0xff]
    %v154 = vld [vmem:[%s11 + $0xa0] sm:$0xff]
    %v155 = vld [vmem:[%s11 + $0xa8] sm:$0xff]
    %v156 = vld [vmem:[%s11 + $0xb0] sm:$0xff]
    %v157 = vld [vmem:[%s11 + $0xb8] sm:$0xff]
    %v158 = vld [vmem:[%s11 + $0xc0] sm:$0xff]
    %v159 = vld [vmem:[%s11 + $0xc8] sm:$0xff]
    %v160 = vld [vmem:[%s11 + $0xd0] sm:$0xff]
    %v161 = vld [vmem:[%s11 + $0xd8] sm:$0xff]
    %v162 = vld [vmem:[%s11 + $0xe0] sm:$0xff]
    %v163 = vld [vmem:[%s11 + $0xe8] sm:$0xff]
    %v164 = vld [vmem:[%s11 + $0xf0] sm:$0xff]
    %v165 = vld [vmem:[%s11 + $0xf8] sm:$0xff]
    %v166 = vld [vmem:[%s11 + $0x100] sm:$0xff]
    %v167 = vld [vmem:[%s11 + $0x108] sm:$0xff]
    %v168 = vld [vmem:[%s11 + $0x110] sm:$0xff]
    %v169 = vld [vmem:[%s11 + $0x118] sm:$0xff]
    %v170 = vld [vmem:[%s11 + $0x120] sm:$0xff]
    %v171 = vld [vmem:[%s11 + $0x128] sm:$0xff]
    %v172 = vld [vmem:[%s11 + $0x130] sm:$0xff]
    %v173 = vld [vmem:[%s11 + $0x138] sm:$0xff]
    %v174 = vld [vmem:[%s12] sm:$0x1]
    %v175 = vld [vmem:[%s0] sm:$0xff]
    %v176 = vld [vmem:[%s0 + $0x8] sm:$0xff]
    %v177 = vld [vmem:[%s0 + $0x10] sm:$0xff]
    %v178 = vld [vmem:[%s0 + $0x18] sm:$0xff]
    %v179 = vld [vmem:[%s0 + $0x20] sm:$0xff]
    %v180 = vld [vmem:[%s0 + $0x28] sm:$0xff]
    %v181 = vld [vmem:[%s0 + $0x30] sm:$0xff]
    %v182 = vld [vmem:[%s0 + $0x38] sm:$0xff]
    %v183 = vld [vmem:[%s0 + $0x40] sm:$0xff]
    %v184 = vld [vmem:[%s0 + $0x48] sm:$0xff]
    %v185 = vld [vmem:[%s0 + $0x50] sm:$0xff]
    %v186 = vld [vmem:[%s0 + $0x58] sm:$0xff]
    %v187 = vld [vmem:[%s0 + $0x60] sm:$0xff]
    %v188 = vld [vmem:[%s0 + $0x68] sm:$0xff]
    %v189 = vld [vmem:[%s0 + $0x70] sm:$0xff]
    %v190 = vld [vmem:[%s0 + $0x78] sm:$0xff]
    %192 = vset.pattern.permute.xlu0 64
    %193 = vperm.xlu0 %192, %v54
    %v194 = vpop.permute.xlu0 %193
    %197 = vset.pattern.permute.xlu0 64
    %198 = vperm.xlu0 %197, %v60
    %v199 = vpop.permute.xlu0 %198
    %vm201 = vcmask 523264
    %v203 = vsel %vm201, %v45, 0
    %v206 = vsel %vm201, %v47, 0
    %208 = vmatprep.subr.mxu0 0.0
    %209 = vmatpush1.msra.mxu0 0.0
    %210 = vmatprep.subr.mxu0 0.0
    %211 = vmatpush1.msra.mxu0 0.0
    %212 = vmatprep.subr.mxu0 0.0
    %213 = vmatpush1.msra.mxu0 0.0
    %214 = vmatprep.subr.mxu0 0.0
    %215 = vmatpush1.msra.mxu0 0.0
    %216 = vmatprep.subr.mxu0 0.0
    %217 = vmatpush1.msra.mxu0 0.0
    %218 = vmatprep.subr.mxu0 0.0
    %219 = vmatpush1.msra.mxu0 0.0
    %220 = vmatprep.subr.mxu0 0.0
    %221 = vmatpush1.msra.mxu0 0.0
    %222 = vmatprep.subr.mxu0 0.0
    %223 = vmatpush1.msra.mxu0 0.0
    %224 = vmatprep.subr.mxu0 %v190
    %225 = vmatpush1.msra.mxu0 %v189
    %226 = vmatprep.subr.mxu0 %v188
    %227 = vmatpush1.msra.mxu0 %v187
    %228 = vmatprep.subr.mxu0 %v186
    %229 = vmatpush1.msra.mxu0 %v185
    %230 = vmatprep.subr.mxu0 %v184
    %231 = vmatpush1.msra.mxu0 %v183
    %232 = vmatprep.subr.mxu0 %v182
    %233 = vmatpush1.msra.mxu0 %v181
    %234 = vmatprep.subr.mxu0 %v180
    %235 = vmatpush1.msra.mxu0 %v179
    %236 = vmatprep.subr.mxu0 %v178
    %237 = vmatpush1.msra.mxu0 %v177
    %238 = vmatprep.subr.mxu0 %v176
    %239 = vmatpush1.msra.mxu0 %v175
    %240 = vmatprep.subr.mxu0 0.0
    %241 = vmatpush2.msra.mxu0 0.0
    %242 = vmatprep.subr.mxu0 0.0
    %243 = vmatpush2.msra.mxu0 0.0
    %244 = vmatprep.subr.mxu0 0.0
    %245 = vmatpush2.msra.mxu0 0.0
    %246 = vmatprep.subr.mxu0 0.0
    %247 = vmatpush2.msra.mxu0 0.0
    %248 = vmatprep.subr.mxu0 0.0
    %249 = vmatpush2.msra.mxu0 0.0
    %250 = vmatprep.subr.mxu0 0.0
    %251 = vmatpush2.msra.mxu0 0.0
    %252 = vmatprep.subr.mxu0 0.0
    %253 = vmatpush2.msra.mxu0 0.0
    %254 = vmatprep.subr.mxu0 0.0
    %255 = vmatpush2.msra.mxu0 0.0
    %256 = vmatprep.subr.mxu0 0.0
    %257 = vmatpush2.msra.mxu0 0.0
    %258 = vmatprep.subr.mxu0 0.0
    %259 = vmatpush2.msra.mxu0 0.0
    %260 = vmatprep.subr.mxu0 0.0
    %261 = vmatpush2.msra.mxu0 0.0
    %262 = vmatprep.subr.mxu0 0.0
    %263 = vmatpush2.msra.mxu0 0.0
    %264 = vmatprep.subr.mxu0 0.0
    %265 = vmatpush2.msra.mxu0 0.0
    %266 = vmatprep.subr.mxu0 0.0
    %267 = vmatpush2.msra.mxu0 0.0
    %268 = vmatprep.subr.mxu0 0.0
    %269 = vmatpush2.msra.mxu0 0.0
    %270 = vmatprep.subr.mxu0 0.0
    %271 = vmatpush2.msra.mxu0 0.0
    %272 = vmatprep.mubr.f32.mxu0 0.0
    %273 = vmatmul.mubr.f32.gmra.mxu0 %v203
    %v274 = vpop.f32.mrf.mxu0
    %v275 = vadd.f32 %v194, %v274
    %v276 = vpop.f32.mrf.mxu0
    %v277 = vadd.f32 %v194, %v276
    %278 = vmatprep.mubr.f32.mxu0 0.0
    %279 = vmatmul.mubr.f32.gmra.mxu0 %v206
    %v280 = vpop.f32.mrf.mxu0
    %v281 = vadd.f32 %v199, %v280
    %v282 = vpop.f32.mrf.mxu0
    %v283 = vadd.f32 %v199, %v282
    %284 = vdwg.mxu0
    %vm285 = vcmask 588800
    %v287 = vsel %vm285, %v277, 0
    %v290 = vsel %vm285, %v283, 0
    %292 = vmatprep.subr.mxu0 0.0
    %293 = vmatpush1.msra.mxu0 %v96
    %294 = vmatprep.subr.mxu0 0.0
    %295 = vmatpush1.msra.mxu0 %v95
    %296 = vmatprep.subr.mxu0 0.0
    %297 = vmatpush1.msra.mxu0 %v94
    %298 = vmatprep.subr.mxu0 0.0
    %299 = vmatpush1.msra.mxu0 %v93
    %300 = vmatprep.subr.mxu0 0.0
    %301 = vmatpush1.msra.mxu0 %v92
    %302 = vmatprep.subr.mxu0 0.0
    %303 = vmatpush1.msra.mxu0 %v91
    %304 = vmatprep.subr.mxu0 0.0
    %305 = vmatpush1.msra.mxu0 %v90
    %306 = vmatprep.subr.mxu0 0.0
    %307 = vmatpush1.msra.mxu0 %v89
    %308 = vmatprep.subr.mxu0 0.0
    %309 = vmatpush1.msra.mxu0 %v88
    %310 = vmatprep.subr.mxu0 0.0
    %311 = vmatpush1.msra.mxu0 %v87
    %312 = vmatprep.subr.mxu0 0.0
    %313 = vmatpush1.msra.mxu0 %v86
    %314 = vmatprep.subr.mxu0 0.0
    %315 = vmatpush1.msra.mxu0 %v85
    %316 = vmatprep.subr.mxu0 0.0
    %317 = vmatpush1.msra.mxu0 %v84
    %318 = vmatprep.subr.mxu0 0.0
    %319 = vmatpush1.msra.mxu0 %v83
    %320 = vmatprep.subr.mxu0 0.0
    %321 = vmatpush1.msra.mxu0 %v82
    %322 = vmatprep.subr.mxu0 0.0
    %323 = vmatpush1.msra.mxu0 %v81
    %324 = vmatprep.subr.mxu0 0.0
    %325 = vmatpush2.msra.mxu0 0.0
    %326 = vmatprep.subr.mxu0 0.0
    %327 = vmatpush2.msra.mxu0 0.0
    %328 = vmatprep.subr.mxu0 0.0
    %329 = vmatpush2.msra.mxu0 0.0
    %330 = vmatprep.subr.mxu0 0.0
    %331 = vmatpush2.msra.mxu0 0.0
    %332 = vmatprep.subr.mxu0 0.0
    %333 = vmatpush2.msra.mxu0 0.0
    %334 = vmatprep.subr.mxu0 0.0
    %335 = vmatpush2.msra.mxu0 0.0
    %336 = vmatprep.subr.mxu0 0.0
    %337 = vmatpush2.msra.mxu0 0.0
    %338 = vmatprep.subr.mxu0 0.0
    %339 = vmatpush2.msra.mxu0 %v105
    %340 = vmatprep.subr.mxu0 0.0
    %341 = vmatpush2.msra.mxu0 %v104
    %342 = vmatprep.subr.mxu0 0.0
    %343 = vmatpush2.msra.mxu0 %v103
    %344 = vmatprep.subr.mxu0 0.0
    %345 = vmatpush2.msra.mxu0 %v102
    %346 = vmatprep.subr.mxu0 0.0
    %347 = vmatpush2.msra.mxu0 %v101
    %348 = vmatprep.subr.mxu0 0.0
    %349 = vmatpush2.msra.mxu0 %v100
    %350 = vmatprep.subr.mxu0 0.0
    %351 = vmatpush2.msra.mxu0 %v99
    %352 = vmatprep.subr.mxu0 0.0
    %353 = vmatpush2.msra.mxu0 %v98
    %354 = vmatprep.subr.mxu0 0.0
    %355 = vmatpush2.msra.mxu0 %v97
    %356 = vmatprep.mubr.f32.mxu0 %v287
    %357 = vmatmul.mubr.f32.gmra.mxu0 %v275
    %v358 = vpop.f32.mrf.mxu0
    %v359 = vadd.f32 0.0, %v358
    %v360 = vpop.f32.mrf.mxu0
    %361 = vmatprep.mubr.f32.mxu0 %v290
    %362 = vmatmul.mubr.f32.gmra.mxu0 %v281
    %v363 = vpop.f32.mrf.mxu0
    %v364 = vadd.f32 0.0, %v363
    %v365 = vpop.f32.mrf.mxu0
    %366 = vdwg.mxu0
    %vm367 = vcmask 130048
    %v369 = vsel %vm367, %v46, 0
    %v372 = vsel %vm367, %v48, 0
    %374 = vmatprep.subr.mxu0 0.0
    %375 = vmatpush1.msra.mxu0 0.0
    %376 = vmatprep.subr.mxu0 0.0
    %377 = vmatpush1.msra.mxu0 0.0
    %378 = vmatprep.subr.mxu0 0.0
    %379 = vmatpush1.msra.mxu0 0.0
    %380 = vmatprep.subr.mxu0 0.0
    %381 = vmatpush1.msra.mxu0 0.0
    %382 = vmatprep.subr.mxu0 0.0
    %383 = vmatpush1.msra.mxu0 0.0
    %384 = vmatprep.subr.mxu0 0.0
    %385 = vmatpush1.msra.mxu0 0.0
    %386 = vmatprep.subr.mxu0 0.0
    %387 = vmatpush1.msra.mxu0 0.0
    %388 = vmatprep.subr.mxu0 0.0
    %389 = vmatpush1.msra.mxu0 0.0
    %390 = vmatprep.subr.mxu0 0.0
    %391 = vmatpush1.msra.mxu0 0.0
    %392 = vmatprep.subr.mxu0 0.0
    %393 = vmatpush1.msra.mxu0 0.0
    %394 = vmatprep.subr.mxu0 0.0
    %395 = vmatpush1.msra.mxu0 0.0
    %396 = vmatprep.subr.mxu0 0.0
    %397 = vmatpush1.msra.mxu0 0.0
    %398 = vmatprep.subr.mxu0 0.0
    %399 = vmatpush1.msra.mxu0 0.0
    %400 = vmatprep.subr.mxu0 0.0
    %401 = vmatpush1.msra.mxu0 0.0
    %402 = vmatprep.subr.mxu0 0.0
    %403 = vmatpush1.msra.mxu0 %v364
    %404 = vmatprep.subr.mxu0 0.0
    %405 = vmatpush1.msra.mxu0 %v359
    %406 = vmatprep.subr.mxu0 0.0
    %407 = vmatpush2.msra.mxu0 0.0
    %408 = vmatprep.subr.mxu0 0.0
    %409 = vmatpush2.msra.mxu0 0.0
    %410 = vmatprep.subr.mxu0 0.0
    %411 = vmatpush2.msra.mxu0 0.0
    %412 = vmatprep.subr.mxu0 0.0
    %413 = vmatpush2.msra.mxu0 0.0
    %414 = vmatprep.subr.mxu0 0.0
    %415 = vmatpush2.msra.mxu0 0.0
    %416 = vmatprep.subr.mxu0 0.0
    %417 = vmatpush2.msra.mxu0 0.0
    %418 = vmatprep.subr.mxu0 0.0
    %419 = vmatpush2.msra.mxu0 0.0
    %420 = vmatprep.subr.mxu0 0.0
    %421 = vmatpush2.msra.mxu0 0.0
    %422 = vmatprep.subr.mxu0 0.0
    %423 = vmatpush2.msra.mxu0 0.0
    %424 = vmatprep.subr.mxu0 0.0
    %425 = vmatpush2.msra.mxu0 0.0
    %426 = vmatprep.subr.mxu0 0.0
    %427 = vmatpush2.msra.mxu0 0.0
    %428 = vmatprep.subr.mxu0 0.0
    %429 = vmatpush2.msra.mxu0 0.0
    %430 = vmatprep.subr.mxu0 0.0
    %431 = vmatpush2.msra.mxu0 0.0
    %432 = vmatprep.subr.mxu0 0.0
    %433 = vmatpush2.msra.mxu0 0.0
    %434 = vmatprep.subr.mxu0 0.0
    %435 = vmatpush2.msra.mxu0 0.0
    %436 = vmatprep.subr.mxu0 0.0
    %437 = vmatpush2.msra.mxu0 0.0
    %438 = vmatprep.mubr.f32.mxu0 0.0
    %439 = vmatmul.mubr.f32.gmra.mxu0 %v369
    %v440 = vpop.f32.mrf.mxu0
    %v441 = vadd.f32 0.0, %v440
    %v442 = vpop.f32.mrf.mxu0
    %443 = vmatprep.mubr.f32.mxu0 0.0
    %444 = vmatmul.mubr.f32.gmra.mxu0 %v372
    %v445 = vpop.f32.mrf.mxu0
    %v446 = vadd.f32 0.0, %v445
    %v447 = vpop.f32.mrf.mxu0
    %448 = vdwg.mxu0
    %v449 = vmul.f32 %v441, 0.0025
    %v450 = vmul.f32 %v446, 0.0025
    %v453 = vunpack.c.l.s4 1983009808
    %v454 = vunpack.c.0.s8 %v453
    %v455 = vlaneseq
    %v456 = vshrl.u32 %v455, 7
    %v457 = vsub.s32 %v454, %v456
    %v458 = vrot.slane %v106, %v457
    %v459 = vcombine.high %v458, %v458
    %vm460 = vcmask 15360
    %v462 = vsel %vm460, %v449, 0
    %v465 = vsel %vm460, %v450, 0
    %vm467 = vcmask 1041408
    %v468 = vsel %vm467, %v458, 0
    %v470 = vsel %vm467, %v459, 0
    %472 = vmatprep.subr.mxu0 0.0
    %473 = vmatpush1.msra.mxu0 0.0
    %474 = vmatprep.subr.mxu0 0.0
    %475 = vmatpush1.msra.mxu0 0.0
    %476 = vmatprep.subr.mxu0 0.0
    %477 = vmatpush1.msra.mxu0 0.0
    %478 = vmatprep.subr.mxu0 0.0
    %479 = vmatpush1.msra.mxu0 0.0
    %480 = vmatprep.subr.mxu0 0.0
    %481 = vmatpush1.msra.mxu0 0.0
    %482 = vmatprep.subr.mxu0 0.0
    %483 = vmatpush1.msra.mxu0 0.0
    %484 = vmatprep.subr.mxu0 0.0
    %485 = vmatpush1.msra.mxu0 0.0
    %486 = vmatprep.subr.mxu0 0.0
    %487 = vmatpush1.msra.mxu0 0.0
    %488 = vmatprep.subr.mxu0 0.0
    %489 = vmatpush1.msra.mxu0 0.0
    %490 = vmatprep.subr.mxu0 0.0
    %491 = vmatpush1.msra.mxu0 0.0
    %492 = vmatprep.subr.mxu0 0.0
    %493 = vmatpush1.msra.mxu0 0.0
    %494 = vmatprep.subr.mxu0 0.0
    %495 = vmatpush1.msra.mxu0 0.0
    %496 = vmatprep.subr.mxu0 0.0
    %497 = vmatpush1.msra.mxu0 0.0
    %498 = vmatprep.subr.mxu0 0.0
    %499 = vmatpush1.msra.mxu0 0.0
    %500 = vmatprep.subr.mxu0 0.0
    %501 = vmatpush1.msra.mxu0 0.0
    %502 = vmatprep.subr.mxu0 %v470
    %503 = vmatpush1.msra.mxu0 %v468
    %504 = vmatprep.subr.mxu0 0.0
    %505 = vmatpush2.msra.mxu0 0.0
    %506 = vmatprep.subr.mxu0 0.0
    %507 = vmatpush2.msra.mxu0 0.0
    %508 = vmatprep.subr.mxu0 0.0
    %509 = vmatpush2.msra.mxu0 0.0
    %510 = vmatprep.subr.mxu0 0.0
    %511 = vmatpush2.msra.mxu0 0.0
    %512 = vmatprep.subr.mxu0 0.0
    %513 = vmatpush2.msra.mxu0 0.0
    %514 = vmatprep.subr.mxu0 0.0
    %515 = vmatpush2.msra.mxu0 0.0
    %516 = vmatprep.subr.mxu0 0.0
    %517 = vmatpush2.msra.mxu0 0.0
    %518 = vmatprep.subr.mxu0 0.0
    %519 = vmatpush2.msra.mxu0 0.0
    %520 = vmatprep.subr.mxu0 0.0
    %521 = vmatpush2.msra.mxu0 0.0
    %522 = vmatprep.subr.mxu0 0.0
    %523 = vmatpush2.msra.mxu0 0.0
    %524 = vmatprep.subr.mxu0 0.0
    %525 = vmatpush2.msra.mxu0 0.0
    %526 = vmatprep.subr.mxu0 0.0
    %527 = vmatpush2.msra.mxu0 0.0
    %528 = vmatprep.subr.mxu0 0.0
    %529 = vmatpush2.msra.mxu0 0.0
    %530 = vmatprep.subr.mxu0 0.0
    %531 = vmatpush2.msra.mxu0 0.0
    %532 = vmatprep.subr.mxu0 0.0
    %533 = vmatpush2.msra.mxu0 0.0
    %534 = vmatprep.subr.mxu0 0.0
    %535 = vmatpush2.msra.mxu0 0.0
    %536 = vmatprep.mubr.f32.mxu0 0.0
    %537 = vmatmul.mubr.f32.gmra.mxu0 %v462
    %v538 = vpop.f32.mrf.mxu0
    %v539 = vadd.f32 0.0, %v538
    %v540 = vpop.f32.mrf.mxu0
    %v541 = vadd.f32 0.0, %v540
    %542 = vmatprep.mubr.f32.mxu0 0.0
    %543 = vmatmul.mubr.f32.gmra.mxu0 %v465
    %v544 = vpop.f32.mrf.mxu0
    %v545 = vadd.f32 0.0, %v544
    %v546 = vpop.f32.mrf.mxu0
    %v547 = vadd.f32 0.0, %v546
    %548 = vdwg.mxu0
    %v549 = vsub.f32 %v275, %v539
    %v550 = vsub.f32 %v277, %v541
    %v551 = vsub.f32 %v281, %v545
    %v552 = vsub.f32 %v283, %v547
    %v553 = vmul.f32 %v549, %v549
    %v554 = vmul.f32 %v550, %v550
    %v555 = vmul.f32 %v551, %v551
    %v556 = vmul.f32 %v552, %v552
    %v558 = vsel %vm285, %v554, 0
    %v561 = vsel %vm285, %v556, 0
    %563 = vmatprep.subr.mxu0 0.0
    %564 = vmatpush1.msra.mxu0 %v96
    %565 = vmatprep.subr.mxu0 0.0
    %566 = vmatpush1.msra.mxu0 %v95
    %567 = vmatprep.subr.mxu0 0.0
    %568 = vmatpush1.msra.mxu0 %v94
    %569 = vmatprep.subr.mxu0 0.0
    %570 = vmatpush1.msra.mxu0 %v93
    %571 = vmatprep.subr.mxu0 0.0
    %572 = vmatpush1.msra.mxu0 %v92
    %573 = vmatprep.subr.mxu0 0.0
    %574 = vmatpush1.msra.mxu0 %v91
    %575 = vmatprep.subr.mxu0 0.0
    %576 = vmatpush1.msra.mxu0 %v90
    %577 = vmatprep.subr.mxu0 0.0
    %578 = vmatpush1.msra.mxu0 %v89
    %579 = vmatprep.subr.mxu0 0.0
    %580 = vmatpush1.msra.mxu0 %v88
    %581 = vmatprep.subr.mxu0 0.0
    %582 = vmatpush1.msra.mxu0 %v87
    %583 = vmatprep.subr.mxu0 0.0
    %584 = vmatpush1.msra.mxu0 %v86
    %585 = vmatprep.subr.mxu0 0.0
    %586 = vmatpush1.msra.mxu0 %v85
    %587 = vmatprep.subr.mxu0 0.0
    %588 = vmatpush1.msra.mxu0 %v84
    %589 = vmatprep.subr.mxu0 0.0
    %590 = vmatpush1.msra.mxu0 %v83
    %591 = vmatprep.subr.mxu0 0.0
    %592 = vmatpush1.msra.mxu0 %v82
    %593 = vmatprep.subr.mxu0 0.0
    %594 = vmatpush1.msra.mxu0 %v81
    %595 = vmatprep.subr.mxu0 0.0
    %596 = vmatpush2.msra.mxu0 0.0
    %597 = vmatprep.subr.mxu0 0.0
    %598 = vmatpush2.msra.mxu0 0.0
    %599 = vmatprep.subr.mxu0 0.0
    %600 = vmatpush2.msra.mxu0 0.0
    %601 = vmatprep.subr.mxu0 0.0
    %602 = vmatpush2.msra.mxu0 0.0
    %603 = vmatprep.subr.mxu0 0.0
    %604 = vmatpush2.msra.mxu0 0.0
    %605 = vmatprep.subr.mxu0 0.0
    %606 = vmatpush2.msra.mxu0 0.0
    %607 = vmatprep.subr.mxu0 0.0
    %608 = vmatpush2.msra.mxu0 0.0
    %609 = vmatprep.subr.mxu0 0.0
    %610 = vmatpush2.msra.mxu0 %v105
    %611 = vmatprep.subr.mxu0 0.0
    %612 = vmatpush2.msra.mxu0 %v104
    %613 = vmatprep.subr.mxu0 0.0
    %614 = vmatpush2.msra.mxu0 %v103
    %615 = vmatprep.subr.mxu0 0.0
    %616 = vmatpush2.msra.mxu0 %v102
    %617 = vmatprep.subr.mxu0 0.0
    %618 = vmatpush2.msra.mxu0 %v101
    %619 = vmatprep.subr.mxu0 0.0
    %620 = vmatpush2.msra.mxu0 %v100
    %621 = vmatprep.subr.mxu0 0.0
    %622 = vmatpush2.msra.mxu0 %v99
    %623 = vmatprep.subr.mxu0 0.0
    %624 = vmatpush2.msra.mxu0 %v98
    %625 = vmatprep.subr.mxu0 0.0
    %626 = vmatpush2.msra.mxu0 %v97
    %627 = vmatprep.mubr.f32.mxu0 %v558
    %628 = vmatmul.mubr.f32.gmra.mxu0 %v553
    %v629 = vpop.f32.mrf.mxu0
    %v630 = vadd.f32 0.0, %v629
    %v631 = vpop.f32.mrf.mxu0
    %632 = vmatprep.mubr.f32.mxu0 %v561
    %633 = vmatmul.mubr.f32.gmra.mxu0 %v555
    %v634 = vpop.f32.mrf.mxu0
    %v635 = vadd.f32 0.0, %v634
    %v636 = vpop.f32.mrf.mxu0
    %637 = vdwg.mxu0
    %638 = vmatprep.subr.mxu0 0.0
    %639 = vmatpush1.msra.mxu0 0.0
    %640 = vmatprep.subr.mxu0 0.0
    %641 = vmatpush1.msra.mxu0 0.0
    %642 = vmatprep.subr.mxu0 0.0
    %643 = vmatpush1.msra.mxu0 0.0
    %644 = vmatprep.subr.mxu0 0.0
    %645 = vmatpush1.msra.mxu0 0.0
    %646 = vmatprep.subr.mxu0 0.0
    %647 = vmatpush1.msra.mxu0 0.0
    %648 = vmatprep.subr.mxu0 0.0
    %649 = vmatpush1.msra.mxu0 0.0
    %650 = vmatprep.subr.mxu0 0.0
    %651 = vmatpush1.msra.mxu0 0.0
    %652 = vmatprep.subr.mxu0 0.0
    %653 = vmatpush1.msra.mxu0 0.0
    %654 = vmatprep.subr.mxu0 0.0
    %655 = vmatpush1.msra.mxu0 0.0
    %656 = vmatprep.subr.mxu0 0.0
    %657 = vmatpush1.msra.mxu0 0.0
    %658 = vmatprep.subr.mxu0 0.0
    %659 = vmatpush1.msra.mxu0 0.0
    %660 = vmatprep.subr.mxu0 0.0
    %661 = vmatpush1.msra.mxu0 0.0
    %662 = vmatprep.subr.mxu0 0.0
    %663 = vmatpush1.msra.mxu0 0.0
    %664 = vmatprep.subr.mxu0 0.0
    %665 = vmatpush1.msra.mxu0 0.0
    %666 = vmatprep.subr.mxu0 0.0
    %667 = vmatpush1.msra.mxu0 %v635
    %668 = vmatprep.subr.mxu0 0.0
    %669 = vmatpush1.msra.mxu0 %v630
    %670 = vmatprep.subr.mxu0 0.0
    %671 = vmatpush2.msra.mxu0 0.0
    %672 = vmatprep.subr.mxu0 0.0
    %673 = vmatpush2.msra.mxu0 0.0
    %674 = vmatprep.subr.mxu0 0.0
    %675 = vmatpush2.msra.mxu0 0.0
    %676 = vmatprep.subr.mxu0 0.0
    %677 = vmatpush2.msra.mxu0 0.0
    %678 = vmatprep.subr.mxu0 0.0
    %679 = vmatpush2.msra.mxu0 0.0
    %680 = vmatprep.subr.mxu0 0.0
    %681 = vmatpush2.msra.mxu0 0.0
    %682 = vmatprep.subr.mxu0 0.0
    %683 = vmatpush2.msra.mxu0 0.0
    %684 = vmatprep.subr.mxu0 0.0
    %685 = vmatpush2.msra.mxu0 0.0
    %686 = vmatprep.subr.mxu0 0.0
    %687 = vmatpush2.msra.mxu0 0.0
    %688 = vmatprep.subr.mxu0 0.0
    %689 = vmatpush2.msra.mxu0 0.0
    %690 = vmatprep.subr.mxu0 0.0
    %691 = vmatpush2.msra.mxu0 0.0
    %692 = vmatprep.subr.mxu0 0.0
    %693 = vmatpush2.msra.mxu0 0.0
    %694 = vmatprep.subr.mxu0 0.0
    %695 = vmatpush2.msra.mxu0 0.0
    %696 = vmatprep.subr.mxu0 0.0
    %697 = vmatpush2.msra.mxu0 0.0
    %698 = vmatprep.subr.mxu0 0.0
    %699 = vmatpush2.msra.mxu0 0.0
    %700 = vmatprep.subr.mxu0 0.0
    %701 = vmatpush2.msra.mxu0 0.0
    %702 = vmatprep.mubr.f32.mxu0 0.0
    %703 = vmatmul.mubr.f32.gmra.mxu0 %v369
    %v704 = vpop.f32.mrf.mxu0
    %v705 = vadd.f32 0.0, %v704
    %v706 = vpop.f32.mrf.mxu0
    %707 = vmatprep.mubr.f32.mxu0 0.0
    %708 = vmatmul.mubr.f32.gmra.mxu0 %v372
    %v709 = vpop.f32.mrf.mxu0
    %v710 = vadd.f32 0.0, %v709
    %v711 = vpop.f32.mrf.mxu0
    %712 = vdwg.mxu0
    %v713 = vmul.f32 %v705, 0.0025
    %v714 = vmul.f32 %v710, 0.0025
    %v715 = vadd.f32 %v713, 1e-05
    %v716 = vadd.f32 %v714, 1e-05
    %v717 = vrsqrt.pop %v715
    %v718 = vrsqrt.pop %v716
    %719 = vset.pattern.permute.xlu0 65
    %720 = vperm.xlu0 %719, %v54
    %v721 = vpop.permute.xlu0 %720
    %723 = vset.pattern.permute.xlu0 65
    %724 = vperm.xlu0 %723, %v60
    %v725 = vpop.permute.xlu0 %724
    %v727 = vmul.f32 %v717, %v721
    %v728 = vmul.f32 %v718, %v725
    %v730 = vsel %vm460, %v727, 0
    %v733 = vsel %vm460, %v728, 0
    %735 = vmatprep.subr.mxu0 0.0
    %736 = vmatpush1.msra.mxu0 0.0
    %737 = vmatprep.subr.mxu0 0.0
    %738 = vmatpush1.msra.mxu0 0.0
    %739 = vmatprep.subr.mxu0 0.0
    %740 = vmatpush1.msra.mxu0 0.0
    %741 = vmatprep.subr.mxu0 0.0
    %742 = vmatpush1.msra.mxu0 0.0
    %743 = vmatprep.subr.mxu0 0.0
    %744 = vmatpush1.msra.mxu0 0.0
    %745 = vmatprep.subr.mxu0 0.0
    %746 = vmatpush1.msra.mxu0 0.0
    %747 = vmatprep.subr.mxu0 0.0
    %748 = vmatpush1.msra.mxu0 0.0
    %749 = vmatprep.subr.mxu0 0.0
    %750 = vmatpush1.msra.mxu0 0.0
    %751 = vmatprep.subr.mxu0 0.0
    %752 = vmatpush1.msra.mxu0 0.0
    %753 = vmatprep.subr.mxu0 0.0
    %754 = vmatpush1.msra.mxu0 0.0
    %755 = vmatprep.subr.mxu0 0.0
    %756 = vmatpush1.msra.mxu0 0.0
    %757 = vmatprep.subr.mxu0 0.0
    %758 = vmatpush1.msra.mxu0 0.0
    %759 = vmatprep.subr.mxu0 0.0
    %760 = vmatpush1.msra.mxu0 0.0
    %761 = vmatprep.subr.mxu0 0.0
    %762 = vmatpush1.msra.mxu0 0.0
    %763 = vmatprep.subr.mxu0 0.0
    %764 = vmatpush1.msra.mxu0 0.0
    %765 = vmatprep.subr.mxu0 %v470
    %766 = vmatpush1.msra.mxu0 %v468
    %767 = vmatprep.subr.mxu0 0.0
    %768 = vmatpush2.msra.mxu0 0.0
    %769 = vmatprep.subr.mxu0 0.0
    %770 = vmatpush2.msra.mxu0 0.0
    %771 = vmatprep.subr.mxu0 0.0
    %772 = vmatpush2.msra.mxu0 0.0
    %773 = vmatprep.subr.mxu0 0.0
    %774 = vmatpush2.msra.mxu0 0.0
    %775 = vmatprep.subr.mxu0 0.0
    %776 = vmatpush2.msra.mxu0 0.0
    %777 = vmatprep.subr.mxu0 0.0
    %778 = vmatpush2.msra.mxu0 0.0
    %779 = vmatprep.subr.mxu0 0.0
    %780 = vmatpush2.msra.mxu0 0.0
    %781 = vmatprep.subr.mxu0 0.0
    %782 = vmatpush2.msra.mxu0 0.0
    %783 = vmatprep.subr.mxu0 0.0
    %784 = vmatpush2.msra.mxu0 0.0
    %785 = vmatprep.subr.mxu0 0.0
    %786 = vmatpush2.msra.mxu0 0.0
    %787 = vmatprep.subr.mxu0 0.0
    %788 = vmatpush2.msra.mxu0 0.0
    %789 = vmatprep.subr.mxu0 0.0
    %790 = vmatpush2.msra.mxu0 0.0
    %791 = vmatprep.subr.mxu0 0.0
    %792 = vmatpush2.msra.mxu0 0.0
    %793 = vmatprep.subr.mxu0 0.0
    %794 = vmatpush2.msra.mxu0 0.0
    %795 = vmatprep.subr.mxu0 0.0
    %796 = vmatpush2.msra.mxu0 0.0
    %797 = vmatprep.subr.mxu0 0.0
    %798 = vmatpush2.msra.mxu0 0.0
    %799 = vmatprep.mubr.f32.mxu0 0.0
    %800 = vmatmul.mubr.f32.gmra.mxu0 %v730
    %v801 = vpop.f32.mrf.mxu0
    %v802 = vadd.f32 0.0, %v801
    %v803 = vpop.f32.mrf.mxu0
    %v804 = vadd.f32 0.0, %v803
    %805 = vmatprep.mubr.f32.mxu0 0.0
    %806 = vmatmul.mubr.f32.gmra.mxu0 %v733
    %v807 = vpop.f32.mrf.mxu0
    %v808 = vadd.f32 0.0, %v807
    %v809 = vpop.f32.mrf.mxu0
    %v810 = vadd.f32 0.0, %v809
    %811 = vdwg.mxu0
    %v812 = vmul.f32 %v549, %v802
    %v813 = vmul.f32 %v550, %v804
    %v814 = vmul.f32 %v551, %v808
    %v815 = vmul.f32 %v552, %v810
    %816 = vset.pattern.permute.xlu0 66
    %817 = vperm.xlu0 %816, %v54
    %v818 = vpop.permute.xlu0 %817
    %820 = vset.pattern.permute.xlu0 66
    %821 = vperm.xlu0 %820, %v60
    %v822 = vpop.permute.xlu0 %821
    %v824 = vadd.f32 %v812, %v818
    %v825 = vadd.f32 %v813, %v818
    %v826 = vadd.f32 %v814, %v822
    %v827 = vadd.f32 %v815, %v822
    %v828 = vmax.f32 %v824, 0.0
    %v829 = vmax.f32 %v825, 0.0
    %v830 = vmax.f32 %v826, 0.0
    %v831 = vmax.f32 %v827, 0.0
    %834 = vrot.lane.b32.xlu0 %v828, 78
    %v835 = vpop.permute.xlu0 %834
    %836 = vrot.lane.b32.xlu0 %v830, 78
    %v837 = vpop.permute.xlu0 %836
    %v840 = vmax.f32 %v828, %v835
    %v841 = vmax.f32 %v830, %v837
    %844 = vrot.lane.b32.xlu0 %v829, 78
    %v845 = vpop.permute.xlu0 %844
    %846 = vrot.lane.b32.xlu0 %v831, 78
    %v847 = vpop.permute.xlu0 %846
    %v850 = vmax.f32 %v828, %v845
    %v851 = vmax.f32 %v829, %v845
    %v852 = vmax.f32 %v830, %v847
    %v853 = vmax.f32 %v831, %v847
    %858 = vrot.lane.b32.xlu0 %v850, 28
    %v859 = vpop.permute.xlu0 %858
    %860 = vrot.lane.b32.xlu0 %v851, 28
    %v861 = vpop.permute.xlu0 %860
    %862 = vrot.lane.b32.xlu0 %v852, 28
    %v863 = vpop.permute.xlu0 %862
    %864 = vrot.lane.b32.xlu0 %v853, 28
    %v865 = vpop.permute.xlu0 %864
    %vm866 = vcmask 228352
    %v867 = vsel %vm866, %v859, %v861
    %v868 = vsel %vm866, %v863, %v865
    %v871 = vmax.f32 %v840, %v867
    %v872 = vmax.f32 %v841, %v868
    %875 = vrot.lane.b32.xlu0 %v871, 127
    %v876 = vpop.permute.xlu0 %875
    %877 = vrot.lane.b32.xlu0 %v872, 127
    %v878 = vpop.permute.xlu0 %877
    %881 = vrot.lane.b32.xlu0 %v871, 49
    %v882 = vpop.permute.xlu0 %881
    %883 = vrot.lane.b32.xlu0 %v872, 49
    %v884 = vpop.permute.xlu0 %883
    %vm887 = vcmask 400384
    %v888 = vsel %vm887, %v876, %v882
    %v889 = vsel %vm887, %v878, %v884
    %890 = vrot.lane.b32.xlu0 %v871, 126
    %v891 = vpop.permute.xlu0 %890
    %892 = vrot.lane.b32.xlu0 %v872, 126
    %v893 = vpop.permute.xlu0 %892
    %896 = vrot.lane.b32.xlu0 %v871, 48
    %v897 = vpop.permute.xlu0 %896
    %898 = vrot.lane.b32.xlu0 %v872, 48
    %v899 = vpop.permute.xlu0 %898
    %vm902 = vcmask 392192
    %v903 = vsel %vm902, %v891, %v897
    %v904 = vsel %vm902, %v893, %v899
    %905 = vset.pattern.permute.xlu0 67
    %906 = vperm.xlu0 %905, %v54
    %v907 = vpop.permute.xlu0 %906
    %909 = vset.pattern.permute.xlu0 67
    %910 = vperm.xlu0 %909, %v60
    %v911 = vpop.permute.xlu0 %910
    %914 = vset.pattern.permute.xlu0 67
    %915 = vperm.xlu0 %914, %v66
    %v916 = vpop.permute.xlu0 %915
    %919 = vset.pattern.permute.xlu0 67
    %920 = vperm.xlu0 %919, %v72
    %v921 = vpop.permute.xlu0 %920
    %v924 = vsel %vm902, %v49, 0
    %v927 = vsel %vm902, %v55, 0
    %v930 = vsel %vm902, %v61, 0
    %v933 = vsel %vm902, %v67, 0
    %935 = vmatprep.subr.mxu0 0.0
    %936 = vmatpush1.msra.mxu0 0.0
    %937 = vmatprep.subr.mxu0 0.0
    %938 = vmatpush1.msra.mxu0 0.0
    %939 = vmatprep.subr.mxu0 0.0
    %940 = vmatpush1.msra.mxu0 0.0
    %941 = vmatprep.subr.mxu0 0.0
    %942 = vmatpush1.msra.mxu0 0.0
    %943 = vmatprep.subr.mxu0 0.0
    %944 = vmatpush1.msra.mxu0 0.0
    %945 = vmatprep.subr.mxu0 0.0
    %946 = vmatpush1.msra.mxu0 0.0
    %947 = vmatprep.subr.mxu0 0.0
    %948 = vmatpush1.msra.mxu0 0.0
    %949 = vmatprep.subr.mxu0 0.0
    %950 = vmatpush1.msra.mxu0 0.0
    %951 = vmatprep.subr.mxu0 0.0
    %952 = vmatpush1.msra.mxu0 0.0
    %953 = vmatprep.subr.mxu0 0.0
    %954 = vmatpush1.msra.mxu0 0.0
    %955 = vmatprep.subr.mxu0 0.0
    %956 = vmatpush1.msra.mxu0 %v904
    %957 = vmatprep.subr.mxu0 0.0
    %958 = vmatpush1.msra.mxu0 %v903
    %959 = vmatprep.subr.mxu0 0.0
    %960 = vmatpush1.msra.mxu0 %v889
    %961 = vmatprep.subr.mxu0 0.0
    %962 = vmatpush1.msra.mxu0 %v888
    %963 = vmatprep.subr.mxu0 0.0
    %964 = vmatpush1.msra.mxu0 %v872
    %965 = vmatprep.subr.mxu0 0.0
    %966 = vmatpush1.msra.mxu0 %v871
    %967 = vmatprep.subr.mxu0 0.0
    %968 = vmatpush2.msra.mxu0 0.0
    %969 = vmatprep.subr.mxu0 0.0
    %970 = vmatpush2.msra.mxu0 0.0
    %971 = vmatprep.subr.mxu0 0.0
    %972 = vmatpush2.msra.mxu0 0.0
    %973 = vmatprep.subr.mxu0 0.0
    %974 = vmatpush2.msra.mxu0 0.0
    %975 = vmatprep.subr.mxu0 0.0
    %976 = vmatpush2.msra.mxu0 0.0
    %977 = vmatprep.subr.mxu0 0.0
    %978 = vmatpush2.msra.mxu0 0.0
    %979 = vmatprep.subr.mxu0 0.0
    %980 = vmatpush2.msra.mxu0 0.0
    %981 = vmatprep.subr.mxu0 0.0
    %982 = vmatpush2.msra.mxu0 0.0
    %983 = vmatprep.subr.mxu0 0.0
    %984 = vmatpush2.msra.mxu0 0.0
    %985 = vmatprep.subr.mxu0 0.0
    %986 = vmatpush2.msra.mxu0 0.0
    %987 = vmatprep.subr.mxu0 0.0
    %988 = vmatpush2.msra.mxu0 0.0
    %989 = vmatprep.subr.mxu0 0.0
    %990 = vmatpush2.msra.mxu0 0.0
    %991 = vmatprep.subr.mxu0 0.0
    %992 = vmatpush2.msra.mxu0 0.0
    %993 = vmatprep.subr.mxu0 0.0
    %994 = vmatpush2.msra.mxu0 0.0
    %995 = vmatprep.subr.mxu0 0.0
    %996 = vmatpush2.msra.mxu0 0.0
    %997 = vmatprep.subr.mxu0 0.0
    %998 = vmatpush2.msra.mxu0 0.0
    %999 = vmatprep.mubr.f32.mxu0 0.0
    %1000 = vmatmul.mubr.f32.gmra.mxu0 %v924
    %v1001 = vpop.f32.mrf.mxu0
    %v1002 = vadd.f32 %v907, %v1001
    %v1003 = vpop.f32.mrf.mxu0
    %1004 = vmatprep.mubr.f32.mxu0 0.0
    %1005 = vmatmul.mubr.f32.gmra.mxu0 %v927
    %v1006 = vpop.f32.mrf.mxu0
    %v1007 = vadd.f32 %v911, %v1006
    %v1008 = vpop.f32.mrf.mxu0
    %1009 = vmatprep.mubr.f32.mxu0 0.0
    %1010 = vmatmul.mubr.f32.gmra.mxu0 %v930
    %v1011 = vpop.f32.mrf.mxu0
    %v1012 = vadd.f32 %v916, %v1011
    %v1013 = vpop.f32.mrf.mxu0
    %1014 = vmatprep.mubr.f32.mxu0 0.0
    %1015 = vmatmul.mubr.f32.gmra.mxu0 %v933
    %v1016 = vpop.f32.mrf.mxu0
    %v1017 = vadd.f32 %v921, %v1016
    %v1018 = vpop.f32.mrf.mxu0
    %1019 = vdwg.mxu0
    %vm1020 = vcmask 408576
    %v1022 = vsel %vm1020, %v1002, 0
    %v1025 = vsel %vm1020, %v1007, 0
    %v1028 = vsel %vm1020, %v1012, 0
    %v1031 = vsel %vm1020, %v1017, 0
    %v1034 = vsel %vm467, %v113, 0
    %1036 = vmatprep.subr.mxu0 0.0
    %1037 = vmatpush1.msra.mxu0 0.0
    %1038 = vmatprep.subr.mxu0 0.0
    %1039 = vmatpush1.msra.mxu0 0.0
    %1040 = vmatprep.subr.mxu0 0.0
    %1041 = vmatpush1.msra.mxu0 0.0
    %1042 = vmatprep.subr.mxu0 0.0
    %1043 = vmatpush1.msra.mxu0 0.0
    %1044 = vmatprep.subr.mxu0 0.0
    %1045 = vmatpush1.msra.mxu0 0.0
    %1046 = vmatprep.subr.mxu0 0.0
    %1047 = vmatpush1.msra.mxu0 0.0
    %1048 = vmatprep.subr.mxu0 0.0
    %1049 = vmatpush1.msra.mxu0 0.0
    %1050 = vmatprep.subr.mxu0 0.0
    %1051 = vmatpush1.msra.mxu0 0.0
    %1052 = vmatprep.subr.mxu0 0.0
    %1053 = vmatpush1.msra.mxu0 0.0
    %1054 = vmatprep.subr.mxu0 0.0
    %1055 = vmatpush1.msra.mxu0 %v1034
    %1056 = vmatprep.subr.mxu0 0.0
    %1057 = vmatpush1.msra.mxu0 %v112
    %1058 = vmatprep.subr.mxu0 0.0
    %1059 = vmatpush1.msra.mxu0 %v111
    %1060 = vmatprep.subr.mxu0 0.0
    %1061 = vmatpush1.msra.mxu0 %v110
    %1062 = vmatprep.subr.mxu0 0.0
    %1063 = vmatpush1.msra.mxu0 %v109
    %1064 = vmatprep.subr.mxu0 0.0
    %1065 = vmatpush1.msra.mxu0 %v108
    %1066 = vmatprep.subr.mxu0 0.0
    %1067 = vmatpush1.msra.mxu0 %v107
    %1068 = vmatprep.subr.mxu0 0.0
    %1069 = vmatpush2.msra.mxu0 0.0
    %1070 = vmatprep.subr.mxu0 0.0
    %1071 = vmatpush2.msra.mxu0 0.0
    %1072 = vmatprep.subr.mxu0 0.0
    %1073 = vmatpush2.msra.mxu0 0.0
    %1074 = vmatprep.subr.mxu0 0.0
    %1075 = vmatpush2.msra.mxu0 0.0
    %1076 = vmatprep.subr.mxu0 0.0
    %1077 = vmatpush2.msra.mxu0 0.0
    %1078 = vmatprep.subr.mxu0 0.0
    %1079 = vmatpush2.msra.mxu0 0.0
    %1080 = vmatprep.subr.mxu0 0.0
    %1081 = vmatpush2.msra.mxu0 0.0
    %1082 = vmatprep.subr.mxu0 0.0
    %1083 = vmatpush2.msra.mxu0 0.0
    %1084 = vmatprep.subr.mxu0 0.0
    %1085 = vmatpush2.msra.mxu0 0.0
    %1086 = vmatprep.subr.mxu0 0.0
    %1087 = vmatpush2.msra.mxu0 0.0
    %1088 = vmatprep.subr.mxu0 0.0
    %1089 = vmatpush2.msra.mxu0 0.0
    %1090 = vmatprep.subr.mxu0 0.0
    %1091 = vmatpush2.msra.mxu0 0.0
    %1092 = vmatprep.subr.mxu0 0.0
    %1093 = vmatpush2.msra.mxu0 0.0
    %1094 = vmatprep.subr.mxu0 0.0
    %1095 = vmatpush2.msra.mxu0 0.0
    %1096 = vmatprep.subr.mxu0 0.0
    %1097 = vmatpush2.msra.mxu0 0.0
    %1098 = vmatprep.subr.mxu0 0.0
    %1099 = vmatpush2.msra.mxu0 0.0
    %1100 = vmatprep.mubr.f32.mxu0 0.0
    %1101 = vmatmul.mubr.f32.gmra.mxu0 %v1022
    %v1102 = vpop.f32.mrf.mxu0
    %v1103 = vadd.f32 0.0, %v1102
    %v1104 = vpop.f32.mrf.mxu0
    %1105 = vmatprep.mubr.f32.mxu0 0.0
    %1106 = vmatmul.mubr.f32.gmra.mxu0 %v1025
    %v1107 = vpop.f32.mrf.mxu0
    %v1108 = vadd.f32 0.0, %v1107
    %v1109 = vpop.f32.mrf.mxu0
    %1110 = vmatprep.mubr.f32.mxu0 0.0
    %1111 = vmatmul.mubr.f32.gmra.mxu0 %v1028
    %v1112 = vpop.f32.mrf.mxu0
    %v1113 = vadd.f32 0.0, %v1112
    %v1114 = vpop.f32.mrf.mxu0
    %1115 = vmatprep.mubr.f32.mxu0 0.0
    %1116 = vmatmul.mubr.f32.gmra.mxu0 %v1031
    %v1117 = vpop.f32.mrf.mxu0
    %v1118 = vadd.f32 0.0, %v1117
    %v1119 = vpop.f32.mrf.mxu0
    %1120 = vdwg.mxu0
    %vm1121 = vcmask 261120
    %v1123 = vsel %vm1121, 1.0, 0
    %1125 = vmatprep.subr.mxu0 0.0
    %1126 = vmatpush1.msra.mxu0 0.0
    %1127 = vmatprep.subr.mxu0 0.0
    %1128 = vmatpush1.msra.mxu0 0.0
    %1129 = vmatprep.subr.mxu0 0.0
    %1130 = vmatpush1.msra.mxu0 0.0
    %1131 = vmatprep.subr.mxu0 0.0
    %1132 = vmatpush1.msra.mxu0 0.0
    %1133 = vmatprep.subr.mxu0 0.0
    %1134 = vmatpush1.msra.mxu0 0.0
    %1135 = vmatprep.subr.mxu0 0.0
    %1136 = vmatpush1.msra.mxu0 0.0
    %1137 = vmatprep.subr.mxu0 0.0
    %1138 = vmatpush1.msra.mxu0 0.0
    %1139 = vmatprep.subr.mxu0 0.0
    %1140 = vmatpush1.msra.mxu0 0.0
    %1141 = vmatprep.subr.mxu0 0.0
    %1142 = vmatpush1.msra.mxu0 0.0
    %1143 = vmatprep.subr.mxu0 0.0
    %1144 = vmatpush1.msra.mxu0 0.0
    %1145 = vmatprep.subr.mxu0 0.0
    %1146 = vmatpush1.msra.mxu0 0.0
    %1147 = vmatprep.subr.mxu0 0.0
    %1148 = vmatpush1.msra.mxu0 0.0
    %1149 = vmatprep.subr.mxu0 0.0
    %1150 = vmatpush1.msra.mxu0 %v1118
    %1151 = vmatprep.subr.mxu0 0.0
    %1152 = vmatpush1.msra.mxu0 %v1113
    %1153 = vmatprep.subr.mxu0 0.0
    %1154 = vmatpush1.msra.mxu0 %v1108
    %1155 = vmatprep.subr.mxu0 0.0
    %1156 = vmatpush1.msra.mxu0 %v1103
    %1157 = vmatprep.subr.mxu0 0.0
    %1158 = vmatpush2.msra.mxu0 0.0
    %1159 = vmatprep.subr.mxu0 0.0
    %1160 = vmatpush2.msra.mxu0 0.0
    %1161 = vmatprep.subr.mxu0 0.0
    %1162 = vmatpush2.msra.mxu0 0.0
    %1163 = vmatprep.subr.mxu0 0.0
    %1164 = vmatpush2.msra.mxu0 0.0
    %1165 = vmatprep.subr.mxu0 0.0
    %1166 = vmatpush2.msra.mxu0 0.0
    %1167 = vmatprep.subr.mxu0 0.0
    %1168 = vmatpush2.msra.mxu0 0.0
    %1169 = vmatprep.subr.mxu0 0.0
    %1170 = vmatpush2.msra.mxu0 0.0
    %1171 = vmatprep.subr.mxu0 0.0
    %1172 = vmatpush2.msra.mxu0 0.0
    %1173 = vmatprep.subr.mxu0 0.0
    %1174 = vmatpush2.msra.mxu0 0.0
    %1175 = vmatprep.subr.mxu0 0.0
    %1176 = vmatpush2.msra.mxu0 0.0
    %1177 = vmatprep.subr.mxu0 0.0
    %1178 = vmatpush2.msra.mxu0 0.0
    %1179 = vmatprep.subr.mxu0 0.0
    %1180 = vmatpush2.msra.mxu0 0.0
    %1181 = vmatprep.subr.mxu0 0.0
    %1182 = vmatpush2.msra.mxu0 0.0
    %1183 = vmatprep.subr.mxu0 0.0
    %1184 = vmatpush2.msra.mxu0 0.0
    %1185 = vmatprep.subr.mxu0 0.0
    %1186 = vmatpush2.msra.mxu0 0.0
    %1187 = vmatprep.subr.mxu0 0.0
    %1188 = vmatpush2.msra.mxu0 0.0
    %1189 = vmatprep.mubr.f32.mxu0 0.0
    %1190 = vmatmul.mubr.f32.gmra.mxu0 %v1123
    %v1191 = vpop.f32.mrf.mxu0
    %v1192 = vadd.f32 0.0, %v1191
    %v1193 = vpop.f32.mrf.mxu0
    %1194 = vdwg.mxu0
    %v1195 = vmul.f32 %v1192, 0.0013586957
    %v1197 = vsel %vm460, %v1195, 0
    %v1200 = vsel %vm467, %v114, 0
    %1202 = vmatprep.subr.mxu0 0.0
    %1203 = vmatpush1.msra.mxu0 0.0
    %1204 = vmatprep.subr.mxu0 0.0
    %1205 = vmatpush1.msra.mxu0 0.0
    %1206 = vmatprep.subr.mxu0 0.0
    %1207 = vmatpush1.msra.mxu0 0.0
    %1208 = vmatprep.subr.mxu0 0.0
    %1209 = vmatpush1.msra.mxu0 0.0
    %1210 = vmatprep.subr.mxu0 0.0
    %1211 = vmatpush1.msra.mxu0 0.0
    %1212 = vmatprep.subr.mxu0 0.0
    %1213 = vmatpush1.msra.mxu0 0.0
    %1214 = vmatprep.subr.mxu0 0.0
    %1215 = vmatpush1.msra.mxu0 0.0
    %1216 = vmatprep.subr.mxu0 0.0
    %1217 = vmatpush1.msra.mxu0 0.0
    %1218 = vmatprep.subr.mxu0 0.0
    %1219 = vmatpush1.msra.mxu0 0.0
    %1220 = vmatprep.subr.mxu0 0.0
    %1221 = vmatpush1.msra.mxu0 0.0
    %1222 = vmatprep.subr.mxu0 0.0
    %1223 = vmatpush1.msra.mxu0 0.0
    %1224 = vmatprep.subr.mxu0 0.0
    %1225 = vmatpush1.msra.mxu0 0.0
    %1226 = vmatprep.subr.mxu0 0.0
    %1227 = vmatpush1.msra.mxu0 0.0
    %1228 = vmatprep.subr.mxu0 0.0
    %1229 = vmatpush1.msra.mxu0 0.0
    %1230 = vmatprep.subr.mxu0 0.0
    %1231 = vmatpush1.msra.mxu0 0.0
    %1232 = vmatprep.subr.mxu0 0.0
    %1233 = vmatpush1.msra.mxu0 %v1200
    %1234 = vmatprep.subr.mxu0 0.0
    %1235 = vmatpush2.msra.mxu0 0.0
    %1236 = vmatprep.subr.mxu0 0.0
    %1237 = vmatpush2.msra.mxu0 0.0
    %1238 = vmatprep.subr.mxu0 0.0
    %1239 = vmatpush2.msra.mxu0 0.0
    %1240 = vmatprep.subr.mxu0 0.0
    %1241 = vmatpush2.msra.mxu0 0.0
    %1242 = vmatprep.subr.mxu0 0.0
    %1243 = vmatpush2.msra.mxu0 0.0
    %1244 = vmatprep.subr.mxu0 0.0
    %1245 = vmatpush2.msra.mxu0 0.0
    %1246 = vmatprep.subr.mxu0 0.0
    %1247 = vmatpush2.msra.mxu0 0.0
    %1248 = vmatprep.subr.mxu0 0.0
    %1249 = vmatpush2.msra.mxu0 0.0
    %1250 = vmatprep.subr.mxu0 0.0
    %1251 = vmatpush2.msra.mxu0 0.0
    %1252 = vmatprep.subr.mxu0 0.0
    %1253 = vmatpush2.msra.mxu0 0.0
    %1254 = vmatprep.subr.mxu0 0.0
    %1255 = vmatpush2.msra.mxu0 0.0
    %1256 = vmatprep.subr.mxu0 0.0
    %1257 = vmatpush2.msra.mxu0 0.0
    %1258 = vmatprep.subr.mxu0 0.0
    %1259 = vmatpush2.msra.mxu0 0.0
    %1260 = vmatprep.subr.mxu0 0.0
    %1261 = vmatpush2.msra.mxu0 0.0
    %1262 = vmatprep.subr.mxu0 0.0
    %1263 = vmatpush2.msra.mxu0 0.0
    %1264 = vmatprep.subr.mxu0 0.0
    %1265 = vmatpush2.msra.mxu0 0.0
    %1266 = vmatprep.mubr.f32.mxu0 0.0
    %1267 = vmatmul.mubr.f32.gmra.mxu0 %v1197
    %v1268 = vpop.f32.mrf.mxu0
    %v1269 = vadd.f32 0.0, %v1268
    %v1270 = vpop.f32.mrf.mxu0
    %1271 = vdwg.mxu0
    %v1272 = vlaneseq
    %v1273 = vshrl.u32 %v1272, 7
    %v1274 = vsub.s32 0, %v1273
    %v1275 = vrot.slane %v1269, %v1274
    %v1276 = vsub.f32 %v1002, %v1275
    %v1277 = vsub.f32 %v1007, %v1275
    %v1278 = vsub.f32 %v1012, %v1275
    %v1279 = vsub.f32 %v1017, %v1275
    %v1280 = vmul.f32 %v1276, %v1276
    %v1281 = vmul.f32 %v1277, %v1277
    %v1282 = vmul.f32 %v1278, %v1278
    %v1283 = vmul.f32 %v1279, %v1279
    %v1285 = vsel %vm1020, %v1280, 0
    %v1288 = vsel %vm1020, %v1281, 0
    %v1291 = vsel %vm1020, %v1282, 0
    %v1294 = vsel %vm1020, %v1283, 0
    %1296 = vmatprep.subr.mxu0 0.0
    %1297 = vmatpush1.msra.mxu0 0.0
    %1298 = vmatprep.subr.mxu0 0.0
    %1299 = vmatpush1.msra.mxu0 0.0
    %1300 = vmatprep.subr.mxu0 0.0
    %1301 = vmatpush1.msra.mxu0 0.0
    %1302 = vmatprep.subr.mxu0 0.0
    %1303 = vmatpush1.msra.mxu0 0.0
    %1304 = vmatprep.subr.mxu0 0.0
    %1305 = vmatpush1.msra.mxu0 0.0
    %1306 = vmatprep.subr.mxu0 0.0
    %1307 = vmatpush1.msra.mxu0 0.0
    %1308 = vmatprep.subr.mxu0 0.0
    %1309 = vmatpush1.msra.mxu0 0.0
    %1310 = vmatprep.subr.mxu0 0.0
    %1311 = vmatpush1.msra.mxu0 0.0
    %1312 = vmatprep.subr.mxu0 0.0
    %1313 = vmatpush1.msra.mxu0 0.0
    %1314 = vmatprep.subr.mxu0 0.0
    %1315 = vmatpush1.msra.mxu0 %v1034
    %1316 = vmatprep.subr.mxu0 0.0
    %1317 = vmatpush1.msra.mxu0 %v112
    %1318 = vmatprep.subr.mxu0 0.0
    %1319 = vmatpush1.msra.mxu0 %v111
    %1320 = vmatprep.subr.mxu0 0.0
    %1321 = vmatpush1.msra.mxu0 %v110
    %1322 = vmatprep.subr.mxu0 0.0
    %1323 = vmatpush1.msra.mxu0 %v109
    %1324 = vmatprep.subr.mxu0 0.0
    %1325 = vmatpush1.msra.mxu0 %v108
    %1326 = vmatprep.subr.mxu0 0.0
    %1327 = vmatpush1.msra.mxu0 %v107
    %1328 = vmatprep.subr.mxu0 0.0
    %1329 = vmatpush2.msra.mxu0 0.0
    %1330 = vmatprep.subr.mxu0 0.0
    %1331 = vmatpush2.msra.mxu0 0.0
    %1332 = vmatprep.subr.mxu0 0.0
    %1333 = vmatpush2.msra.mxu0 0.0
    %1334 = vmatprep.subr.mxu0 0.0
    %1335 = vmatpush2.msra.mxu0 0.0
    %1336 = vmatprep.subr.mxu0 0.0
    %1337 = vmatpush2.msra.mxu0 0.0
    %1338 = vmatprep.subr.mxu0 0.0
    %1339 = vmatpush2.msra.mxu0 0.0
    %1340 = vmatprep.subr.mxu0 0.0
    %1341 = vmatpush2.msra.mxu0 0.0
    %1342 = vmatprep.subr.mxu0 0.0
    %1343 = vmatpush2.msra.mxu0 0.0
    %1344 = vmatprep.subr.mxu0 0.0
    %1345 = vmatpush2.msra.mxu0 0.0
    %1346 = vmatprep.subr.mxu0 0.0
    %1347 = vmatpush2.msra.mxu0 0.0
    %1348 = vmatprep.subr.mxu0 0.0
    %1349 = vmatpush2.msra.mxu0 0.0
    %1350 = vmatprep.subr.mxu0 0.0
    %1351 = vmatpush2.msra.mxu0 0.0
    %1352 = vmatprep.subr.mxu0 0.0
    %1353 = vmatpush2.msra.mxu0 0.0
    %1354 = vmatprep.subr.mxu0 0.0
    %1355 = vmatpush2.msra.mxu0 0.0
    %1356 = vmatprep.subr.mxu0 0.0
    %1357 = vmatpush2.msra.mxu0 0.0
    %1358 = vmatprep.subr.mxu0 0.0
    %1359 = vmatpush2.msra.mxu0 0.0
    %1360 = vmatprep.mubr.f32.mxu0 0.0
    %1361 = vmatmul.mubr.f32.gmra.mxu0 %v1285
    %v1362 = vpop.f32.mrf.mxu0
    %v1363 = vadd.f32 0.0, %v1362
    %v1364 = vpop.f32.mrf.mxu0
    %1365 = vmatprep.mubr.f32.mxu0 0.0
    %1366 = vmatmul.mubr.f32.gmra.mxu0 %v1288
    %v1367 = vpop.f32.mrf.mxu0
    %v1368 = vadd.f32 0.0, %v1367
    %v1369 = vpop.f32.mrf.mxu0
    %1370 = vmatprep.mubr.f32.mxu0 0.0
    %1371 = vmatmul.mubr.f32.gmra.mxu0 %v1291
    %v1372 = vpop.f32.mrf.mxu0
    %v1373 = vadd.f32 0.0, %v1372
    %v1374 = vpop.f32.mrf.mxu0
    %1375 = vmatprep.mubr.f32.mxu0 0.0
    %1376 = vmatmul.mubr.f32.gmra.mxu0 %v1294
    %v1377 = vpop.f32.mrf.mxu0
    %v1378 = vadd.f32 0.0, %v1377
    %v1379 = vpop.f32.mrf.mxu0
    %1380 = vdwg.mxu0
    %1381 = vmatprep.subr.mxu0 0.0
    %1382 = vmatpush1.msra.mxu0 0.0
    %1383 = vmatprep.subr.mxu0 0.0
    %1384 = vmatpush1.msra.mxu0 0.0
    %1385 = vmatprep.subr.mxu0 0.0
    %1386 = vmatpush1.msra.mxu0 0.0
    %1387 = vmatprep.subr.mxu0 0.0
    %1388 = vmatpush1.msra.mxu0 0.0
    %1389 = vmatprep.subr.mxu0 0.0
    %1390 = vmatpush1.msra.mxu0 0.0
    %1391 = vmatprep.subr.mxu0 0.0
    %1392 = vmatpush1.msra.mxu0 0.0
    %1393 = vmatprep.subr.mxu0 0.0
    %1394 = vmatpush1.msra.mxu0 0.0
    %1395 = vmatprep.subr.mxu0 0.0
    %1396 = vmatpush1.msra.mxu0 0.0
    %1397 = vmatprep.subr.mxu0 0.0
    %1398 = vmatpush1.msra.mxu0 0.0
    %1399 = vmatprep.subr.mxu0 0.0
    %1400 = vmatpush1.msra.mxu0 0.0
    %1401 = vmatprep.subr.mxu0 0.0
    %1402 = vmatpush1.msra.mxu0 0.0
    %1403 = vmatprep.subr.mxu0 0.0
    %1404 = vmatpush1.msra.mxu0 0.0
    %1405 = vmatprep.subr.mxu0 0.0
    %1406 = vmatpush1.msra.mxu0 %v1378
    %1407 = vmatprep.subr.mxu0 0.0
    %1408 = vmatpush1.msra.mxu0 %v1373
    %1409 = vmatprep.subr.mxu0 0.0
    %1410 = vmatpush1.msra.mxu0 %v1368
    %1411 = vmatprep.subr.mxu0 0.0
    %1412 = vmatpush1.msra.mxu0 %v1363
    %1413 = vmatprep.subr.mxu0 0.0
    %1414 = vmatpush2.msra.mxu0 0.0
    %1415 = vmatprep.subr.mxu0 0.0
    %1416 = vmatpush2.msra.mxu0 0.0
    %1417 = vmatprep.subr.mxu0 0.0
    %1418 = vmatpush2.msra.mxu0 0.0
    %1419 = vmatprep.subr.mxu0 0.0
    %1420 = vmatpush2.msra.mxu0 0.0
    %1421 = vmatprep.subr.mxu0 0.0
    %1422 = vmatpush2.msra.mxu0 0.0
    %1423 = vmatprep.subr.mxu0 0.0
    %1424 = vmatpush2.msra.mxu0 0.0
    %1425 = vmatprep.subr.mxu0 0.0
    %1426 = vmatpush2.msra.mxu0 0.0
    %1427 = vmatprep.subr.mxu0 0.0
    %1428 = vmatpush2.msra.mxu0 0.0
    %1429 = vmatprep.subr.mxu0 0.0
    %1430 = vmatpush2.msra.mxu0 0.0
    %1431 = vmatprep.subr.mxu0 0.0
    %1432 = vmatpush2.msra.mxu0 0.0
    %1433 = vmatprep.subr.mxu0 0.0
    %1434 = vmatpush2.msra.mxu0 0.0
    %1435 = vmatprep.subr.mxu0 0.0
    %1436 = vmatpush2.msra.mxu0 0.0
    %1437 = vmatprep.subr.mxu0 0.0
    %1438 = vmatpush2.msra.mxu0 0.0
    %1439 = vmatprep.subr.mxu0 0.0
    %1440 = vmatpush2.msra.mxu0 0.0
    %1441 = vmatprep.subr.mxu0 0.0
    %1442 = vmatpush2.msra.mxu0 0.0
    %1443 = vmatprep.subr.mxu0 0.0
    %1444 = vmatpush2.msra.mxu0 0.0
    %1445 = vmatprep.mubr.f32.mxu0 0.0
    %1446 = vmatmul.mubr.f32.gmra.mxu0 %v1123
    %v1447 = vpop.f32.mrf.mxu0
    %v1448 = vadd.f32 0.0, %v1447
    %v1449 = vpop.f32.mrf.mxu0
    %1450 = vdwg.mxu0
    %v1451 = vmul.f32 %v1448, 0.0013586957
    %v1452 = vadd.f32 %v1451, 1e-05
    %v1453 = vrsqrt.pop %v1452
    %v1455 = vsel %vm460, %v1453, 0
    %1457 = vmatprep.subr.mxu0 0.0
    %1458 = vmatpush1.msra.mxu0 0.0
    %1459 = vmatprep.subr.mxu0 0.0
    %1460 = vmatpush1.msra.mxu0 0.0
    %1461 = vmatprep.subr.mxu0 0.0
    %1462 = vmatpush1.msra.mxu0 0.0
    %1463 = vmatprep.subr.mxu0 0.0
    %1464 = vmatpush1.msra.mxu0 0.0
    %1465 = vmatprep.subr.mxu0 0.0
    %1466 = vmatpush1.msra.mxu0 0.0
    %1467 = vmatprep.subr.mxu0 0.0
    %1468 = vmatpush1.msra.mxu0 0.0
    %1469 = vmatprep.subr.mxu0 0.0
    %1470 = vmatpush1.msra.mxu0 0.0
    %1471 = vmatprep.subr.mxu0 0.0
    %1472 = vmatpush1.msra.mxu0 0.0
    %1473 = vmatprep.subr.mxu0 0.0
    %1474 = vmatpush1.msra.mxu0 0.0
    %1475 = vmatprep.subr.mxu0 0.0
    %1476 = vmatpush1.msra.mxu0 0.0
    %1477 = vmatprep.subr.mxu0 0.0
    %1478 = vmatpush1.msra.mxu0 0.0
    %1479 = vmatprep.subr.mxu0 0.0
    %1480 = vmatpush1.msra.mxu0 0.0
    %1481 = vmatprep.subr.mxu0 0.0
    %1482 = vmatpush1.msra.mxu0 0.0
    %1483 = vmatprep.subr.mxu0 0.0
    %1484 = vmatpush1.msra.mxu0 0.0
    %1485 = vmatprep.subr.mxu0 0.0
    %1486 = vmatpush1.msra.mxu0 0.0
    %1487 = vmatprep.subr.mxu0 0.0
    %1488 = vmatpush1.msra.mxu0 %v1200
    %1489 = vmatprep.subr.mxu0 0.0
    %1490 = vmatpush2.msra.mxu0 0.0
    %1491 = vmatprep.subr.mxu0 0.0
    %1492 = vmatpush2.msra.mxu0 0.0
    %1493 = vmatprep.subr.mxu0 0.0
    %1494 = vmatpush2.msra.mxu0 0.0
    %1495 = vmatprep.subr.mxu0 0.0
    %1496 = vmatpush2.msra.mxu0 0.0
    %1497 = vmatprep.subr.mxu0 0.0
    %1498 = vmatpush2.msra.mxu0 0.0
    %1499 = vmatprep.subr.mxu0 0.0
    %1500 = vmatpush2.msra.mxu0 0.0
    %1501 = vmatprep.subr.mxu0 0.0
    %1502 = vmatpush2.msra.mxu0 0.0
    %1503 = vmatprep.subr.mxu0 0.0
    %1504 = vmatpush2.msra.mxu0 0.0
    %1505 = vmatprep.subr.mxu0 0.0
    %1506 = vmatpush2.msra.mxu0 0.0
    %1507 = vmatprep.subr.mxu0 0.0
    %1508 = vmatpush2.msra.mxu0 0.0
    %1509 = vmatprep.subr.mxu0 0.0
    %1510 = vmatpush2.msra.mxu0 0.0
    %1511 = vmatprep.subr.mxu0 0.0
    %1512 = vmatpush2.msra.mxu0 0.0
    %1513 = vmatprep.subr.mxu0 0.0
    %1514 = vmatpush2.msra.mxu0 0.0
    %1515 = vmatprep.subr.mxu0 0.0
    %1516 = vmatpush2.msra.mxu0 0.0
    %1517 = vmatprep.subr.mxu0 0.0
    %1518 = vmatpush2.msra.mxu0 0.0
    %1519 = vmatprep.subr.mxu0 0.0
    %1520 = vmatpush2.msra.mxu0 0.0
    %1521 = vmatprep.mubr.f32.mxu0 0.0
    %1522 = vmatmul.mubr.f32.gmra.mxu0 %v1455
    %v1523 = vpop.f32.mrf.mxu0
    %v1524 = vadd.f32 0.0, %v1523
    %v1525 = vpop.f32.mrf.mxu0
    %1526 = vdwg.mxu0
    %v1527 = vlaneseq
    %v1528 = vshrl.u32 %v1527, 7
    %v1529 = vsub.s32 0, %v1528
    %v1530 = vrot.slane %v1524, %v1529
    %v1531 = vmul.f32 %v1276, %v1530
    %v1532 = vmul.f32 %v1277, %v1530
    %v1533 = vmul.f32 %v1278, %v1530
    %v1534 = vmul.f32 %v1279, %v1530
    %v1535 = vmul.f32 %v1531, %v73
    %v1536 = vmul.f32 %v1532, %v74
    %v1537 = vmul.f32 %v1533, %v75
    %v1538 = vmul.f32 %v1534, %v76
    %v1539 = vadd.f32 %v1535, %v77
    %v1540 = vadd.f32 %v1536, %v78
    %v1541 = vadd.f32 %v1537, %v79
    %v1542 = vadd.f32 %v1538, %v80
    %v1543 = vmax.f32 %v1539, 0.0
    %v1544 = vmax.f32 %v1540, 0.0
    %v1545 = vmax.f32 %v1541, 0.0
    %v1546 = vmax.f32 %v1542, 0.0
    %1551 = vrot.lane.b32.xlu0 %v1543, 127
    %v1552 = vpop.permute.xlu0 %1551
    %1553 = vrot.lane.b32.xlu0 %v1544, 127
    %v1554 = vpop.permute.xlu0 %1553
    %1555 = vrot.lane.b32.xlu0 %v1545, 127
    %v1556 = vpop.permute.xlu0 %1555
    %1557 = vrot.lane.b32.xlu0 %v1546, 127
    %v1558 = vpop.permute.xlu0 %1557
    %1563 = vrot.lane.b32.xlu0 %v1543, 49
    %v1564 = vpop.permute.xlu0 %1563
    %1565 = vrot.lane.b32.xlu0 %v1544, 49
    %v1566 = vpop.permute.xlu0 %1565
    %1567 = vrot.lane.b32.xlu0 %v1545, 49
    %v1568 = vpop.permute.xlu0 %1567
    %1569 = vrot.lane.b32.xlu0 %v1546, 49
    %v1570 = vpop.permute.xlu0 %1569
    %v1575 = vsel %vm887, %v1552, %v1564
    %v1576 = vsel %vm887, %v1554, %v1566
    %v1577 = vsel %vm887, %v1556, %v1568
    %v1578 = vsel %vm887, %v1558, %v1570
    %1579 = vrot.lane.b32.xlu0 %v1543, 126
    %v1580 = vpop.permute.xlu0 %1579
    %1581 = vrot.lane.b32.xlu0 %v1544, 126
    %v1582 = vpop.permute.xlu0 %1581
    %1583 = vrot.lane.b32.xlu0 %v1545, 126
    %v1584 = vpop.permute.xlu0 %1583
    %1585 = vrot.lane.b32.xlu0 %v1546, 126
    %v1586 = vpop.permute.xlu0 %1585
    %1591 = vrot.lane.b32.xlu0 %v1543, 48
    %v1592 = vpop.permute.xlu0 %1591
    %1593 = vrot.lane.b32.xlu0 %v1544, 48
    %v1594 = vpop.permute.xlu0 %1593
    %1595 = vrot.lane.b32.xlu0 %v1545, 48
    %v1596 = vpop.permute.xlu0 %1595
    %1597 = vrot.lane.b32.xlu0 %v1546, 48
    %v1598 = vpop.permute.xlu0 %1597
    %v1603 = vsel %vm902, %v1580, %v1592
    %v1604 = vsel %vm902, %v1582, %v1594
    %v1605 = vsel %vm902, %v1584, %v1596
    %v1606 = vsel %vm902, %v1586, %v1598
    %1607 = vset.pattern.permute.xlu0 68
    %1608 = vperm.xlu0 %1607, %v54
    %v1609 = vpop.permute.xlu0 %1608
    %1611 = vset.pattern.permute.xlu0 68
    %1612 = vperm.xlu0 %1611, %v60
    %v1613 = vpop.permute.xlu0 %1612
    %1615 = vset.pattern.permute.xlu0 68
    %1616 = vperm.xlu0 %1615, %v66
    %v1617 = vpop.permute.xlu0 %1616
    %1619 = vset.pattern.permute.xlu0 68
    %1620 = vperm.xlu0 %1619, %v72
    %v1621 = vpop.permute.xlu0 %1620
    %vm1623 = vcmask 785408
    %v1625 = vsel %vm1623, %v50, 0
    %v1628 = vsel %vm1623, %v56, 0
    %v1631 = vsel %vm1623, %v62, 0
    %v1634 = vsel %vm1623, %v68, 0
    %1636 = vmatprep.subr.mxu0 0.0
    %1637 = vmatpush1.msra.mxu0 0.0
    %1638 = vmatprep.subr.mxu0 0.0
    %1639 = vmatpush1.msra.mxu0 0.0
    %1640 = vmatprep.subr.mxu0 0.0
    %1641 = vmatpush1.msra.mxu0 0.0
    %1642 = vmatprep.subr.mxu0 0.0
    %1643 = vmatpush1.msra.mxu0 0.0
    %1644 = vmatprep.subr.mxu0 0.0
    %1645 = vmatpush1.msra.mxu0 %v1606
    %1646 = vmatprep.subr.mxu0 0.0
    %1647 = vmatpush1.msra.mxu0 %v1605
    %1648 = vmatprep.subr.mxu0 0.0
    %1649 = vmatpush1.msra.mxu0 %v1604
    %1650 = vmatprep.subr.mxu0 0.0
    %1651 = vmatpush1.msra.mxu0 %v1603
    %1652 = vmatprep.subr.mxu0 0.0
    %1653 = vmatpush1.msra.mxu0 %v1578
    %1654 = vmatprep.subr.mxu0 0.0
    %1655 = vmatpush1.msra.mxu0 %v1577
    %1656 = vmatprep.subr.mxu0 0.0
    %1657 = vmatpush1.msra.mxu0 %v1576
    %1658 = vmatprep.subr.mxu0 0.0
    %1659 = vmatpush1.msra.mxu0 %v1575
    %1660 = vmatprep.subr.mxu0 0.0
    %1661 = vmatpush1.msra.mxu0 %v1546
    %1662 = vmatprep.subr.mxu0 0.0
    %1663 = vmatpush1.msra.mxu0 %v1545
    %1664 = vmatprep.subr.mxu0 0.0
    %1665 = vmatpush1.msra.mxu0 %v1544
    %1666 = vmatprep.subr.mxu0 0.0
    %1667 = vmatpush1.msra.mxu0 %v1543
    %1668 = vmatprep.subr.mxu0 0.0
    %1669 = vmatpush2.msra.mxu0 0.0
    %1670 = vmatprep.subr.mxu0 0.0
    %1671 = vmatpush2.msra.mxu0 0.0
    %1672 = vmatprep.subr.mxu0 0.0
    %1673 = vmatpush2.msra.mxu0 0.0
    %1674 = vmatprep.subr.mxu0 0.0
    %1675 = vmatpush2.msra.mxu0 0.0
    %1676 = vmatprep.subr.mxu0 0.0
    %1677 = vmatpush2.msra.mxu0 0.0
    %1678 = vmatprep.subr.mxu0 0.0
    %1679 = vmatpush2.msra.mxu0 0.0
    %1680 = vmatprep.subr.mxu0 0.0
    %1681 = vmatpush2.msra.mxu0 0.0
    %1682 = vmatprep.subr.mxu0 0.0
    %1683 = vmatpush2.msra.mxu0 0.0
    %1684 = vmatprep.subr.mxu0 0.0
    %1685 = vmatpush2.msra.mxu0 0.0
    %1686 = vmatprep.subr.mxu0 0.0
    %1687 = vmatpush2.msra.mxu0 0.0
    %1688 = vmatprep.subr.mxu0 0.0
    %1689 = vmatpush2.msra.mxu0 0.0
    %1690 = vmatprep.subr.mxu0 0.0
    %1691 = vmatpush2.msra.mxu0 0.0
    %1692 = vmatprep.subr.mxu0 0.0
    %1693 = vmatpush2.msra.mxu0 0.0
    %1694 = vmatprep.subr.mxu0 0.0
    %1695 = vmatpush2.msra.mxu0 0.0
    %1696 = vmatprep.subr.mxu0 0.0
    %1697 = vmatpush2.msra.mxu0 0.0
    %1698 = vmatprep.subr.mxu0 0.0
    %1699 = vmatpush2.msra.mxu0 0.0
    %1700 = vmatprep.mubr.f32.mxu0 0.0
    %1701 = vmatmul.mubr.f32.gmra.mxu0 %v1625
    %v1702 = vpop.f32.mrf.mxu0
    %v1703 = vadd.f32 %v1609, %v1702
    %v1704 = vpop.f32.mrf.mxu0
    %1705 = vmatprep.mubr.f32.mxu0 0.0
    %1706 = vmatmul.mubr.f32.gmra.mxu0 %v1628
    %v1707 = vpop.f32.mrf.mxu0
    %v1708 = vadd.f32 %v1613, %v1707
    %v1709 = vpop.f32.mrf.mxu0
    %1710 = vmatprep.mubr.f32.mxu0 0.0
    %1711 = vmatmul.mubr.f32.gmra.mxu0 %v1631
    %v1712 = vpop.f32.mrf.mxu0
    %v1713 = vadd.f32 %v1617, %v1712
    %v1714 = vpop.f32.mrf.mxu0
    %1715 = vmatprep.mubr.f32.mxu0 0.0
    %1716 = vmatmul.mubr.f32.gmra.mxu0 %v1634
    %v1717 = vpop.f32.mrf.mxu0
    %v1718 = vadd.f32 %v1621, %v1717
    %v1719 = vpop.f32.mrf.mxu0
    %1720 = vdwg.mxu0
    %1727 = vrot.lane.b32.xlu0 %v107, 126
    %v1728 = vpop.permute.xlu0 %1727
    %1729 = vrot.lane.b32.xlu0 %v108, 126
    %v1730 = vpop.permute.xlu0 %1729
    %1731 = vrot.lane.b32.xlu0 %v109, 126
    %v1732 = vpop.permute.xlu0 %1731
    %1733 = vrot.lane.b32.xlu0 %v110, 126
    %v1734 = vpop.permute.xlu0 %1733
    %1735 = vrot.lane.b32.xlu0 %v111, 126
    %v1736 = vpop.permute.xlu0 %1735
    %1737 = vrot.lane.b32.xlu0 %v112, 126
    %v1738 = vpop.permute.xlu0 %1737
    %1739 = vrot.lane.b32.xlu0 %v113, 126
    %v1740 = vpop.permute.xlu0 %1739
    %v1748 = vsel %vm1020, %v1703, 0
    %v1751 = vsel %vm1020, %v1708, 0
    %v1754 = vsel %vm1020, %v1713, 0
    %v1757 = vsel %vm1020, %v1718, 0
    %v1759 = vsel %vm467, %v1740, 0
    %1761 = vmatprep.subr.mxu0 0.0
    %1762 = vmatpush1.msra.mxu0 0.0
    %1763 = vmatprep.subr.mxu0 0.0
    %1764 = vmatpush1.msra.mxu0 0.0
    %1765 = vmatprep.subr.mxu0 0.0
    %1766 = vmatpush1.msra.mxu0 0.0
    %1767 = vmatprep.subr.mxu0 0.0
    %1768 = vmatpush1.msra.mxu0 0.0
    %1769 = vmatprep.subr.mxu0 0.0
    %1770 = vmatpush1.msra.mxu0 0.0
    %1771 = vmatprep.subr.mxu0 0.0
    %1772 = vmatpush1.msra.mxu0 0.0
    %1773 = vmatprep.subr.mxu0 0.0
    %1774 = vmatpush1.msra.mxu0 0.0
    %1775 = vmatprep.subr.mxu0 0.0
    %1776 = vmatpush1.msra.mxu0 0.0
    %1777 = vmatprep.subr.mxu0 0.0
    %1778 = vmatpush1.msra.mxu0 0.0
    %1779 = vmatprep.subr.mxu0 0.0
    %1780 = vmatpush1.msra.mxu0 %v1759
    %1781 = vmatprep.subr.mxu0 0.0
    %1782 = vmatpush1.msra.mxu0 %v1738
    %1783 = vmatprep.subr.mxu0 0.0
    %1784 = vmatpush1.msra.mxu0 %v1736
    %1785 = vmatprep.subr.mxu0 0.0
    %1786 = vmatpush1.msra.mxu0 %v1734
    %1787 = vmatprep.subr.mxu0 0.0
    %1788 = vmatpush1.msra.mxu0 %v1732
    %1789 = vmatprep.subr.mxu0 0.0
    %1790 = vmatpush1.msra.mxu0 %v1730
    %1791 = vmatprep.subr.mxu0 0.0
    %1792 = vmatpush1.msra.mxu0 %v1728
    %1793 = vmatprep.subr.mxu0 0.0
    %1794 = vmatpush2.msra.mxu0 0.0
    %1795 = vmatprep.subr.mxu0 0.0
    %1796 = vmatpush2.msra.mxu0 0.0
    %1797 = vmatprep.subr.mxu0 0.0
    %1798 = vmatpush2.msra.mxu0 0.0
    %1799 = vmatprep.subr.mxu0 0.0
    %1800 = vmatpush2.msra.mxu0 0.0
    %1801 = vmatprep.subr.mxu0 0.0
    %1802 = vmatpush2.msra.mxu0 0.0
    %1803 = vmatprep.subr.mxu0 0.0
    %1804 = vmatpush2.msra.mxu0 0.0
    %1805 = vmatprep.subr.mxu0 0.0
    %1806 = vmatpush2.msra.mxu0 0.0
    %1807 = vmatprep.subr.mxu0 0.0
    %1808 = vmatpush2.msra.mxu0 0.0
    %1809 = vmatprep.subr.mxu0 0.0
    %1810 = vmatpush2.msra.mxu0 0.0
    %1811 = vmatprep.subr.mxu0 0.0
    %1812 = vmatpush2.msra.mxu0 0.0
    %1813 = vmatprep.subr.mxu0 0.0
    %1814 = vmatpush2.msra.mxu0 0.0
    %1815 = vmatprep.subr.mxu0 0.0
    %1816 = vmatpush2.msra.mxu0 0.0
    %1817 = vmatprep.subr.mxu0 0.0
    %1818 = vmatpush2.msra.mxu0 0.0
    %1819 = vmatprep.subr.mxu0 0.0
    %1820 = vmatpush2.msra.mxu0 0.0
    %1821 = vmatprep.subr.mxu0 0.0
    %1822 = vmatpush2.msra.mxu0 0.0
    %1823 = vmatprep.subr.mxu0 0.0
    %1824 = vmatpush2.msra.mxu0 0.0
    %1825 = vmatprep.mubr.f32.mxu0 0.0
    %1826 = vmatmul.mubr.f32.gmra.mxu0 %v1748
    %v1827 = vpop.f32.mrf.mxu0
    %v1828 = vadd.f32 0.0, %v1827
    %v1829 = vpop.f32.mrf.mxu0
    %1830 = vmatprep.mubr.f32.mxu0 0.0
    %1831 = vmatmul.mubr.f32.gmra.mxu0 %v1751
    %v1832 = vpop.f32.mrf.mxu0
    %v1833 = vadd.f32 0.0, %v1832
    %v1834 = vpop.f32.mrf.mxu0
    %1835 = vmatprep.mubr.f32.mxu0 0.0
    %1836 = vmatmul.mubr.f32.gmra.mxu0 %v1754
    %v1837 = vpop.f32.mrf.mxu0
    %v1838 = vadd.f32 0.0, %v1837
    %v1839 = vpop.f32.mrf.mxu0
    %1840 = vmatprep.mubr.f32.mxu0 0.0
    %1841 = vmatmul.mubr.f32.gmra.mxu0 %v1757
    %v1842 = vpop.f32.mrf.mxu0
    %v1843 = vadd.f32 0.0, %v1842
    %v1844 = vpop.f32.mrf.mxu0
    %1845 = vdwg.mxu0
    %v1846 = vmul.f32 %v1828, 0.04761905
    %v1847 = vmul.f32 %v1833, 0.04761905
    %v1848 = vmul.f32 %v1838, 0.04761905
    %v1849 = vmul.f32 %v1843, 0.04761905
    %v1851 = vsel %vm460, %v1846, 0
    %v1854 = vsel %vm460, %v1847, 0
    %v1857 = vsel %vm460, %v1848, 0
    %v1860 = vsel %vm460, %v1849, 0
    %1862 = vmatprep.subr.mxu0 0.0
    %1863 = vmatpush1.msra.mxu0 0.0
    %1864 = vmatprep.subr.mxu0 0.0
    %1865 = vmatpush1.msra.mxu0 0.0
    %1866 = vmatprep.subr.mxu0 0.0
    %1867 = vmatpush1.msra.mxu0 0.0
    %1868 = vmatprep.subr.mxu0 0.0
    %1869 = vmatpush1.msra.mxu0 0.0
    %1870 = vmatprep.subr.mxu0 0.0
    %1871 = vmatpush1.msra.mxu0 0.0
    %1872 = vmatprep.subr.mxu0 0.0
    %1873 = vmatpush1.msra.mxu0 0.0
    %1874 = vmatprep.subr.mxu0 0.0
    %1875 = vmatpush1.msra.mxu0 0.0
    %1876 = vmatprep.subr.mxu0 0.0
    %1877 = vmatpush1.msra.mxu0 0.0
    %1878 = vmatprep.subr.mxu0 0.0
    %1879 = vmatpush1.msra.mxu0 0.0
    %1880 = vmatprep.subr.mxu0 0.0
    %1881 = vmatpush1.msra.mxu0 0.0
    %1882 = vmatprep.subr.mxu0 0.0
    %1883 = vmatpush1.msra.mxu0 0.0
    %1884 = vmatprep.subr.mxu0 0.0
    %1885 = vmatpush1.msra.mxu0 0.0
    %1886 = vmatprep.subr.mxu0 0.0
    %1887 = vmatpush1.msra.mxu0 0.0
    %1888 = vmatprep.subr.mxu0 0.0
    %1889 = vmatpush1.msra.mxu0 0.0
    %1890 = vmatprep.subr.mxu0 0.0
    %1891 = vmatpush1.msra.mxu0 0.0
    %1892 = vmatprep.subr.mxu0 0.0
    %1893 = vmatpush1.msra.mxu0 %v1200
    %1894 = vmatprep.subr.mxu0 0.0
    %1895 = vmatpush2.msra.mxu0 0.0
    %1896 = vmatprep.subr.mxu0 0.0
    %1897 = vmatpush2.msra.mxu0 0.0
    %1898 = vmatprep.subr.mxu0 0.0
    %1899 = vmatpush2.msra.mxu0 0.0
    %1900 = vmatprep.subr.mxu0 0.0
    %1901 = vmatpush2.msra.mxu0 0.0
    %1902 = vmatprep.subr.mxu0 0.0
    %1903 = vmatpush2.msra.mxu0 0.0
    %1904 = vmatprep.subr.mxu0 0.0
    %1905 = vmatpush2.msra.mxu0 0.0
    %1906 = vmatprep.subr.mxu0 0.0
    %1907 = vmatpush2.msra.mxu0 0.0
    %1908 = vmatprep.subr.mxu0 0.0
    %1909 = vmatpush2.msra.mxu0 0.0
    %1910 = vmatprep.subr.mxu0 0.0
    %1911 = vmatpush2.msra.mxu0 0.0
    %1912 = vmatprep.subr.mxu0 0.0
    %1913 = vmatpush2.msra.mxu0 0.0
    %1914 = vmatprep.subr.mxu0 0.0
    %1915 = vmatpush2.msra.mxu0 0.0
    %1916 = vmatprep.subr.mxu0 0.0
    %1917 = vmatpush2.msra.mxu0 0.0
    %1918 = vmatprep.subr.mxu0 0.0
    %1919 = vmatpush2.msra.mxu0 0.0
    %1920 = vmatprep.subr.mxu0 0.0
    %1921 = vmatpush2.msra.mxu0 0.0
    %1922 = vmatprep.subr.mxu0 0.0
    %1923 = vmatpush2.msra.mxu0 0.0
    %1924 = vmatprep.subr.mxu0 0.0
    %1925 = vmatpush2.msra.mxu0 0.0
    %1926 = vmatprep.mubr.f32.mxu0 0.0
    %1927 = vmatmul.mubr.f32.gmra.mxu0 %v1851
    %v1928 = vpop.f32.mrf.mxu0
    %v1929 = vadd.f32 0.0, %v1928
    %v1930 = vpop.f32.mrf.mxu0
    %1931 = vmatprep.mubr.f32.mxu0 0.0
    %1932 = vmatmul.mubr.f32.gmra.mxu0 %v1854
    %v1933 = vpop.f32.mrf.mxu0
    %v1934 = vadd.f32 0.0, %v1933
    %v1935 = vpop.f32.mrf.mxu0
    %1936 = vmatprep.mubr.f32.mxu0 0.0
    %1937 = vmatmul.mubr.f32.gmra.mxu0 %v1857
    %v1938 = vpop.f32.mrf.mxu0
    %v1939 = vadd.f32 0.0, %v1938
    %v1940 = vpop.f32.mrf.mxu0
    %1941 = vmatprep.mubr.f32.mxu0 0.0
    %1942 = vmatmul.mubr.f32.gmra.mxu0 %v1860
    %v1943 = vpop.f32.mrf.mxu0
    %v1944 = vadd.f32 0.0, %v1943
    %v1945 = vpop.f32.mrf.mxu0
    %1946 = vdwg.mxu0
    %v1947 = vsub.f32 %v1703, %v1929
    %v1948 = vsub.f32 %v1708, %v1934
    %v1949 = vsub.f32 %v1713, %v1939
    %v1950 = vsub.f32 %v1718, %v1944
    %v1951 = vmul.f32 %v1947, %v1947
    %v1952 = vmul.f32 %v1948, %v1948
    %v1953 = vmul.f32 %v1949, %v1949
    %v1954 = vmul.f32 %v1950, %v1950
    %v1956 = vsel %vm1020, %v1951, 0
    %v1959 = vsel %vm1020, %v1952, 0
    %v1962 = vsel %vm1020, %v1953, 0
    %v1965 = vsel %vm1020, %v1954, 0
    %1967 = vmatprep.subr.mxu0 0.0
    %1968 = vmatpush1.msra.mxu0 0.0
    %1969 = vmatprep.subr.mxu0 0.0
    %1970 = vmatpush1.msra.mxu0 0.0
    %1971 = vmatprep.subr.mxu0 0.0
    %1972 = vmatpush1.msra.mxu0 0.0
    %1973 = vmatprep.subr.mxu0 0.0
    %1974 = vmatpush1.msra.mxu0 0.0
    %1975 = vmatprep.subr.mxu0 0.0
    %1976 = vmatpush1.msra.mxu0 0.0
    %1977 = vmatprep.subr.mxu0 0.0
    %1978 = vmatpush1.msra.mxu0 0.0
    %1979 = vmatprep.subr.mxu0 0.0
    %1980 = vmatpush1.msra.mxu0 0.0
    %1981 = vmatprep.subr.mxu0 0.0
    %1982 = vmatpush1.msra.mxu0 0.0
    %1983 = vmatprep.subr.mxu0 0.0
    %1984 = vmatpush1.msra.mxu0 0.0
    %1985 = vmatprep.subr.mxu0 0.0
    %1986 = vmatpush1.msra.mxu0 %v1759
    %1987 = vmatprep.subr.mxu0 0.0
    %1988 = vmatpush1.msra.mxu0 %v1738
    %1989 = vmatprep.subr.mxu0 0.0
    %1990 = vmatpush1.msra.mxu0 %v1736
    %1991 = vmatprep.subr.mxu0 0.0
    %1992 = vmatpush1.msra.mxu0 %v1734
    %1993 = vmatprep.subr.mxu0 0.0
    %1994 = vmatpush1.msra.mxu0 %v1732
    %1995 = vmatprep.subr.mxu0 0.0
    %1996 = vmatpush1.msra.mxu0 %v1730
    %1997 = vmatprep.subr.mxu0 0.0
    %1998 = vmatpush1.msra.mxu0 %v1728
    %1999 = vmatprep.subr.mxu0 0.0
    %2000 = vmatpush2.msra.mxu0 0.0
    %2001 = vmatprep.subr.mxu0 0.0
    %2002 = vmatpush2.msra.mxu0 0.0
    %2003 = vmatprep.subr.mxu0 0.0
    %2004 = vmatpush2.msra.mxu0 0.0
    %2005 = vmatprep.subr.mxu0 0.0
    %2006 = vmatpush2.msra.mxu0 0.0
    %2007 = vmatprep.subr.mxu0 0.0
    %2008 = vmatpush2.msra.mxu0 0.0
    %2009 = vmatprep.subr.mxu0 0.0
    %2010 = vmatpush2.msra.mxu0 0.0
    %2011 = vmatprep.subr.mxu0 0.0
    %2012 = vmatpush2.msra.mxu0 0.0
    %2013 = vmatprep.subr.mxu0 0.0
    %2014 = vmatpush2.msra.mxu0 0.0
    %2015 = vmatprep.subr.mxu0 0.0
    %2016 = vmatpush2.msra.mxu0 0.0
    %2017 = vmatprep.subr.mxu0 0.0
    %2018 = vmatpush2.msra.mxu0 0.0
    %2019 = vmatprep.subr.mxu0 0.0
    %2020 = vmatpush2.msra.mxu0 0.0
    %2021 = vmatprep.subr.mxu0 0.0
    %2022 = vmatpush2.msra.mxu0 0.0
    %2023 = vmatprep.subr.mxu0 0.0
    %2024 = vmatpush2.msra.mxu0 0.0
    %2025 = vmatprep.subr.mxu0 0.0
    %2026 = vmatpush2.msra.mxu0 0.0
    %2027 = vmatprep.subr.mxu0 0.0
    %2028 = vmatpush2.msra.mxu0 0.0
    %2029 = vmatprep.subr.mxu0 0.0
    %2030 = vmatpush2.msra.mxu0 0.0
    %2031 = vmatprep.mubr.f32.mxu0 0.0
    %2032 = vmatmul.mubr.f32.gmra.mxu0 %v1956
    %v2033 = vpop.f32.mrf.mxu0
    %v2034 = vadd.f32 0.0, %v2033
    %v2035 = vpop.f32.mrf.mxu0
    %2036 = vmatprep.mubr.f32.mxu0 0.0
    %2037 = vmatmul.mubr.f32.gmra.mxu0 %v1959
    %v2038 = vpop.f32.mrf.mxu0
    %v2039 = vadd.f32 0.0, %v2038
    %v2040 = vpop.f32.mrf.mxu0
    %2041 = vmatprep.mubr.f32.mxu0 0.0
    %2042 = vmatmul.mubr.f32.gmra.mxu0 %v1962
    %v2043 = vpop.f32.mrf.mxu0
    %v2044 = vadd.f32 0.0, %v2043
    %v2045 = vpop.f32.mrf.mxu0
    %2046 = vmatprep.mubr.f32.mxu0 0.0
    %2047 = vmatmul.mubr.f32.gmra.mxu0 %v1965
    %v2048 = vpop.f32.mrf.mxu0
    %v2049 = vadd.f32 0.0, %v2048
    %v2050 = vpop.f32.mrf.mxu0
    %2051 = vdwg.mxu0
    %v2052 = vmul.f32 %v2034, 0.04761905
    %v2053 = vmul.f32 %v2039, 0.04761905
    %v2054 = vmul.f32 %v2044, 0.04761905
    %v2055 = vmul.f32 %v2049, 0.04761905
    %v2056 = vadd.f32 %v2052, 1e-05
    %v2057 = vadd.f32 %v2053, 1e-05
    %v2058 = vadd.f32 %v2054, 1e-05
    %v2059 = vadd.f32 %v2055, 1e-05
    %v2060 = vrsqrt.pop %v2056
    %v2061 = vrsqrt.pop %v2057
    %v2062 = vrsqrt.pop %v2058
    %v2063 = vrsqrt.pop %v2059
    %2064 = vset.pattern.permute.xlu0 69
    %2065 = vperm.xlu0 %2064, %v54
    %v2066 = vpop.permute.xlu0 %2065
    %2068 = vset.pattern.permute.xlu0 69
    %2069 = vperm.xlu0 %2068, %v60
    %v2070 = vpop.permute.xlu0 %2069
    %2072 = vset.pattern.permute.xlu0 69
    %2073 = vperm.xlu0 %2072, %v66
    %v2074 = vpop.permute.xlu0 %2073
    %2076 = vset.pattern.permute.xlu0 69
    %2077 = vperm.xlu0 %2076, %v72
    %v2078 = vpop.permute.xlu0 %2077
    %v2080 = vmul.f32 %v2060, %v2066
    %v2081 = vmul.f32 %v2061, %v2070
    %v2082 = vmul.f32 %v2062, %v2074
    %v2083 = vmul.f32 %v2063, %v2078
    %v2085 = vsel %vm460, %v2080, 0
    %v2088 = vsel %vm460, %v2081, 0
    %v2091 = vsel %vm460, %v2082, 0
    %v2094 = vsel %vm460, %v2083, 0
    %2096 = vmatprep.subr.mxu0 0.0
    %2097 = vmatpush1.msra.mxu0 0.0
    %2098 = vmatprep.subr.mxu0 0.0
    %2099 = vmatpush1.msra.mxu0 0.0
    %2100 = vmatprep.subr.mxu0 0.0
    %2101 = vmatpush1.msra.mxu0 0.0
    %2102 = vmatprep.subr.mxu0 0.0
    %2103 = vmatpush1.msra.mxu0 0.0
    %2104 = vmatprep.subr.mxu0 0.0
    %2105 = vmatpush1.msra.mxu0 0.0
    %2106 = vmatprep.subr.mxu0 0.0
    %2107 = vmatpush1.msra.mxu0 0.0
    %2108 = vmatprep.subr.mxu0 0.0
    %2109 = vmatpush1.msra.mxu0 0.0
    %2110 = vmatprep.subr.mxu0 0.0
    %2111 = vmatpush1.msra.mxu0 0.0
    %2112 = vmatprep.subr.mxu0 0.0
    %2113 = vmatpush1.msra.mxu0 0.0
    %2114 = vmatprep.subr.mxu0 0.0
    %2115 = vmatpush1.msra.mxu0 0.0
    %2116 = vmatprep.subr.mxu0 0.0
    %2117 = vmatpush1.msra.mxu0 0.0
    %2118 = vmatprep.subr.mxu0 0.0
    %2119 = vmatpush1.msra.mxu0 0.0
    %2120 = vmatprep.subr.mxu0 0.0
    %2121 = vmatpush1.msra.mxu0 0.0
    %2122 = vmatprep.subr.mxu0 0.0
    %2123 = vmatpush1.msra.mxu0 0.0
    %2124 = vmatprep.subr.mxu0 0.0
    %2125 = vmatpush1.msra.mxu0 0.0
    %2126 = vmatprep.subr.mxu0 0.0
    %2127 = vmatpush1.msra.mxu0 %v1200
    %2128 = vmatprep.subr.mxu0 0.0
    %2129 = vmatpush2.msra.mxu0 0.0
    %2130 = vmatprep.subr.mxu0 0.0
    %2131 = vmatpush2.msra.mxu0 0.0
    %2132 = vmatprep.subr.mxu0 0.0
    %2133 = vmatpush2.msra.mxu0 0.0
    %2134 = vmatprep.subr.mxu0 0.0
    %2135 = vmatpush2.msra.mxu0 0.0
    %2136 = vmatprep.subr.mxu0 0.0
    %2137 = vmatpush2.msra.mxu0 0.0
    %2138 = vmatprep.subr.mxu0 0.0
    %2139 = vmatpush2.msra.mxu0 0.0
    %2140 = vmatprep.subr.mxu0 0.0
    %2141 = vmatpush2.msra.mxu0 0.0
    %2142 = vmatprep.subr.mxu0 0.0
    %2143 = vmatpush2.msra.mxu0 0.0
    %2144 = vmatprep.subr.mxu0 0.0
    %2145 = vmatpush2.msra.mxu0 0.0
    %2146 = vmatprep.subr.mxu0 0.0
    %2147 = vmatpush2.msra.mxu0 0.0
    %2148 = vmatprep.subr.mxu0 0.0
    %2149 = vmatpush2.msra.mxu0 0.0
    %2150 = vmatprep.subr.mxu0 0.0
    %2151 = vmatpush2.msra.mxu0 0.0
    %2152 = vmatprep.subr.mxu0 0.0
    %2153 = vmatpush2.msra.mxu0 0.0
    %2154 = vmatprep.subr.mxu0 0.0
    %2155 = vmatpush2.msra.mxu0 0.0
    %2156 = vmatprep.subr.mxu0 0.0
    %2157 = vmatpush2.msra.mxu0 0.0
    %2158 = vmatprep.subr.mxu0 0.0
    %2159 = vmatpush2.msra.mxu0 0.0
    %2160 = vmatprep.mubr.f32.mxu0 0.0
    %2161 = vmatmul.mubr.f32.gmra.mxu0 %v2085
    %v2162 = vpop.f32.mrf.mxu0
    %v2163 = vadd.f32 0.0, %v2162
    %v2164 = vpop.f32.mrf.mxu0
    %2165 = vmatprep.mubr.f32.mxu0 0.0
    %2166 = vmatmul.mubr.f32.gmra.mxu0 %v2088
    %v2167 = vpop.f32.mrf.mxu0
    %v2168 = vadd.f32 0.0, %v2167
    %v2169 = vpop.f32.mrf.mxu0
    %2170 = vmatprep.mubr.f32.mxu0 0.0
    %2171 = vmatmul.mubr.f32.gmra.mxu0 %v2091
    %v2172 = vpop.f32.mrf.mxu0
    %v2173 = vadd.f32 0.0, %v2172
    %v2174 = vpop.f32.mrf.mxu0
    %2175 = vmatprep.mubr.f32.mxu0 0.0
    %2176 = vmatmul.mubr.f32.gmra.mxu0 %v2094
    %v2177 = vpop.f32.mrf.mxu0
    %v2178 = vadd.f32 0.0, %v2177
    %v2179 = vpop.f32.mrf.mxu0
    %2180 = vdwg.mxu0
    %v2181 = vmul.f32 %v1947, %v2163
    %v2182 = vmul.f32 %v1948, %v2168
    %v2183 = vmul.f32 %v1949, %v2173
    %v2184 = vmul.f32 %v1950, %v2178
    %2185 = vset.pattern.permute.xlu0 70
    %2186 = vperm.xlu0 %2185, %v54
    %v2187 = vpop.permute.xlu0 %2186
    %2189 = vset.pattern.permute.xlu0 70
    %2190 = vperm.xlu0 %2189, %v60
    %v2191 = vpop.permute.xlu0 %2190
    %2193 = vset.pattern.permute.xlu0 70
    %2194 = vperm.xlu0 %2193, %v66
    %v2195 = vpop.permute.xlu0 %2194
    %2197 = vset.pattern.permute.xlu0 70
    %2198 = vperm.xlu0 %2197, %v72
    %v2199 = vpop.permute.xlu0 %2198
    %v2201 = vadd.f32 %v2181, %v2187
    %v2202 = vadd.f32 %v2182, %v2191
    %v2203 = vadd.f32 %v2183, %v2195
    %v2204 = vadd.f32 %v2184, %v2199
    %2205 = vset.pattern.permute.xlu0 71
    %2206 = vperm.xlu0 %2205, %v54
    %v2207 = vpop.permute.xlu0 %2206
    %2209 = vset.pattern.permute.xlu0 71
    %2210 = vperm.xlu0 %2209, %v60
    %v2211 = vpop.permute.xlu0 %2210
    %2213 = vset.pattern.permute.xlu0 71
    %2214 = vperm.xlu0 %2213, %v66
    %v2215 = vpop.permute.xlu0 %2214
    %2217 = vset.pattern.permute.xlu0 71
    %2218 = vperm.xlu0 %2217, %v72
    %v2219 = vpop.permute.xlu0 %2218
    %v2222 = vsel %vm1121, %v51, 0
    %v2225 = vsel %vm1121, %v57, 0
    %v2228 = vsel %vm1121, %v63, 0
    %v2231 = vsel %vm1121, %v69, 0
    %2233 = vmatprep.subr.mxu0 0.0
    %2234 = vmatpush1.msra.mxu0 0.0
    %2235 = vmatprep.subr.mxu0 0.0
    %2236 = vmatpush1.msra.mxu0 0.0
    %2237 = vmatprep.subr.mxu0 0.0
    %2238 = vmatpush1.msra.mxu0 0.0
    %2239 = vmatprep.subr.mxu0 0.0
    %2240 = vmatpush1.msra.mxu0 0.0
    %2241 = vmatprep.subr.mxu0 0.0
    %2242 = vmatpush1.msra.mxu0 0.0
    %2243 = vmatprep.subr.mxu0 0.0
    %2244 = vmatpush1.msra.mxu0 0.0
    %2245 = vmatprep.subr.mxu0 0.0
    %2246 = vmatpush1.msra.mxu0 0.0
    %2247 = vmatprep.subr.mxu0 0.0
    %2248 = vmatpush1.msra.mxu0 0.0
    %2249 = vmatprep.subr.mxu0 0.0
    %2250 = vmatpush1.msra.mxu0 0.0
    %2251 = vmatprep.subr.mxu0 0.0
    %2252 = vmatpush1.msra.mxu0 0.0
    %2253 = vmatprep.subr.mxu0 0.0
    %2254 = vmatpush1.msra.mxu0 0.0
    %2255 = vmatprep.subr.mxu0 0.0
    %2256 = vmatpush1.msra.mxu0 0.0
    %2257 = vmatprep.subr.mxu0 0.0
    %2258 = vmatpush1.msra.mxu0 %v2204
    %2259 = vmatprep.subr.mxu0 0.0
    %2260 = vmatpush1.msra.mxu0 %v2203
    %2261 = vmatprep.subr.mxu0 0.0
    %2262 = vmatpush1.msra.mxu0 %v2202
    %2263 = vmatprep.subr.mxu0 0.0
    %2264 = vmatpush1.msra.mxu0 %v2201
    %2265 = vmatprep.subr.mxu0 0.0
    %2266 = vmatpush2.msra.mxu0 0.0
    %2267 = vmatprep.subr.mxu0 0.0
    %2268 = vmatpush2.msra.mxu0 0.0
    %2269 = vmatprep.subr.mxu0 0.0
    %2270 = vmatpush2.msra.mxu0 0.0
    %2271 = vmatprep.subr.mxu0 0.0
    %2272 = vmatpush2.msra.mxu0 0.0
    %2273 = vmatprep.subr.mxu0 0.0
    %2274 = vmatpush2.msra.mxu0 0.0
    %2275 = vmatprep.subr.mxu0 0.0
    %2276 = vmatpush2.msra.mxu0 0.0
    %2277 = vmatprep.subr.mxu0 0.0
    %2278 = vmatpush2.msra.mxu0 0.0
    %2279 = vmatprep.subr.mxu0 0.0
    %2280 = vmatpush2.msra.mxu0 0.0
    %2281 = vmatprep.subr.mxu0 0.0
    %2282 = vmatpush2.msra.mxu0 0.0
    %2283 = vmatprep.subr.mxu0 0.0
    %2284 = vmatpush2.msra.mxu0 0.0
    %2285 = vmatprep.subr.mxu0 0.0
    %2286 = vmatpush2.msra.mxu0 0.0
    %2287 = vmatprep.subr.mxu0 0.0
    %2288 = vmatpush2.msra.mxu0 0.0
    %2289 = vmatprep.subr.mxu0 0.0
    %2290 = vmatpush2.msra.mxu0 0.0
    %2291 = vmatprep.subr.mxu0 0.0
    %2292 = vmatpush2.msra.mxu0 0.0
    %2293 = vmatprep.subr.mxu0 0.0
    %2294 = vmatpush2.msra.mxu0 0.0
    %2295 = vmatprep.subr.mxu0 0.0
    %2296 = vmatpush2.msra.mxu0 0.0
    %2297 = vmatprep.mubr.f32.mxu0 0.0
    %2298 = vmatmul.mubr.f32.gmra.mxu0 %v2222
    %v2299 = vpop.f32.mrf.mxu0
    %v2300 = vadd.f32 %v2207, %v2299
    %v2301 = vpop.f32.mrf.mxu0
    %2302 = vmatprep.mubr.f32.mxu0 0.0
    %2303 = vmatmul.mubr.f32.gmra.mxu0 %v2225
    %v2304 = vpop.f32.mrf.mxu0
    %v2305 = vadd.f32 %v2211, %v2304
    %v2306 = vpop.f32.mrf.mxu0
    %2307 = vmatprep.mubr.f32.mxu0 0.0
    %2308 = vmatmul.mubr.f32.gmra.mxu0 %v2228
    %v2309 = vpop.f32.mrf.mxu0
    %v2310 = vadd.f32 %v2215, %v2309
    %v2311 = vpop.f32.mrf.mxu0
    %2312 = vmatprep.mubr.f32.mxu0 0.0
    %2313 = vmatmul.mubr.f32.gmra.mxu0 %v2231
    %v2314 = vpop.f32.mrf.mxu0
    %v2315 = vadd.f32 %v2219, %v2314
    %v2316 = vpop.f32.mrf.mxu0
    %2317 = vdwg.mxu0
    %v2318 = vlaneseq
    %v2319 = vshrl.u32 %v2318, 7
    %v2320 = vsub.s32 0, %v2319
    %v2321 = vrot.slane %v122, %v2320
    %v2323 = vsel %vm1020, %v2300, 0
    %v2326 = vsel %vm1020, %v2305, 0
    %v2329 = vsel %vm1020, %v2310, 0
    %v2332 = vsel %vm1020, %v2315, 0
    %v2335 = vsel %vm467, %v121, 0
    %2337 = vmatprep.subr.mxu0 0.0
    %2338 = vmatpush1.msra.mxu0 0.0
    %2339 = vmatprep.subr.mxu0 0.0
    %2340 = vmatpush1.msra.mxu0 0.0
    %2341 = vmatprep.subr.mxu0 0.0
    %2342 = vmatpush1.msra.mxu0 0.0
    %2343 = vmatprep.subr.mxu0 0.0
    %2344 = vmatpush1.msra.mxu0 0.0
    %2345 = vmatprep.subr.mxu0 0.0
    %2346 = vmatpush1.msra.mxu0 0.0
    %2347 = vmatprep.subr.mxu0 0.0
    %2348 = vmatpush1.msra.mxu0 0.0
    %2349 = vmatprep.subr.mxu0 0.0
    %2350 = vmatpush1.msra.mxu0 0.0
    %2351 = vmatprep.subr.mxu0 0.0
    %2352 = vmatpush1.msra.mxu0 0.0
    %2353 = vmatprep.subr.mxu0 0.0
    %2354 = vmatpush1.msra.mxu0 0.0
    %2355 = vmatprep.subr.mxu0 0.0
    %2356 = vmatpush1.msra.mxu0 %v2335
    %2357 = vmatprep.subr.mxu0 0.0
    %2358 = vmatpush1.msra.mxu0 %v120
    %2359 = vmatprep.subr.mxu0 0.0
    %2360 = vmatpush1.msra.mxu0 %v119
    %2361 = vmatprep.subr.mxu0 0.0
    %2362 = vmatpush1.msra.mxu0 %v118
    %2363 = vmatprep.subr.mxu0 0.0
    %2364 = vmatpush1.msra.mxu0 %v117
    %2365 = vmatprep.subr.mxu0 0.0
    %2366 = vmatpush1.msra.mxu0 %v116
    %2367 = vmatprep.subr.mxu0 0.0
    %2368 = vmatpush1.msra.mxu0 %v115
    %2369 = vmatprep.subr.mxu0 0.0
    %2370 = vmatpush2.msra.mxu0 0.0
    %2371 = vmatprep.subr.mxu0 0.0
    %2372 = vmatpush2.msra.mxu0 0.0
    %2373 = vmatprep.subr.mxu0 0.0
    %2374 = vmatpush2.msra.mxu0 0.0
    %2375 = vmatprep.subr.mxu0 0.0
    %2376 = vmatpush2.msra.mxu0 0.0
    %2377 = vmatprep.subr.mxu0 0.0
    %2378 = vmatpush2.msra.mxu0 0.0
    %2379 = vmatprep.subr.mxu0 0.0
    %2380 = vmatpush2.msra.mxu0 0.0
    %2381 = vmatprep.subr.mxu0 0.0
    %2382 = vmatpush2.msra.mxu0 0.0
    %2383 = vmatprep.subr.mxu0 0.0
    %2384 = vmatpush2.msra.mxu0 0.0
    %2385 = vmatprep.subr.mxu0 0.0
    %2386 = vmatpush2.msra.mxu0 0.0
    %2387 = vmatprep.subr.mxu0 0.0
    %2388 = vmatpush2.msra.mxu0 0.0
    %2389 = vmatprep.subr.mxu0 0.0
    %2390 = vmatpush2.msra.mxu0 0.0
    %2391 = vmatprep.subr.mxu0 0.0
    %2392 = vmatpush2.msra.mxu0 0.0
    %2393 = vmatprep.subr.mxu0 0.0
    %2394 = vmatpush2.msra.mxu0 0.0
    %2395 = vmatprep.subr.mxu0 0.0
    %2396 = vmatpush2.msra.mxu0 0.0
    %2397 = vmatprep.subr.mxu0 0.0
    %2398 = vmatpush2.msra.mxu0 0.0
    %2399 = vmatprep.subr.mxu0 0.0
    %2400 = vmatpush2.msra.mxu0 0.0
    %2401 = vmatprep.mubr.f32.mxu0 0.0
    %2402 = vmatmul.mubr.f32.gmra.mxu0 %v2323
    %v2403 = vpop.f32.mrf.mxu0
    %v2404 = vadd.f32 %v2321, %v2403
    %v2405 = vpop.f32.mrf.mxu0
    %2406 = vmatprep.mubr.f32.mxu0 0.0
    %2407 = vmatmul.mubr.f32.gmra.mxu0 %v2326
    %v2408 = vpop.f32.mrf.mxu0
    %v2409 = vadd.f32 %v2321, %v2408
    %v2410 = vpop.f32.mrf.mxu0
    %2411 = vmatprep.mubr.f32.mxu0 0.0
    %2412 = vmatmul.mubr.f32.gmra.mxu0 %v2329
    %v2413 = vpop.f32.mrf.mxu0
    %v2414 = vadd.f32 %v2321, %v2413
    %v2415 = vpop.f32.mrf.mxu0
    %2416 = vmatprep.mubr.f32.mxu0 0.0
    %2417 = vmatmul.mubr.f32.gmra.mxu0 %v2332
    %v2418 = vpop.f32.mrf.mxu0
    %v2419 = vadd.f32 %v2321, %v2418
    %v2420 = vpop.f32.mrf.mxu0
    %2421 = vdwg.mxu0
    %2422 = vrot.lane.b32.xlu0 %v107, 124
    %v2423 = vpop.permute.xlu0 %2422
    %2424 = vrot.lane.b32.xlu0 %v108, 124
    %v2425 = vpop.permute.xlu0 %2424
    %2426 = vrot.lane.b32.xlu0 %v109, 124
    %v2427 = vpop.permute.xlu0 %2426
    %2428 = vrot.lane.b32.xlu0 %v110, 124
    %v2429 = vpop.permute.xlu0 %2428
    %2430 = vrot.lane.b32.xlu0 %v111, 124
    %v2431 = vpop.permute.xlu0 %2430
    %2432 = vrot.lane.b32.xlu0 %v112, 124
    %v2433 = vpop.permute.xlu0 %2432
    %2434 = vrot.lane.b32.xlu0 %v113, 124
    %v2435 = vpop.permute.xlu0 %2434
    %v2443 = vsel %vm1020, %v2404, 0
    %v2446 = vsel %vm1020, %v2409, 0
    %v2449 = vsel %vm1020, %v2414, 0
    %v2452 = vsel %vm1020, %v2419, 0
    %v2454 = vsel %vm467, %v2435, 0
    %2456 = vmatprep.subr.mxu0 0.0
    %2457 = vmatpush1.msra.mxu0 0.0
    %2458 = vmatprep.subr.mxu0 0.0
    %2459 = vmatpush1.msra.mxu0 0.0
    %2460 = vmatprep.subr.mxu0 0.0
    %2461 = vmatpush1.msra.mxu0 0.0
    %2462 = vmatprep.subr.mxu0 0.0
    %2463 = vmatpush1.msra.mxu0 0.0
    %2464 = vmatprep.subr.mxu0 0.0
    %2465 = vmatpush1.msra.mxu0 0.0
    %2466 = vmatprep.subr.mxu0 0.0
    %2467 = vmatpush1.msra.mxu0 0.0
    %2468 = vmatprep.subr.mxu0 0.0
    %2469 = vmatpush1.msra.mxu0 0.0
    %2470 = vmatprep.subr.mxu0 0.0
    %2471 = vmatpush1.msra.mxu0 0.0
    %2472 = vmatprep.subr.mxu0 0.0
    %2473 = vmatpush1.msra.mxu0 0.0
    %2474 = vmatprep.subr.mxu0 0.0
    %2475 = vmatpush1.msra.mxu0 %v2454
    %2476 = vmatprep.subr.mxu0 0.0
    %2477 = vmatpush1.msra.mxu0 %v2433
    %2478 = vmatprep.subr.mxu0 0.0
    %2479 = vmatpush1.msra.mxu0 %v2431
    %2480 = vmatprep.subr.mxu0 0.0
    %2481 = vmatpush1.msra.mxu0 %v2429
    %2482 = vmatprep.subr.mxu0 0.0
    %2483 = vmatpush1.msra.mxu0 %v2427
    %2484 = vmatprep.subr.mxu0 0.0
    %2485 = vmatpush1.msra.mxu0 %v2425
    %2486 = vmatprep.subr.mxu0 0.0
    %2487 = vmatpush1.msra.mxu0 %v2423
    %2488 = vmatprep.subr.mxu0 0.0
    %2489 = vmatpush2.msra.mxu0 0.0
    %2490 = vmatprep.subr.mxu0 0.0
    %2491 = vmatpush2.msra.mxu0 0.0
    %2492 = vmatprep.subr.mxu0 0.0
    %2493 = vmatpush2.msra.mxu0 0.0
    %2494 = vmatprep.subr.mxu0 0.0
    %2495 = vmatpush2.msra.mxu0 0.0
    %2496 = vmatprep.subr.mxu0 0.0
    %2497 = vmatpush2.msra.mxu0 0.0
    %2498 = vmatprep.subr.mxu0 0.0
    %2499 = vmatpush2.msra.mxu0 0.0
    %2500 = vmatprep.subr.mxu0 0.0
    %2501 = vmatpush2.msra.mxu0 0.0
    %2502 = vmatprep.subr.mxu0 0.0
    %2503 = vmatpush2.msra.mxu0 0.0
    %2504 = vmatprep.subr.mxu0 0.0
    %2505 = vmatpush2.msra.mxu0 0.0
    %2506 = vmatprep.subr.mxu0 0.0
    %2507 = vmatpush2.msra.mxu0 0.0
    %2508 = vmatprep.subr.mxu0 0.0
    %2509 = vmatpush2.msra.mxu0 0.0
    %2510 = vmatprep.subr.mxu0 0.0
    %2511 = vmatpush2.msra.mxu0 0.0
    %2512 = vmatprep.subr.mxu0 0.0
    %2513 = vmatpush2.msra.mxu0 0.0
    %2514 = vmatprep.subr.mxu0 0.0
    %2515 = vmatpush2.msra.mxu0 0.0
    %2516 = vmatprep.subr.mxu0 0.0
    %2517 = vmatpush2.msra.mxu0 0.0
    %2518 = vmatprep.subr.mxu0 0.0
    %2519 = vmatpush2.msra.mxu0 0.0
    %2520 = vmatprep.mubr.f32.mxu0 0.0
    %2521 = vmatmul.mubr.f32.gmra.mxu0 %v2443
    %v2522 = vpop.f32.mrf.mxu0
    %v2523 = vadd.f32 0.0, %v2522
    %v2524 = vpop.f32.mrf.mxu0
    %2525 = vmatprep.mubr.f32.mxu0 0.0
    %2526 = vmatmul.mubr.f32.gmra.mxu0 %v2446
    %v2527 = vpop.f32.mrf.mxu0
    %v2528 = vadd.f32 0.0, %v2527
    %v2529 = vpop.f32.mrf.mxu0
    %2530 = vmatprep.mubr.f32.mxu0 0.0
    %2531 = vmatmul.mubr.f32.gmra.mxu0 %v2449
    %v2532 = vpop.f32.mrf.mxu0
    %v2533 = vadd.f32 0.0, %v2532
    %v2534 = vpop.f32.mrf.mxu0
    %2535 = vmatprep.mubr.f32.mxu0 0.0
    %2536 = vmatmul.mubr.f32.gmra.mxu0 %v2452
    %v2537 = vpop.f32.mrf.mxu0
    %v2538 = vadd.f32 0.0, %v2537
    %v2539 = vpop.f32.mrf.mxu0
    %2540 = vdwg.mxu0
    %v2541 = vmul.f32 %v2523, 0.05882353
    %v2542 = vmul.f32 %v2528, 0.05882353
    %v2543 = vmul.f32 %v2533, 0.05882353
    %v2544 = vmul.f32 %v2538, 0.05882353
    %v2546 = vsel %vm460, %v2541, 0
    %v2549 = vsel %vm460, %v2542, 0
    %v2552 = vsel %vm460, %v2543, 0
    %v2555 = vsel %vm460, %v2544, 0
    %2557 = vmatprep.subr.mxu0 0.0
    %2558 = vmatpush1.msra.mxu0 0.0
    %2559 = vmatprep.subr.mxu0 0.0
    %2560 = vmatpush1.msra.mxu0 0.0
    %2561 = vmatprep.subr.mxu0 0.0
    %2562 = vmatpush1.msra.mxu0 0.0
    %2563 = vmatprep.subr.mxu0 0.0
    %2564 = vmatpush1.msra.mxu0 0.0
    %2565 = vmatprep.subr.mxu0 0.0
    %2566 = vmatpush1.msra.mxu0 0.0
    %2567 = vmatprep.subr.mxu0 0.0
    %2568 = vmatpush1.msra.mxu0 0.0
    %2569 = vmatprep.subr.mxu0 0.0
    %2570 = vmatpush1.msra.mxu0 0.0
    %2571 = vmatprep.subr.mxu0 0.0
    %2572 = vmatpush1.msra.mxu0 0.0
    %2573 = vmatprep.subr.mxu0 0.0
    %2574 = vmatpush1.msra.mxu0 0.0
    %2575 = vmatprep.subr.mxu0 0.0
    %2576 = vmatpush1.msra.mxu0 0.0
    %2577 = vmatprep.subr.mxu0 0.0
    %2578 = vmatpush1.msra.mxu0 0.0
    %2579 = vmatprep.subr.mxu0 0.0
    %2580 = vmatpush1.msra.mxu0 0.0
    %2581 = vmatprep.subr.mxu0 0.0
    %2582 = vmatpush1.msra.mxu0 0.0
    %2583 = vmatprep.subr.mxu0 0.0
    %2584 = vmatpush1.msra.mxu0 0.0
    %2585 = vmatprep.subr.mxu0 0.0
    %2586 = vmatpush1.msra.mxu0 0.0
    %2587 = vmatprep.subr.mxu0 0.0
    %2588 = vmatpush1.msra.mxu0 %v1200
    %2589 = vmatprep.subr.mxu0 0.0
    %2590 = vmatpush2.msra.mxu0 0.0
    %2591 = vmatprep.subr.mxu0 0.0
    %2592 = vmatpush2.msra.mxu0 0.0
    %2593 = vmatprep.subr.mxu0 0.0
    %2594 = vmatpush2.msra.mxu0 0.0
    %2595 = vmatprep.subr.mxu0 0.0
    %2596 = vmatpush2.msra.mxu0 0.0
    %2597 = vmatprep.subr.mxu0 0.0
    %2598 = vmatpush2.msra.mxu0 0.0
    %2599 = vmatprep.subr.mxu0 0.0
    %2600 = vmatpush2.msra.mxu0 0.0
    %2601 = vmatprep.subr.mxu0 0.0
    %2602 = vmatpush2.msra.mxu0 0.0
    %2603 = vmatprep.subr.mxu0 0.0
    %2604 = vmatpush2.msra.mxu0 0.0
    %2605 = vmatprep.subr.mxu0 0.0
    %2606 = vmatpush2.msra.mxu0 0.0
    %2607 = vmatprep.subr.mxu0 0.0
    %2608 = vmatpush2.msra.mxu0 0.0
    %2609 = vmatprep.subr.mxu0 0.0
    %2610 = vmatpush2.msra.mxu0 0.0
    %2611 = vmatprep.subr.mxu0 0.0
    %2612 = vmatpush2.msra.mxu0 0.0
    %2613 = vmatprep.subr.mxu0 0.0
    %2614 = vmatpush2.msra.mxu0 0.0
    %2615 = vmatprep.subr.mxu0 0.0
    %2616 = vmatpush2.msra.mxu0 0.0
    %2617 = vmatprep.subr.mxu0 0.0
    %2618 = vmatpush2.msra.mxu0 0.0
    %2619 = vmatprep.subr.mxu0 0.0
    %2620 = vmatpush2.msra.mxu0 0.0
    %2621 = vmatprep.mubr.f32.mxu0 0.0
    %2622 = vmatmul.mubr.f32.gmra.mxu0 %v2546
    %v2623 = vpop.f32.mrf.mxu0
    %v2624 = vadd.f32 0.0, %v2623
    %v2625 = vpop.f32.mrf.mxu0
    %2626 = vmatprep.mubr.f32.mxu0 0.0
    %2627 = vmatmul.mubr.f32.gmra.mxu0 %v2549
    %v2628 = vpop.f32.mrf.mxu0
    %v2629 = vadd.f32 0.0, %v2628
    %v2630 = vpop.f32.mrf.mxu0
    %2631 = vmatprep.mubr.f32.mxu0 0.0
    %2632 = vmatmul.mubr.f32.gmra.mxu0 %v2552
    %v2633 = vpop.f32.mrf.mxu0
    %v2634 = vadd.f32 0.0, %v2633
    %v2635 = vpop.f32.mrf.mxu0
    %2636 = vmatprep.mubr.f32.mxu0 0.0
    %2637 = vmatmul.mubr.f32.gmra.mxu0 %v2555
    %v2638 = vpop.f32.mrf.mxu0
    %v2639 = vadd.f32 0.0, %v2638
    %v2640 = vpop.f32.mrf.mxu0
    %2641 = vdwg.mxu0
    %v2642 = vsub.f32 %v2404, %v2624
    %v2643 = vsub.f32 %v2409, %v2629
    %v2644 = vsub.f32 %v2414, %v2634
    %v2645 = vsub.f32 %v2419, %v2639
    %v2646 = vmul.f32 %v2642, %v2642
    %v2647 = vmul.f32 %v2643, %v2643
    %v2648 = vmul.f32 %v2644, %v2644
    %v2649 = vmul.f32 %v2645, %v2645
    %v2651 = vsel %vm1020, %v2646, 0
    %v2654 = vsel %vm1020, %v2647, 0
    %v2657 = vsel %vm1020, %v2648, 0
    %v2660 = vsel %vm1020, %v2649, 0
    %2662 = vmatprep.subr.mxu0 0.0
    %2663 = vmatpush1.msra.mxu0 0.0
    %2664 = vmatprep.subr.mxu0 0.0
    %2665 = vmatpush1.msra.mxu0 0.0
    %2666 = vmatprep.subr.mxu0 0.0
    %2667 = vmatpush1.msra.mxu0 0.0
    %2668 = vmatprep.subr.mxu0 0.0
    %2669 = vmatpush1.msra.mxu0 0.0
    %2670 = vmatprep.subr.mxu0 0.0
    %2671 = vmatpush1.msra.mxu0 0.0
    %2672 = vmatprep.subr.mxu0 0.0
    %2673 = vmatpush1.msra.mxu0 0.0
    %2674 = vmatprep.subr.mxu0 0.0
    %2675 = vmatpush1.msra.mxu0 0.0
    %2676 = vmatprep.subr.mxu0 0.0
    %2677 = vmatpush1.msra.mxu0 0.0
    %2678 = vmatprep.subr.mxu0 0.0
    %2679 = vmatpush1.msra.mxu0 0.0
    %2680 = vmatprep.subr.mxu0 0.0
    %2681 = vmatpush1.msra.mxu0 %v2454
    %2682 = vmatprep.subr.mxu0 0.0
    %2683 = vmatpush1.msra.mxu0 %v2433
    %2684 = vmatprep.subr.mxu0 0.0
    %2685 = vmatpush1.msra.mxu0 %v2431
    %2686 = vmatprep.subr.mxu0 0.0
    %2687 = vmatpush1.msra.mxu0 %v2429
    %2688 = vmatprep.subr.mxu0 0.0
    %2689 = vmatpush1.msra.mxu0 %v2427
    %2690 = vmatprep.subr.mxu0 0.0
    %2691 = vmatpush1.msra.mxu0 %v2425
    %2692 = vmatprep.subr.mxu0 0.0
    %2693 = vmatpush1.msra.mxu0 %v2423
    %2694 = vmatprep.subr.mxu0 0.0
    %2695 = vmatpush2.msra.mxu0 0.0
    %2696 = vmatprep.subr.mxu0 0.0
    %2697 = vmatpush2.msra.mxu0 0.0
    %2698 = vmatprep.subr.mxu0 0.0
    %2699 = vmatpush2.msra.mxu0 0.0
    %2700 = vmatprep.subr.mxu0 0.0
    %2701 = vmatpush2.msra.mxu0 0.0
    %2702 = vmatprep.subr.mxu0 0.0
    %2703 = vmatpush2.msra.mxu0 0.0
    %2704 = vmatprep.subr.mxu0 0.0
    %2705 = vmatpush2.msra.mxu0 0.0
    %2706 = vmatprep.subr.mxu0 0.0
    %2707 = vmatpush2.msra.mxu0 0.0
    %2708 = vmatprep.subr.mxu0 0.0
    %2709 = vmatpush2.msra.mxu0 0.0
    %2710 = vmatprep.subr.mxu0 0.0
    %2711 = vmatpush2.msra.mxu0 0.0
    %2712 = vmatprep.subr.mxu0 0.0
    %2713 = vmatpush2.msra.mxu0 0.0
    %2714 = vmatprep.subr.mxu0 0.0
    %2715 = vmatpush2.msra.mxu0 0.0
    %2716 = vmatprep.subr.mxu0 0.0
    %2717 = vmatpush2.msra.mxu0 0.0
    %2718 = vmatprep.subr.mxu0 0.0
    %2719 = vmatpush2.msra.mxu0 0.0
    %2720 = vmatprep.subr.mxu0 0.0
    %2721 = vmatpush2.msra.mxu0 0.0
    %2722 = vmatprep.subr.mxu0 0.0
    %2723 = vmatpush2.msra.mxu0 0.0
    %2724 = vmatprep.subr.mxu0 0.0
    %2725 = vmatpush2.msra.mxu0 0.0
    %2726 = vmatprep.mubr.f32.mxu0 0.0
    %2727 = vmatmul.mubr.f32.gmra.mxu0 %v2651
    %v2728 = vpop.f32.mrf.mxu0
    %v2729 = vadd.f32 0.0, %v2728
    %v2730 = vpop.f32.mrf.mxu0
    %2731 = vmatprep.mubr.f32.mxu0 0.0
    %2732 = vmatmul.mubr.f32.gmra.mxu0 %v2654
    %v2733 = vpop.f32.mrf.mxu0
    %v2734 = vadd.f32 0.0, %v2733
    %v2735 = vpop.f32.mrf.mxu0
    %2736 = vmatprep.mubr.f32.mxu0 0.0
    %2737 = vmatmul.mubr.f32.gmra.mxu0 %v2657
    %v2738 = vpop.f32.mrf.mxu0
    %v2739 = vadd.f32 0.0, %v2738
    %v2740 = vpop.f32.mrf.mxu0
    %2741 = vmatprep.mubr.f32.mxu0 0.0
    %2742 = vmatmul.mubr.f32.gmra.mxu0 %v2660
    %v2743 = vpop.f32.mrf.mxu0
    %v2744 = vadd.f32 0.0, %v2743
    %v2745 = vpop.f32.mrf.mxu0
    %2746 = vdwg.mxu0
    %v2747 = vmul.f32 %v2729, 0.05882353
    %v2748 = vmul.f32 %v2734, 0.05882353
    %v2749 = vmul.f32 %v2739, 0.05882353
    %v2750 = vmul.f32 %v2744, 0.05882353
    %v2751 = vadd.f32 %v2747, 1e-05
    %v2752 = vadd.f32 %v2748, 1e-05
    %v2753 = vadd.f32 %v2749, 1e-05
    %v2754 = vadd.f32 %v2750, 1e-05
    %v2755 = vrsqrt.pop %v2751
    %v2756 = vrsqrt.pop %v2752
    %v2757 = vrsqrt.pop %v2753
    %v2758 = vrsqrt.pop %v2754
    %v2760 = vsel %vm460, %v2755, 0
    %v2763 = vsel %vm460, %v2756, 0
    %v2766 = vsel %vm460, %v2757, 0
    %v2769 = vsel %vm460, %v2758, 0
    %2771 = vmatprep.subr.mxu0 0.0
    %2772 = vmatpush1.msra.mxu0 0.0
    %2773 = vmatprep.subr.mxu0 0.0
    %2774 = vmatpush1.msra.mxu0 0.0
    %2775 = vmatprep.subr.mxu0 0.0
    %2776 = vmatpush1.msra.mxu0 0.0
    %2777 = vmatprep.subr.mxu0 0.0
    %2778 = vmatpush1.msra.mxu0 0.0
    %2779 = vmatprep.subr.mxu0 0.0
    %2780 = vmatpush1.msra.mxu0 0.0
    %2781 = vmatprep.subr.mxu0 0.0
    %2782 = vmatpush1.msra.mxu0 0.0
    %2783 = vmatprep.subr.mxu0 0.0
    %2784 = vmatpush1.msra.mxu0 0.0
    %2785 = vmatprep.subr.mxu0 0.0
    %2786 = vmatpush1.msra.mxu0 0.0
    %2787 = vmatprep.subr.mxu0 0.0
    %2788 = vmatpush1.msra.mxu0 0.0
    %2789 = vmatprep.subr.mxu0 0.0
    %2790 = vmatpush1.msra.mxu0 0.0
    %2791 = vmatprep.subr.mxu0 0.0
    %2792 = vmatpush1.msra.mxu0 0.0
    %2793 = vmatprep.subr.mxu0 0.0
    %2794 = vmatpush1.msra.mxu0 0.0
    %2795 = vmatprep.subr.mxu0 0.0
    %2796 = vmatpush1.msra.mxu0 0.0
    %2797 = vmatprep.subr.mxu0 0.0
    %2798 = vmatpush1.msra.mxu0 0.0
    %2799 = vmatprep.subr.mxu0 0.0
    %2800 = vmatpush1.msra.mxu0 0.0
    %2801 = vmatprep.subr.mxu0 0.0
    %2802 = vmatpush1.msra.mxu0 %v1200
    %2803 = vmatprep.subr.mxu0 0.0
    %2804 = vmatpush2.msra.mxu0 0.0
    %2805 = vmatprep.subr.mxu0 0.0
    %2806 = vmatpush2.msra.mxu0 0.0
    %2807 = vmatprep.subr.mxu0 0.0
    %2808 = vmatpush2.msra.mxu0 0.0
    %2809 = vmatprep.subr.mxu0 0.0
    %2810 = vmatpush2.msra.mxu0 0.0
    %2811 = vmatprep.subr.mxu0 0.0
    %2812 = vmatpush2.msra.mxu0 0.0
    %2813 = vmatprep.subr.mxu0 0.0
    %2814 = vmatpush2.msra.mxu0 0.0
    %2815 = vmatprep.subr.mxu0 0.0
    %2816 = vmatpush2.msra.mxu0 0.0
    %2817 = vmatprep.subr.mxu0 0.0
    %2818 = vmatpush2.msra.mxu0 0.0
    %2819 = vmatprep.subr.mxu0 0.0
    %2820 = vmatpush2.msra.mxu0 0.0
    %2821 = vmatprep.subr.mxu0 0.0
    %2822 = vmatpush2.msra.mxu0 0.0
    %2823 = vmatprep.subr.mxu0 0.0
    %2824 = vmatpush2.msra.mxu0 0.0
    %2825 = vmatprep.subr.mxu0 0.0
    %2826 = vmatpush2.msra.mxu0 0.0
    %2827 = vmatprep.subr.mxu0 0.0
    %2828 = vmatpush2.msra.mxu0 0.0
    %2829 = vmatprep.subr.mxu0 0.0
    %2830 = vmatpush2.msra.mxu0 0.0
    %2831 = vmatprep.subr.mxu0 0.0
    %2832 = vmatpush2.msra.mxu0 0.0
    %2833 = vmatprep.subr.mxu0 0.0
    %2834 = vmatpush2.msra.mxu0 0.0
    %2835 = vmatprep.mubr.f32.mxu0 0.0
    %2836 = vmatmul.mubr.f32.gmra.mxu0 %v2760
    %v2837 = vpop.f32.mrf.mxu0
    %v2838 = vadd.f32 0.0, %v2837
    %v2839 = vpop.f32.mrf.mxu0
    %2840 = vmatprep.mubr.f32.mxu0 0.0
    %2841 = vmatmul.mubr.f32.gmra.mxu0 %v2763
    %v2842 = vpop.f32.mrf.mxu0
    %v2843 = vadd.f32 0.0, %v2842
    %v2844 = vpop.f32.mrf.mxu0
    %2845 = vmatprep.mubr.f32.mxu0 0.0
    %2846 = vmatmul.mubr.f32.gmra.mxu0 %v2766
    %v2847 = vpop.f32.mrf.mxu0
    %v2848 = vadd.f32 0.0, %v2847
    %v2849 = vpop.f32.mrf.mxu0
    %2850 = vmatprep.mubr.f32.mxu0 0.0
    %2851 = vmatmul.mubr.f32.gmra.mxu0 %v2769
    %v2852 = vpop.f32.mrf.mxu0
    %v2853 = vadd.f32 0.0, %v2852
    %v2854 = vpop.f32.mrf.mxu0
    %2855 = vdwg.mxu0
    %v2856 = vmul.f32 %v2642, %v2838
    %v2857 = vmul.f32 %v2643, %v2843
    %v2858 = vmul.f32 %v2644, %v2848
    %v2859 = vmul.f32 %v2645, %v2853
    %v2860 = vlaneseq
    %v2861 = vshrl.u32 %v2860, 7
    %v2862 = vsub.s32 0, %v2861
    %v2863 = vrot.slane %v123, %v2862
    %v2864 = vmul.f32 %v2856, %v2863
    %v2865 = vmul.f32 %v2857, %v2863
    %v2866 = vmul.f32 %v2858, %v2863
    %v2867 = vmul.f32 %v2859, %v2863
    %v2868 = vlaneseq
    %v2869 = vshrl.u32 %v2868, 7
    %v2870 = vsub.s32 0, %v2869
    %v2871 = vrot.slane %v124, %v2870
    %v2872 = vadd.f32 %v2864, %v2871
    %v2873 = vadd.f32 %v2865, %v2871
    %v2874 = vadd.f32 %v2866, %v2871
    %v2875 = vadd.f32 %v2867, %v2871
    %vm2876 = vcmask 138240
    %v2878 = vsel %vm2876, %v2872, 0
    %v2881 = vsel %vm2876, %v2873, 0
    %v2884 = vsel %vm2876, %v2874, 0
    %v2887 = vsel %vm2876, %v2875, 0
    %vm2889 = vcmask 1040384
    %v2891 = vsel %vm2889, %v131, 0
    %v2894 = vsel %vm2889, %v132, 0
    %v2897 = vsel %vm2889, %v133, 0
    %2899 = vmatprep.subr.mxu0 0.0
    %2900 = vmatpush1.msra.mxu0 0.0
    %2901 = vmatprep.subr.mxu0 0.0
    %2902 = vmatpush1.msra.mxu0 0.0
    %2903 = vmatprep.subr.mxu0 0.0
    %2904 = vmatpush1.msra.mxu0 0.0
    %2905 = vmatprep.subr.mxu0 0.0
    %2906 = vmatpush1.msra.mxu0 0.0
    %2907 = vmatprep.subr.mxu0 0.0
    %2908 = vmatpush1.msra.mxu0 0.0
    %2909 = vmatprep.subr.mxu0 0.0
    %2910 = vmatpush1.msra.mxu0 0.0
    %2911 = vmatprep.subr.mxu0 0.0
    %2912 = vmatpush1.msra.mxu0 0.0
    %2913 = vmatprep.subr.mxu0 0.0
    %2914 = vmatpush1.msra.mxu0 0.0
    %2915 = vmatprep.subr.mxu0 0.0
    %2916 = vmatpush1.msra.mxu0 0.0
    %2917 = vmatprep.subr.mxu0 0.0
    %2918 = vmatpush1.msra.mxu0 0.0
    %2919 = vmatprep.subr.mxu0 0.0
    %2920 = vmatpush1.msra.mxu0 0.0
    %2921 = vmatprep.subr.mxu0 0.0
    %2922 = vmatpush1.msra.mxu0 0.0
    %2923 = vmatprep.subr.mxu0 0.0
    %2924 = vmatpush1.msra.mxu0 0.0
    %2925 = vmatprep.subr.mxu0 %v2894
    %2926 = vmatpush1.msra.mxu0 %v2891
    %2927 = vmatprep.subr.mxu0 %v129
    %2928 = vmatpush1.msra.mxu0 %v128
    %2929 = vmatprep.subr.mxu0 %v126
    %2930 = vmatpush1.msra.mxu0 %v125
    %2931 = vmatprep.subr.mxu0 0.0
    %2932 = vmatpush2.msra.mxu0 0.0
    %2933 = vmatprep.subr.mxu0 0.0
    %2934 = vmatpush2.msra.mxu0 0.0
    %2935 = vmatprep.subr.mxu0 0.0
    %2936 = vmatpush2.msra.mxu0 0.0
    %2937 = vmatprep.subr.mxu0 0.0
    %2938 = vmatpush2.msra.mxu0 0.0
    %2939 = vmatprep.subr.mxu0 0.0
    %2940 = vmatpush2.msra.mxu0 0.0
    %2941 = vmatprep.subr.mxu0 0.0
    %2942 = vmatpush2.msra.mxu0 0.0
    %2943 = vmatprep.subr.mxu0 0.0
    %2944 = vmatpush2.msra.mxu0 0.0
    %2945 = vmatprep.subr.mxu0 0.0
    %2946 = vmatpush2.msra.mxu0 0.0
    %2947 = vmatprep.subr.mxu0 0.0
    %2948 = vmatpush2.msra.mxu0 0.0
    %2949 = vmatprep.subr.mxu0 0.0
    %2950 = vmatpush2.msra.mxu0 0.0
    %2951 = vmatprep.subr.mxu0 0.0
    %2952 = vmatpush2.msra.mxu0 0.0
    %2953 = vmatprep.subr.mxu0 0.0
    %2954 = vmatpush2.msra.mxu0 0.0
    %2955 = vmatprep.subr.mxu0 0.0
    %2956 = vmatpush2.msra.mxu0 0.0
    %2957 = vmatprep.subr.mxu0 0.0
    %2958 = vmatpush2.msra.mxu0 0.0
    %2959 = vmatprep.subr.mxu0 0.0
    %2960 = vmatpush2.msra.mxu0 0.0
    %2961 = vmatprep.subr.mxu0 0.0
    %2962 = vmatpush2.msra.mxu0 0.0
    %2963 = vmatprep.mubr.f32.mxu0 0.0
    %2964 = vmatmul.mubr.f32.gmra.mxu0 %v2878
    %v2965 = vpop.f32.mrf.mxu0
    %v2966 = vadd.f32 0.0, %v2965
    %v2967 = vpop.f32.mrf.mxu0
    %v2968 = vadd.f32 0.0, %v2967
    %2969 = vmatprep.mubr.f32.mxu0 0.0
    %2970 = vmatmul.mubr.f32.gmra.mxu0 %v2881
    %v2971 = vpop.f32.mrf.mxu0
    %v2972 = vadd.f32 0.0, %v2971
    %v2973 = vpop.f32.mrf.mxu0
    %v2974 = vadd.f32 0.0, %v2973
    %2975 = vmatprep.mubr.f32.mxu0 0.0
    %2976 = vmatmul.mubr.f32.gmra.mxu0 %v2884
    %v2977 = vpop.f32.mrf.mxu0
    %v2978 = vadd.f32 0.0, %v2977
    %v2979 = vpop.f32.mrf.mxu0
    %v2980 = vadd.f32 0.0, %v2979
    %2981 = vmatprep.mubr.f32.mxu0 0.0
    %2982 = vmatmul.mubr.f32.gmra.mxu0 %v2887
    %v2983 = vpop.f32.mrf.mxu0
    %v2984 = vadd.f32 0.0, %v2983
    %v2985 = vpop.f32.mrf.mxu0
    %v2986 = vadd.f32 0.0, %v2985
    %2987 = vdwg.mxu0
    %2988 = vmatprep.subr.mxu0 0.0
    %2989 = vmatpush1.msra.mxu0 0.0
    %2990 = vmatprep.subr.mxu0 0.0
    %2991 = vmatpush1.msra.mxu0 0.0
    %2992 = vmatprep.subr.mxu0 0.0
    %2993 = vmatpush1.msra.mxu0 0.0
    %2994 = vmatprep.subr.mxu0 0.0
    %2995 = vmatpush1.msra.mxu0 0.0
    %2996 = vmatprep.subr.mxu0 0.0
    %2997 = vmatpush1.msra.mxu0 0.0
    %2998 = vmatprep.subr.mxu0 0.0
    %2999 = vmatpush1.msra.mxu0 0.0
    %3000 = vmatprep.subr.mxu0 0.0
    %3001 = vmatpush1.msra.mxu0 0.0
    %3002 = vmatprep.subr.mxu0 0.0
    %3003 = vmatpush1.msra.mxu0 0.0
    %3004 = vmatprep.subr.mxu0 0.0
    %3005 = vmatpush1.msra.mxu0 0.0
    %3006 = vmatprep.subr.mxu0 0.0
    %3007 = vmatpush1.msra.mxu0 0.0
    %3008 = vmatprep.subr.mxu0 0.0
    %3009 = vmatpush1.msra.mxu0 0.0
    %3010 = vmatprep.subr.mxu0 0.0
    %3011 = vmatpush1.msra.mxu0 0.0
    %3012 = vmatprep.subr.mxu0 0.0
    %3013 = vmatpush1.msra.mxu0 0.0
    %3014 = vmatprep.subr.mxu0 0.0
    %3015 = vmatpush1.msra.mxu0 %v2897
    %3016 = vmatprep.subr.mxu0 0.0
    %3017 = vmatpush1.msra.mxu0 %v130
    %3018 = vmatprep.subr.mxu0 0.0
    %3019 = vmatpush1.msra.mxu0 %v127
    %3020 = vmatprep.subr.mxu0 0.0
    %3021 = vmatpush2.msra.mxu0 0.0
    %3022 = vmatprep.subr.mxu0 0.0
    %3023 = vmatpush2.msra.mxu0 0.0
    %3024 = vmatprep.subr.mxu0 0.0
    %3025 = vmatpush2.msra.mxu0 0.0
    %3026 = vmatprep.subr.mxu0 0.0
    %3027 = vmatpush2.msra.mxu0 0.0
    %3028 = vmatprep.subr.mxu0 0.0
    %3029 = vmatpush2.msra.mxu0 0.0
    %3030 = vmatprep.subr.mxu0 0.0
    %3031 = vmatpush2.msra.mxu0 0.0
    %3032 = vmatprep.subr.mxu0 0.0
    %3033 = vmatpush2.msra.mxu0 0.0
    %3034 = vmatprep.subr.mxu0 0.0
    %3035 = vmatpush2.msra.mxu0 0.0
    %3036 = vmatprep.subr.mxu0 0.0
    %3037 = vmatpush2.msra.mxu0 0.0
    %3038 = vmatprep.subr.mxu0 0.0
    %3039 = vmatpush2.msra.mxu0 0.0
    %3040 = vmatprep.subr.mxu0 0.0
    %3041 = vmatpush2.msra.mxu0 0.0
    %3042 = vmatprep.subr.mxu0 0.0
    %3043 = vmatpush2.msra.mxu0 0.0
    %3044 = vmatprep.subr.mxu0 0.0
    %3045 = vmatpush2.msra.mxu0 0.0
    %3046 = vmatprep.subr.mxu0 0.0
    %3047 = vmatpush2.msra.mxu0 0.0
    %3048 = vmatprep.subr.mxu0 0.0
    %3049 = vmatpush2.msra.mxu0 0.0
    %3050 = vmatprep.subr.mxu0 0.0
    %3051 = vmatpush2.msra.mxu0 0.0
    %3052 = vmatprep.mubr.f32.mxu0 0.0
    %3053 = vmatmul.mubr.f32.gmra.mxu0 %v2878
    %v3054 = vpop.f32.mrf.mxu0
    %v3055 = vadd.f32 0.0, %v3054
    %v3056 = vpop.f32.mrf.mxu0
    %3057 = vmatprep.mubr.f32.mxu0 0.0
    %3058 = vmatmul.mubr.f32.gmra.mxu0 %v2881
    %v3059 = vpop.f32.mrf.mxu0
    %v3060 = vadd.f32 0.0, %v3059
    %v3061 = vpop.f32.mrf.mxu0
    %3062 = vmatprep.mubr.f32.mxu0 0.0
    %3063 = vmatmul.mubr.f32.gmra.mxu0 %v2884
    %v3064 = vpop.f32.mrf.mxu0
    %v3065 = vadd.f32 0.0, %v3064
    %v3066 = vpop.f32.mrf.mxu0
    %3067 = vmatprep.mubr.f32.mxu0 0.0
    %3068 = vmatmul.mubr.f32.gmra.mxu0 %v2887
    %v3069 = vpop.f32.mrf.mxu0
    %v3070 = vadd.f32 0.0, %v3069
    %v3071 = vpop.f32.mrf.mxu0
    %3072 = vdwg.mxu0
    %v3073 = vmul.f32 %v2966, %v52
    %v3074 = vmul.f32 %v2968, %v53
    %v3075 = vmul.f32 %v3055, %v54
    %v3076 = vmul.f32 %v2972, %v58
    %v3077 = vmul.f32 %v2974, %v59
    %v3078 = vmul.f32 %v3060, %v60
    %v3079 = vmul.f32 %v2978, %v64
    %v3080 = vmul.f32 %v2980, %v65
    %v3081 = vmul.f32 %v3065, %v66
    %v3082 = vmul.f32 %v2984, %v70
    %v3083 = vmul.f32 %v2986, %v71
    %v3084 = vmul.f32 %v3070, %v72
    %3085 = vmatprep.subr.mxu0 0.0
    %3086 = vmatpush1.msra.mxu0 0.0
    %3087 = vmatprep.subr.mxu0 0.0
    %3088 = vmatpush1.msra.mxu0 0.0
    %3089 = vmatprep.subr.mxu0 0.0
    %3090 = vmatpush1.msra.mxu0 0.0
    %3091 = vmatprep.subr.mxu0 0.0
    %3092 = vmatpush1.msra.mxu0 0.0
    %3093 = vmatprep.subr.mxu0 0.0
    %3094 = vmatpush1.msra.mxu0 0.0
    %3095 = vmatprep.subr.mxu0 0.0
    %3096 = vmatpush1.msra.mxu0 0.0
    %3097 = vmatprep.subr.mxu0 0.0
    %3098 = vmatpush1.msra.mxu0 0.0
    %3099 = vmatprep.subr.mxu0 0.0
    %3100 = vmatpush1.msra.mxu0 0.0
    %3101 = vmatprep.subr.mxu0 0.0
    %3102 = vmatpush1.msra.mxu0 0.0
    %3103 = vmatprep.subr.mxu0 0.0
    %3104 = vmatpush1.msra.mxu0 0.0
    %3105 = vmatprep.subr.mxu0 0.0
    %3106 = vmatpush1.msra.mxu0 0.0
    %3107 = vmatprep.subr.mxu0 0.0
    %3108 = vmatpush1.msra.mxu0 0.0
    %3109 = vmatprep.subr.mxu0 %v3083
    %3110 = vmatpush1.msra.mxu0 %v3082
    %3111 = vmatprep.subr.mxu0 %v3080
    %3112 = vmatpush1.msra.mxu0 %v3079
    %3113 = vmatprep.subr.mxu0 %v3077
    %3114 = vmatpush1.msra.mxu0 %v3076
    %3115 = vmatprep.subr.mxu0 %v3074
    %3116 = vmatpush1.msra.mxu0 %v3073
    %3117 = vmatprep.subr.mxu0 0.0
    %3118 = vmatpush2.msra.mxu0 0.0
    %3119 = vmatprep.subr.mxu0 0.0
    %3120 = vmatpush2.msra.mxu0 0.0
    %3121 = vmatprep.subr.mxu0 0.0
    %3122 = vmatpush2.msra.mxu0 0.0
    %3123 = vmatprep.subr.mxu0 0.0
    %3124 = vmatpush2.msra.mxu0 0.0
    %3125 = vmatprep.subr.mxu0 0.0
    %3126 = vmatpush2.msra.mxu0 0.0
    %3127 = vmatprep.subr.mxu0 0.0
    %3128 = vmatpush2.msra.mxu0 0.0
    %3129 = vmatprep.subr.mxu0 0.0
    %3130 = vmatpush2.msra.mxu0 0.0
    %3131 = vmatprep.subr.mxu0 0.0
    %3132 = vmatpush2.msra.mxu0 0.0
    %3133 = vmatprep.subr.mxu0 0.0
    %3134 = vmatpush2.msra.mxu0 0.0
    %3135 = vmatprep.subr.mxu0 0.0
    %3136 = vmatpush2.msra.mxu0 0.0
    %3137 = vmatprep.subr.mxu0 0.0
    %3138 = vmatpush2.msra.mxu0 0.0
    %3139 = vmatprep.subr.mxu0 0.0
    %3140 = vmatpush2.msra.mxu0 0.0
    %3141 = vmatprep.subr.mxu0 0.0
    %3142 = vmatpush2.msra.mxu0 0.0
    %3143 = vmatprep.subr.mxu0 0.0
    %3144 = vmatpush2.msra.mxu0 0.0
    %3145 = vmatprep.subr.mxu0 0.0
    %3146 = vmatpush2.msra.mxu0 0.0
    %3147 = vmatprep.subr.mxu0 0.0
    %3148 = vmatpush2.msra.mxu0 0.0
    %3149 = vmatprep.mubr.f32.mxu0 0.0
    %3150 = vmatmul.mubr.f32.gmra.mxu0 %v1123
    %v3151 = vpop.f32.mrf.mxu0
    %v3152 = vadd.f32 0.0, %v3151
    %v3153 = vpop.f32.mrf.mxu0
    %v3154 = vadd.f32 0.0, %v3153
    %3155 = vdwg.mxu0
    %3156 = vmatprep.subr.mxu0 0.0
    %3157 = vmatpush1.msra.mxu0 0.0
    %3158 = vmatprep.subr.mxu0 0.0
    %3159 = vmatpush1.msra.mxu0 0.0
    %3160 = vmatprep.subr.mxu0 0.0
    %3161 = vmatpush1.msra.mxu0 0.0
    %3162 = vmatprep.subr.mxu0 0.0
    %3163 = vmatpush1.msra.mxu0 0.0
    %3164 = vmatprep.subr.mxu0 0.0
    %3165 = vmatpush1.msra.mxu0 0.0
    %3166 = vmatprep.subr.mxu0 0.0
    %3167 = vmatpush1.msra.mxu0 0.0
    %3168 = vmatprep.subr.mxu0 0.0
    %3169 = vmatpush1.msra.mxu0 0.0
    %3170 = vmatprep.subr.mxu0 0.0
    %3171 = vmatpush1.msra.mxu0 0.0
    %3172 = vmatprep.subr.mxu0 0.0
    %3173 = vmatpush1.msra.mxu0 0.0
    %3174 = vmatprep.subr.mxu0 0.0
    %3175 = vmatpush1.msra.mxu0 0.0
    %3176 = vmatprep.subr.mxu0 0.0
    %3177 = vmatpush1.msra.mxu0 0.0
    %3178 = vmatprep.subr.mxu0 0.0
    %3179 = vmatpush1.msra.mxu0 0.0
    %3180 = vmatprep.subr.mxu0 0.0
    %3181 = vmatpush1.msra.mxu0 %v3084
    %3182 = vmatprep.subr.mxu0 0.0
    %3183 = vmatpush1.msra.mxu0 %v3081
    %3184 = vmatprep.subr.mxu0 0.0
    %3185 = vmatpush1.msra.mxu0 %v3078
    %3186 = vmatprep.subr.mxu0 0.0
    %3187 = vmatpush1.msra.mxu0 %v3075
    %3188 = vmatprep.subr.mxu0 0.0
    %3189 = vmatpush2.msra.mxu0 0.0
    %3190 = vmatprep.subr.mxu0 0.0
    %3191 = vmatpush2.msra.mxu0 0.0
    %3192 = vmatprep.subr.mxu0 0.0
    %3193 = vmatpush2.msra.mxu0 0.0
    %3194 = vmatprep.subr.mxu0 0.0
    %3195 = vmatpush2.msra.mxu0 0.0
    %3196 = vmatprep.subr.mxu0 0.0
    %3197 = vmatpush2.msra.mxu0 0.0
    %3198 = vmatprep.subr.mxu0 0.0
    %3199 = vmatpush2.msra.mxu0 0.0
    %3200 = vmatprep.subr.mxu0 0.0
    %3201 = vmatpush2.msra.mxu0 0.0
    %3202 = vmatprep.subr.mxu0 0.0
    %3203 = vmatpush2.msra.mxu0 0.0
    %3204 = vmatprep.subr.mxu0 0.0
    %3205 = vmatpush2.msra.mxu0 0.0
    %3206 = vmatprep.subr.mxu0 0.0
    %3207 = vmatpush2.msra.mxu0 0.0
    %3208 = vmatprep.subr.mxu0 0.0
    %3209 = vmatpush2.msra.mxu0 0.0
    %3210 = vmatprep.subr.mxu0 0.0
    %3211 = vmatpush2.msra.mxu0 0.0
    %3212 = vmatprep.subr.mxu0 0.0
    %3213 = vmatpush2.msra.mxu0 0.0
    %3214 = vmatprep.subr.mxu0 0.0
    %3215 = vmatpush2.msra.mxu0 0.0
    %3216 = vmatprep.subr.mxu0 0.0
    %3217 = vmatpush2.msra.mxu0 0.0
    %3218 = vmatprep.subr.mxu0 0.0
    %3219 = vmatpush2.msra.mxu0 0.0
    %3220 = vmatprep.mubr.f32.mxu0 0.0
    %3221 = vmatmul.mubr.f32.gmra.mxu0 %v1123
    %v3222 = vpop.f32.mrf.mxu0
    %v3223 = vadd.f32 0.0, %v3222
    %v3224 = vpop.f32.mrf.mxu0
    %3225 = vdwg.mxu0
    %v3227 = vsel %vm201, %v3223, 0
    %3229 = vmatprep.subr.mxu0 0.0
    %3230 = vmatpush1.msra.mxu0 %v149
    %3231 = vmatprep.subr.mxu0 0.0
    %3232 = vmatpush1.msra.mxu0 %v148
    %3233 = vmatprep.subr.mxu0 0.0
    %3234 = vmatpush1.msra.mxu0 %v147
    %3235 = vmatprep.subr.mxu0 0.0
    %3236 = vmatpush1.msra.mxu0 %v146
    %3237 = vmatprep.subr.mxu0 0.0
    %3238 = vmatpush1.msra.mxu0 %v145
    %3239 = vmatprep.subr.mxu0 0.0
    %3240 = vmatpush1.msra.mxu0 %v144
    %3241 = vmatprep.subr.mxu0 0.0
    %3242 = vmatpush1.msra.mxu0 %v143
    %3243 = vmatprep.subr.mxu0 0.0
    %3244 = vmatpush1.msra.mxu0 %v142
    %3245 = vmatprep.subr.mxu0 0.0
    %3246 = vmatpush1.msra.mxu0 %v141
    %3247 = vmatprep.subr.mxu0 0.0
    %3248 = vmatpush1.msra.mxu0 %v140
    %3249 = vmatprep.subr.mxu0 0.0
    %3250 = vmatpush1.msra.mxu0 %v139
    %3251 = vmatprep.subr.mxu0 0.0
    %3252 = vmatpush1.msra.mxu0 %v138
    %3253 = vmatprep.subr.mxu0 0.0
    %3254 = vmatpush1.msra.mxu0 %v137
    %3255 = vmatprep.subr.mxu0 0.0
    %3256 = vmatpush1.msra.mxu0 %v136
    %3257 = vmatprep.subr.mxu0 0.0
    %3258 = vmatpush1.msra.mxu0 %v135
    %3259 = vmatprep.subr.mxu0 0.0
    %3260 = vmatpush1.msra.mxu0 %v134
    %3261 = vmatprep.subr.mxu0 0.0
    %3262 = vmatpush2.msra.mxu0 %v165
    %3263 = vmatprep.subr.mxu0 0.0
    %3264 = vmatpush2.msra.mxu0 %v164
    %3265 = vmatprep.subr.mxu0 0.0
    %3266 = vmatpush2.msra.mxu0 %v163
    %3267 = vmatprep.subr.mxu0 0.0
    %3268 = vmatpush2.msra.mxu0 %v162
    %3269 = vmatprep.subr.mxu0 0.0
    %3270 = vmatpush2.msra.mxu0 %v161
    %3271 = vmatprep.subr.mxu0 0.0
    %3272 = vmatpush2.msra.mxu0 %v160
    %3273 = vmatprep.subr.mxu0 0.0
    %3274 = vmatpush2.msra.mxu0 %v159
    %3275 = vmatprep.subr.mxu0 0.0
    %3276 = vmatpush2.msra.mxu0 %v158
    %3277 = vmatprep.subr.mxu0 0.0
    %3278 = vmatpush2.msra.mxu0 %v157
    %3279 = vmatprep.subr.mxu0 0.0
    %3280 = vmatpush2.msra.mxu0 %v156
    %3281 = vmatprep.subr.mxu0 0.0
    %3282 = vmatpush2.msra.mxu0 %v155
    %3283 = vmatprep.subr.mxu0 0.0
    %3284 = vmatpush2.msra.mxu0 %v154
    %3285 = vmatprep.subr.mxu0 0.0
    %3286 = vmatpush2.msra.mxu0 %v153
    %3287 = vmatprep.subr.mxu0 0.0
    %3288 = vmatpush2.msra.mxu0 %v152
    %3289 = vmatprep.subr.mxu0 0.0
    %3290 = vmatpush2.msra.mxu0 %v151
    %3291 = vmatprep.subr.mxu0 0.0
    %3292 = vmatpush2.msra.mxu0 %v150
    %3293 = vmatprep.mubr.f32.mxu0 %v3154
    %3294 = vmatmul.mubr.f32.gmra.mxu0 %v3152
    %v3295 = vpop.f32.mrf.mxu0
    %v3296 = vadd.f32 0.0, %v3295
    %v3297 = vpop.f32.mrf.mxu0
    %3298 = vdwg.mxu0
    %3299 = vmatprep.subr.mxu0 0.0
    %3300 = vmatpush1.msra.mxu0 0.0
    %3301 = vmatprep.subr.mxu0 0.0
    %3302 = vmatpush1.msra.mxu0 0.0
    %3303 = vmatprep.subr.mxu0 0.0
    %3304 = vmatpush1.msra.mxu0 0.0
    %3305 = vmatprep.subr.mxu0 0.0
    %3306 = vmatpush1.msra.mxu0 0.0
    %3307 = vmatprep.subr.mxu0 0.0
    %3308 = vmatpush1.msra.mxu0 0.0
    %3309 = vmatprep.subr.mxu0 0.0
    %3310 = vmatpush1.msra.mxu0 0.0
    %3311 = vmatprep.subr.mxu0 0.0
    %3312 = vmatpush1.msra.mxu0 0.0
    %3313 = vmatprep.subr.mxu0 0.0
    %3314 = vmatpush1.msra.mxu0 0.0
    %3315 = vmatprep.subr.mxu0 0.0
    %3316 = vmatpush1.msra.mxu0 %v173
    %3317 = vmatprep.subr.mxu0 0.0
    %3318 = vmatpush1.msra.mxu0 %v172
    %3319 = vmatprep.subr.mxu0 0.0
    %3320 = vmatpush1.msra.mxu0 %v171
    %3321 = vmatprep.subr.mxu0 0.0
    %3322 = vmatpush1.msra.mxu0 %v170
    %3323 = vmatprep.subr.mxu0 0.0
    %3324 = vmatpush1.msra.mxu0 %v169
    %3325 = vmatprep.subr.mxu0 0.0
    %3326 = vmatpush1.msra.mxu0 %v168
    %3327 = vmatprep.subr.mxu0 0.0
    %3328 = vmatpush1.msra.mxu0 %v167
    %3329 = vmatprep.subr.mxu0 0.0
    %3330 = vmatpush1.msra.mxu0 %v166
    %3331 = vmatprep.subr.mxu0 0.0
    %3332 = vmatpush2.msra.mxu0 0.0
    %3333 = vmatprep.subr.mxu0 0.0
    %3334 = vmatpush2.msra.mxu0 0.0
    %3335 = vmatprep.subr.mxu0 0.0
    %3336 = vmatpush2.msra.mxu0 0.0
    %3337 = vmatprep.subr.mxu0 0.0
    %3338 = vmatpush2.msra.mxu0 0.0
    %3339 = vmatprep.subr.mxu0 0.0
    %3340 = vmatpush2.msra.mxu0 0.0
    %3341 = vmatprep.subr.mxu0 0.0
    %3342 = vmatpush2.msra.mxu0 0.0
    %3343 = vmatprep.subr.mxu0 0.0
    %3344 = vmatpush2.msra.mxu0 0.0
    %3345 = vmatprep.subr.mxu0 0.0
    %3346 = vmatpush2.msra.mxu0 0.0
    %3347 = vmatprep.subr.mxu0 0.0
    %3348 = vmatpush2.msra.mxu0 0.0
    %3349 = vmatprep.subr.mxu0 0.0
    %3350 = vmatpush2.msra.mxu0 0.0
    %3351 = vmatprep.subr.mxu0 0.0
    %3352 = vmatpush2.msra.mxu0 0.0
    %3353 = vmatprep.subr.mxu0 0.0
    %3354 = vmatpush2.msra.mxu0 0.0
    %3355 = vmatprep.subr.mxu0 0.0
    %3356 = vmatpush2.msra.mxu0 0.0
    %3357 = vmatprep.subr.mxu0 0.0
    %3358 = vmatpush2.msra.mxu0 0.0
    %3359 = vmatprep.subr.mxu0 0.0
    %3360 = vmatpush2.msra.mxu0 0.0
    %3361 = vmatprep.subr.mxu0 0.0
    %3362 = vmatpush2.msra.mxu0 0.0
    %3363 = vmatprep.mubr.f32.mxu0 0.0
    %3364 = vmatmul.mubr.f32.gmra.mxu0 %v3227
    %v3365 = vpop.f32.mrf.mxu0
    %v3366 = vadd.f32 %v3296, %v3365
    %v3367 = vpop.f32.mrf.mxu0
    %3368 = vdwg.mxu0
    %3369 = vrot.lane.b32.xlu0 %v2872, 103
    %v3370 = vpop.permute.xlu0 %3369
    %3371 = vrot.lane.b32.xlu0 %v2873, 103
    %v3372 = vpop.permute.xlu0 %3371
    %3373 = vrot.lane.b32.xlu0 %v2874, 103
    %v3374 = vpop.permute.xlu0 %3373
    %3375 = vrot.lane.b32.xlu0 %v2875, 103
    %v3376 = vpop.permute.xlu0 %3375
    %v3377 = vsel %vm2876, %v3370, 0
    %v3379 = vsel %vm2876, %v3372, 0
    %v3381 = vsel %vm2876, %v3374, 0
    %v3383 = vsel %vm2876, %v3376, 0
    %3385 = vmatprep.subr.mxu0 0.0
    %3386 = vmatpush1.msra.mxu0 0.0
    %3387 = vmatprep.subr.mxu0 0.0
    %3388 = vmatpush1.msra.mxu0 0.0
    %3389 = vmatprep.subr.mxu0 0.0
    %3390 = vmatpush1.msra.mxu0 0.0
    %3391 = vmatprep.subr.mxu0 0.0
    %3392 = vmatpush1.msra.mxu0 0.0
    %3393 = vmatprep.subr.mxu0 0.0
    %3394 = vmatpush1.msra.mxu0 0.0
    %3395 = vmatprep.subr.mxu0 0.0
    %3396 = vmatpush1.msra.mxu0 0.0
    %3397 = vmatprep.subr.mxu0 0.0
    %3398 = vmatpush1.msra.mxu0 0.0
    %3399 = vmatprep.subr.mxu0 0.0
    %3400 = vmatpush1.msra.mxu0 0.0
    %3401 = vmatprep.subr.mxu0 0.0
    %3402 = vmatpush1.msra.mxu0 0.0
    %3403 = vmatprep.subr.mxu0 0.0
    %3404 = vmatpush1.msra.mxu0 0.0
    %3405 = vmatprep.subr.mxu0 0.0
    %3406 = vmatpush1.msra.mxu0 0.0
    %3407 = vmatprep.subr.mxu0 0.0
    %3408 = vmatpush1.msra.mxu0 0.0
    %3409 = vmatprep.subr.mxu0 0.0
    %3410 = vmatpush1.msra.mxu0 0.0
    %3411 = vmatprep.subr.mxu0 %v2894
    %3412 = vmatpush1.msra.mxu0 %v2891
    %3413 = vmatprep.subr.mxu0 %v129
    %3414 = vmatpush1.msra.mxu0 %v128
    %3415 = vmatprep.subr.mxu0 %v126
    %3416 = vmatpush1.msra.mxu0 %v125
    %3417 = vmatprep.subr.mxu0 0.0
    %3418 = vmatpush2.msra.mxu0 0.0
    %3419 = vmatprep.subr.mxu0 0.0
    %3420 = vmatpush2.msra.mxu0 0.0
    %3421 = vmatprep.subr.mxu0 0.0
    %3422 = vmatpush2.msra.mxu0 0.0
    %3423 = vmatprep.subr.mxu0 0.0
    %3424 = vmatpush2.msra.mxu0 0.0
    %3425 = vmatprep.subr.mxu0 0.0
    %3426 = vmatpush2.msra.mxu0 0.0
    %3427 = vmatprep.subr.mxu0 0.0
    %3428 = vmatpush2.msra.mxu0 0.0
    %3429 = vmatprep.subr.mxu0 0.0
    %3430 = vmatpush2.msra.mxu0 0.0
    %3431 = vmatprep.subr.mxu0 0.0
    %3432 = vmatpush2.msra.mxu0 0.0
    %3433 = vmatprep.subr.mxu0 0.0
    %3434 = vmatpush2.msra.mxu0 0.0
    %3435 = vmatprep.subr.mxu0 0.0
    %3436 = vmatpush2.msra.mxu0 0.0
    %3437 = vmatprep.subr.mxu0 0.0
    %3438 = vmatpush2.msra.mxu0 0.0
    %3439 = vmatprep.subr.mxu0 0.0
    %3440 = vmatpush2.msra.mxu0 0.0
    %3441 = vmatprep.subr.mxu0 0.0
    %3442 = vmatpush2.msra.mxu0 0.0
    %3443 = vmatprep.subr.mxu0 0.0
    %3444 = vmatpush2.msra.mxu0 0.0
    %3445 = vmatprep.subr.mxu0 0.0
    %3446 = vmatpush2.msra.mxu0 0.0
    %3447 = vmatprep.subr.mxu0 0.0
    %3448 = vmatpush2.msra.mxu0 0.0
    %3449 = vmatprep.mubr.f32.mxu0 0.0
    %3450 = vmatmul.mubr.f32.gmra.mxu0 %v3377
    %v3451 = vpop.f32.mrf.mxu0
    %v3452 = vadd.f32 0.0, %v3451
    %v3453 = vpop.f32.mrf.mxu0
    %v3454 = vadd.f32 0.0, %v3453
    %3455 = vmatprep.mubr.f32.mxu0 0.0
    %3456 = vmatmul.mubr.f32.gmra.mxu0 %v3379
    %v3457 = vpop.f32.mrf.mxu0
    %v3458 = vadd.f32 0.0, %v3457
    %v3459 = vpop.f32.mrf.mxu0
    %v3460 = vadd.f32 0.0, %v3459
    %3461 = vmatprep.mubr.f32.mxu0 0.0
    %3462 = vmatmul.mubr.f32.gmra.mxu0 %v3381
    %v3463 = vpop.f32.mrf.mxu0
    %v3464 = vadd.f32 0.0, %v3463
    %v3465 = vpop.f32.mrf.mxu0
    %v3466 = vadd.f32 0.0, %v3465
    %3467 = vmatprep.mubr.f32.mxu0 0.0
    %3468 = vmatmul.mubr.f32.gmra.mxu0 %v3383
    %v3469 = vpop.f32.mrf.mxu0
    %v3470 = vadd.f32 0.0, %v3469
    %v3471 = vpop.f32.mrf.mxu0
    %v3472 = vadd.f32 0.0, %v3471
    %3473 = vdwg.mxu0
    %3474 = vmatprep.subr.mxu0 0.0
    %3475 = vmatpush1.msra.mxu0 0.0
    %3476 = vmatprep.subr.mxu0 0.0
    %3477 = vmatpush1.msra.mxu0 0.0
    %3478 = vmatprep.subr.mxu0 0.0
    %3479 = vmatpush1.msra.mxu0 0.0
    %3480 = vmatprep.subr.mxu0 0.0
    %3481 = vmatpush1.msra.mxu0 0.0
    %3482 = vmatprep.subr.mxu0 0.0
    %3483 = vmatpush1.msra.mxu0 0.0
    %3484 = vmatprep.subr.mxu0 0.0
    %3485 = vmatpush1.msra.mxu0 0.0
    %3486 = vmatprep.subr.mxu0 0.0
    %3487 = vmatpush1.msra.mxu0 0.0
    %3488 = vmatprep.subr.mxu0 0.0
    %3489 = vmatpush1.msra.mxu0 0.0
    %3490 = vmatprep.subr.mxu0 0.0
    %3491 = vmatpush1.msra.mxu0 0.0
    %3492 = vmatprep.subr.mxu0 0.0
    %3493 = vmatpush1.msra.mxu0 0.0
    %3494 = vmatprep.subr.mxu0 0.0
    %3495 = vmatpush1.msra.mxu0 0.0
    %3496 = vmatprep.subr.mxu0 0.0
    %3497 = vmatpush1.msra.mxu0 0.0
    %3498 = vmatprep.subr.mxu0 0.0
    %3499 = vmatpush1.msra.mxu0 0.0
    %3500 = vmatprep.subr.mxu0 0.0
    %3501 = vmatpush1.msra.mxu0 %v2897
    %3502 = vmatprep.subr.mxu0 0.0
    %3503 = vmatpush1.msra.mxu0 %v130
    %3504 = vmatprep.subr.mxu0 0.0
    %3505 = vmatpush1.msra.mxu0 %v127
    %3506 = vmatprep.subr.mxu0 0.0
    %3507 = vmatpush2.msra.mxu0 0.0
    %3508 = vmatprep.subr.mxu0 0.0
    %3509 = vmatpush2.msra.mxu0 0.0
    %3510 = vmatprep.subr.mxu0 0.0
    %3511 = vmatpush2.msra.mxu0 0.0
    %3512 = vmatprep.subr.mxu0 0.0
    %3513 = vmatpush2.msra.mxu0 0.0
    %3514 = vmatprep.subr.mxu0 0.0
    %3515 = vmatpush2.msra.mxu0 0.0
    %3516 = vmatprep.subr.mxu0 0.0
    %3517 = vmatpush2.msra.mxu0 0.0
    %3518 = vmatprep.subr.mxu0 0.0
    %3519 = vmatpush2.msra.mxu0 0.0
    %3520 = vmatprep.subr.mxu0 0.0
    %3521 = vmatpush2.msra.mxu0 0.0
    %3522 = vmatprep.subr.mxu0 0.0
    %3523 = vmatpush2.msra.mxu0 0.0
    %3524 = vmatprep.subr.mxu0 0.0
    %3525 = vmatpush2.msra.mxu0 0.0
    %3526 = vmatprep.subr.mxu0 0.0
    %3527 = vmatpush2.msra.mxu0 0.0
    %3528 = vmatprep.subr.mxu0 0.0
    %3529 = vmatpush2.msra.mxu0 0.0
    %3530 = vmatprep.subr.mxu0 0.0
    %3531 = vmatpush2.msra.mxu0 0.0
    %3532 = vmatprep.subr.mxu0 0.0
    %3533 = vmatpush2.msra.mxu0 0.0
    %3534 = vmatprep.subr.mxu0 0.0
    %3535 = vmatpush2.msra.mxu0 0.0
    %3536 = vmatprep.subr.mxu0 0.0
    %3537 = vmatpush2.msra.mxu0 0.0
    %3538 = vmatprep.mubr.f32.mxu0 0.0
    %3539 = vmatmul.mubr.f32.gmra.mxu0 %v3377
    %v3540 = vpop.f32.mrf.mxu0
    %v3541 = vadd.f32 0.0, %v3540
    %v3542 = vpop.f32.mrf.mxu0
    %3543 = vmatprep.mubr.f32.mxu0 0.0
    %3544 = vmatmul.mubr.f32.gmra.mxu0 %v3379
    %v3545 = vpop.f32.mrf.mxu0
    %v3546 = vadd.f32 0.0, %v3545
    %v3547 = vpop.f32.mrf.mxu0
    %3548 = vmatprep.mubr.f32.mxu0 0.0
    %3549 = vmatmul.mubr.f32.gmra.mxu0 %v3381
    %v3550 = vpop.f32.mrf.mxu0
    %v3551 = vadd.f32 0.0, %v3550
    %v3552 = vpop.f32.mrf.mxu0
    %3553 = vmatprep.mubr.f32.mxu0 0.0
    %3554 = vmatmul.mubr.f32.gmra.mxu0 %v3383
    %v3555 = vpop.f32.mrf.mxu0
    %v3556 = vadd.f32 0.0, %v3555
    %v3557 = vpop.f32.mrf.mxu0
    %3558 = vdwg.mxu0
    %v3559 = vmul.f32 %v3452, %v52
    %v3560 = vmul.f32 %v3454, %v53
    %v3561 = vmul.f32 %v3541, %v54
    %v3562 = vmul.f32 %v3458, %v58
    %v3563 = vmul.f32 %v3460, %v59
    %v3564 = vmul.f32 %v3546, %v60
    %v3565 = vmul.f32 %v3464, %v64
    %v3566 = vmul.f32 %v3466, %v65
    %v3567 = vmul.f32 %v3551, %v66
    %v3568 = vmul.f32 %v3470, %v70
    %v3569 = vmul.f32 %v3472, %v71
    %v3570 = vmul.f32 %v3556, %v72
    %3571 = vmatprep.subr.mxu0 0.0
    %3572 = vmatpush1.msra.mxu0 0.0
    %3573 = vmatprep.subr.mxu0 0.0
    %3574 = vmatpush1.msra.mxu0 0.0
    %3575 = vmatprep.subr.mxu0 0.0
    %3576 = vmatpush1.msra.mxu0 0.0
    %3577 = vmatprep.subr.mxu0 0.0
    %3578 = vmatpush1.msra.mxu0 0.0
    %3579 = vmatprep.subr.mxu0 0.0
    %3580 = vmatpush1.msra.mxu0 0.0
    %3581 = vmatprep.subr.mxu0 0.0
    %3582 = vmatpush1.msra.mxu0 0.0
    %3583 = vmatprep.subr.mxu0 0.0
    %3584 = vmatpush1.msra.mxu0 0.0
    %3585 = vmatprep.subr.mxu0 0.0
    %3586 = vmatpush1.msra.mxu0 0.0
    %3587 = vmatprep.subr.mxu0 0.0
    %3588 = vmatpush1.msra.mxu0 0.0
    %3589 = vmatprep.subr.mxu0 0.0
    %3590 = vmatpush1.msra.mxu0 0.0
    %3591 = vmatprep.subr.mxu0 0.0
    %3592 = vmatpush1.msra.mxu0 0.0
    %3593 = vmatprep.subr.mxu0 0.0
    %3594 = vmatpush1.msra.mxu0 0.0
    %3595 = vmatprep.subr.mxu0 %v3569
    %3596 = vmatpush1.msra.mxu0 %v3568
    %3597 = vmatprep.subr.mxu0 %v3566
    %3598 = vmatpush1.msra.mxu0 %v3565
    %3599 = vmatprep.subr.mxu0 %v3563
    %3600 = vmatpush1.msra.mxu0 %v3562
    %3601 = vmatprep.subr.mxu0 %v3560
    %3602 = vmatpush1.msra.mxu0 %v3559
    %3603 = vmatprep.subr.mxu0 0.0
    %3604 = vmatpush2.msra.mxu0 0.0
    %3605 = vmatprep.subr.mxu0 0.0
    %3606 = vmatpush2.msra.mxu0 0.0
    %3607 = vmatprep.subr.mxu0 0.0
    %3608 = vmatpush2.msra.mxu0 0.0
    %3609 = vmatprep.subr.mxu0 0.0
    %3610 = vmatpush2.msra.mxu0 0.0
    %3611 = vmatprep.subr.mxu0 0.0
    %3612 = vmatpush2.msra.mxu0 0.0
    %3613 = vmatprep.subr.mxu0 0.0
    %3614 = vmatpush2.msra.mxu0 0.0
    %3615 = vmatprep.subr.mxu0 0.0
    %3616 = vmatpush2.msra.mxu0 0.0
    %3617 = vmatprep.subr.mxu0 0.0
    %3618 = vmatpush2.msra.mxu0 0.0
    %3619 = vmatprep.subr.mxu0 0.0
    %3620 = vmatpush2.msra.mxu0 0.0
    %3621 = vmatprep.subr.mxu0 0.0
    %3622 = vmatpush2.msra.mxu0 0.0
    %3623 = vmatprep.subr.mxu0 0.0
    %3624 = vmatpush2.msra.mxu0 0.0
    %3625 = vmatprep.subr.mxu0 0.0
    %3626 = vmatpush2.msra.mxu0 0.0
    %3627 = vmatprep.subr.mxu0 0.0
    %3628 = vmatpush2.msra.mxu0 0.0
    %3629 = vmatprep.subr.mxu0 0.0
    %3630 = vmatpush2.msra.mxu0 0.0
    %3631 = vmatprep.subr.mxu0 0.0
    %3632 = vmatpush2.msra.mxu0 0.0
    %3633 = vmatprep.subr.mxu0 0.0
    %3634 = vmatpush2.msra.mxu0 0.0
    %3635 = vmatprep.mubr.f32.mxu0 0.0
    %3636 = vmatmul.mubr.f32.gmra.mxu0 %v1123
    %v3637 = vpop.f32.mrf.mxu0
    %v3638 = vadd.f32 0.0, %v3637
    %v3639 = vpop.f32.mrf.mxu0
    %v3640 = vadd.f32 0.0, %v3639
    %3641 = vdwg.mxu0
    %3642 = vmatprep.subr.mxu0 0.0
    %3643 = vmatpush1.msra.mxu0 0.0
    %3644 = vmatprep.subr.mxu0 0.0
    %3645 = vmatpush1.msra.mxu0 0.0
    %3646 = vmatprep.subr.mxu0 0.0
    %3647 = vmatpush1.msra.mxu0 0.0
    %3648 = vmatprep.subr.mxu0 0.0
    %3649 = vmatpush1.msra.mxu0 0.0
    %3650 = vmatprep.subr.mxu0 0.0
    %3651 = vmatpush1.msra.mxu0 0.0
    %3652 = vmatprep.subr.mxu0 0.0
    %3653 = vmatpush1.msra.mxu0 0.0
    %3654 = vmatprep.subr.mxu0 0.0
    %3655 = vmatpush1.msra.mxu0 0.0
    %3656 = vmatprep.subr.mxu0 0.0
    %3657 = vmatpush1.msra.mxu0 0.0
    %3658 = vmatprep.subr.mxu0 0.0
    %3659 = vmatpush1.msra.mxu0 0.0
    %3660 = vmatprep.subr.mxu0 0.0
    %3661 = vmatpush1.msra.mxu0 0.0
    %3662 = vmatprep.subr.mxu0 0.0
    %3663 = vmatpush1.msra.mxu0 0.0
    %3664 = vmatprep.subr.mxu0 0.0
    %3665 = vmatpush1.msra.mxu0 0.0
    %3666 = vmatprep.subr.mxu0 0.0
    %3667 = vmatpush1.msra.mxu0 %v3570
    %3668 = vmatprep.subr.mxu0 0.0
    %3669 = vmatpush1.msra.mxu0 %v3567
    %3670 = vmatprep.subr.mxu0 0.0
    %3671 = vmatpush1.msra.mxu0 %v3564
    %3672 = vmatprep.subr.mxu0 0.0
    %3673 = vmatpush1.msra.mxu0 %v3561
    %3674 = vmatprep.subr.mxu0 0.0
    %3675 = vmatpush2.msra.mxu0 0.0
    %3676 = vmatprep.subr.mxu0 0.0
    %3677 = vmatpush2.msra.mxu0 0.0
    %3678 = vmatprep.subr.mxu0 0.0
    %3679 = vmatpush2.msra.mxu0 0.0
    %3680 = vmatprep.subr.mxu0 0.0
    %3681 = vmatpush2.msra.mxu0 0.0
    %3682 = vmatprep.subr.mxu0 0.0
    %3683 = vmatpush2.msra.mxu0 0.0
    %3684 = vmatprep.subr.mxu0 0.0
    %3685 = vmatpush2.msra.mxu0 0.0
    %3686 = vmatprep.subr.mxu0 0.0
    %3687 = vmatpush2.msra.mxu0 0.0
    %3688 = vmatprep.subr.mxu0 0.0
    %3689 = vmatpush2.msra.mxu0 0.0
    %3690 = vmatprep.subr.mxu0 0.0
    %3691 = vmatpush2.msra.mxu0 0.0
    %3692 = vmatprep.subr.mxu0 0.0
    %3693 = vmatpush2.msra.mxu0 0.0
    %3694 = vmatprep.subr.mxu0 0.0
    %3695 = vmatpush2.msra.mxu0 0.0
    %3696 = vmatprep.subr.mxu0 0.0
    %3697 = vmatpush2.msra.mxu0 0.0
    %3698 = vmatprep.subr.mxu0 0.0
    %3699 = vmatpush2.msra.mxu0 0.0
    %3700 = vmatprep.subr.mxu0 0.0
    %3701 = vmatpush2.msra.mxu0 0.0
    %3702 = vmatprep.subr.mxu0 0.0
    %3703 = vmatpush2.msra.mxu0 0.0
    %3704 = vmatprep.subr.mxu0 0.0
    %3705 = vmatpush2.msra.mxu0 0.0
    %3706 = vmatprep.mubr.f32.mxu0 0.0
    %3707 = vmatmul.mubr.f32.gmra.mxu0 %v1123
    %v3708 = vpop.f32.mrf.mxu0
    %v3709 = vadd.f32 0.0, %v3708
    %v3710 = vpop.f32.mrf.mxu0
    %3711 = vdwg.mxu0
    %v3713 = vsel %vm201, %v3709, 0
    %3715 = vmatprep.subr.mxu0 0.0
    %3716 = vmatpush1.msra.mxu0 %v149
    %3717 = vmatprep.subr.mxu0 0.0
    %3718 = vmatpush1.msra.mxu0 %v148
    %3719 = vmatprep.subr.mxu0 0.0
    %3720 = vmatpush1.msra.mxu0 %v147
    %3721 = vmatprep.subr.mxu0 0.0
    %3722 = vmatpush1.msra.mxu0 %v146
    %3723 = vmatprep.subr.mxu0 0.0
    %3724 = vmatpush1.msra.mxu0 %v145
    %3725 = vmatprep.subr.mxu0 0.0
    %3726 = vmatpush1.msra.mxu0 %v144
    %3727 = vmatprep.subr.mxu0 0.0
    %3728 = vmatpush1.msra.mxu0 %v143
    %3729 = vmatprep.subr.mxu0 0.0
    %3730 = vmatpush1.msra.mxu0 %v142
    %3731 = vmatprep.subr.mxu0 0.0
    %3732 = vmatpush1.msra.mxu0 %v141
    %3733 = vmatprep.subr.mxu0 0.0
    %3734 = vmatpush1.msra.mxu0 %v140
    %3735 = vmatprep.subr.mxu0 0.0
    %3736 = vmatpush1.msra.mxu0 %v139
    %3737 = vmatprep.subr.mxu0 0.0
    %3738 = vmatpush1.msra.mxu0 %v138
    %3739 = vmatprep.subr.mxu0 0.0
    %3740 = vmatpush1.msra.mxu0 %v137
    %3741 = vmatprep.subr.mxu0 0.0
    %3742 = vmatpush1.msra.mxu0 %v136
    %3743 = vmatprep.subr.mxu0 0.0
    %3744 = vmatpush1.msra.mxu0 %v135
    %3745 = vmatprep.subr.mxu0 0.0
    %3746 = vmatpush1.msra.mxu0 %v134
    %3747 = vmatprep.subr.mxu0 0.0
    %3748 = vmatpush2.msra.mxu0 %v165
    %3749 = vmatprep.subr.mxu0 0.0
    %3750 = vmatpush2.msra.mxu0 %v164
    %3751 = vmatprep.subr.mxu0 0.0
    %3752 = vmatpush2.msra.mxu0 %v163
    %3753 = vmatprep.subr.mxu0 0.0
    %3754 = vmatpush2.msra.mxu0 %v162
    %3755 = vmatprep.subr.mxu0 0.0
    %3756 = vmatpush2.msra.mxu0 %v161
    %3757 = vmatprep.subr.mxu0 0.0
    %3758 = vmatpush2.msra.mxu0 %v160
    %3759 = vmatprep.subr.mxu0 0.0
    %3760 = vmatpush2.msra.mxu0 %v159
    %3761 = vmatprep.subr.mxu0 0.0
    %3762 = vmatpush2.msra.mxu0 %v158
    %3763 = vmatprep.subr.mxu0 0.0
    %3764 = vmatpush2.msra.mxu0 %v157
    %3765 = vmatprep.subr.mxu0 0.0
    %3766 = vmatpush2.msra.mxu0 %v156
    %3767 = vmatprep.subr.mxu0 0.0
    %3768 = vmatpush2.msra.mxu0 %v155
    %3769 = vmatprep.subr.mxu0 0.0
    %3770 = vmatpush2.msra.mxu0 %v154
    %3771 = vmatprep.subr.mxu0 0.0
    %3772 = vmatpush2.msra.mxu0 %v153
    %3773 = vmatprep.subr.mxu0 0.0
    %3774 = vmatpush2.msra.mxu0 %v152
    %3775 = vmatprep.subr.mxu0 0.0
    %3776 = vmatpush2.msra.mxu0 %v151
    %3777 = vmatprep.subr.mxu0 0.0
    %3778 = vmatpush2.msra.mxu0 %v150
    %3779 = vmatprep.mubr.f32.mxu0 %v3640
    %3780 = vmatmul.mubr.f32.gmra.mxu0 %v3638
    %v3781 = vpop.f32.mrf.mxu0
    %v3782 = vadd.f32 0.0, %v3781
    %v3783 = vpop.f32.mrf.mxu0
    %3784 = vdwg.mxu0
    %3785 = vmatprep.subr.mxu0 0.0
    %3786 = vmatpush1.msra.mxu0 0.0
    %3787 = vmatprep.subr.mxu0 0.0
    %3788 = vmatpush1.msra.mxu0 0.0
    %3789 = vmatprep.subr.mxu0 0.0
    %3790 = vmatpush1.msra.mxu0 0.0
    %3791 = vmatprep.subr.mxu0 0.0
    %3792 = vmatpush1.msra.mxu0 0.0
    %3793 = vmatprep.subr.mxu0 0.0
    %3794 = vmatpush1.msra.mxu0 0.0
    %3795 = vmatprep.subr.mxu0 0.0
    %3796 = vmatpush1.msra.mxu0 0.0
    %3797 = vmatprep.subr.mxu0 0.0
    %3798 = vmatpush1.msra.mxu0 0.0
    %3799 = vmatprep.subr.mxu0 0.0
    %3800 = vmatpush1.msra.mxu0 0.0
    %3801 = vmatprep.subr.mxu0 0.0
    %3802 = vmatpush1.msra.mxu0 %v173
    %3803 = vmatprep.subr.mxu0 0.0
    %3804 = vmatpush1.msra.mxu0 %v172
    %3805 = vmatprep.subr.mxu0 0.0
    %3806 = vmatpush1.msra.mxu0 %v171
    %3807 = vmatprep.subr.mxu0 0.0
    %3808 = vmatpush1.msra.mxu0 %v170
    %3809 = vmatprep.subr.mxu0 0.0
    %3810 = vmatpush1.msra.mxu0 %v169
    %3811 = vmatprep.subr.mxu0 0.0
    %3812 = vmatpush1.msra.mxu0 %v168
    %3813 = vmatprep.subr.mxu0 0.0
    %3814 = vmatpush1.msra.mxu0 %v167
    %3815 = vmatprep.subr.mxu0 0.0
    %3816 = vmatpush1.msra.mxu0 %v166
    %3817 = vmatprep.subr.mxu0 0.0
    %3818 = vmatpush2.msra.mxu0 0.0
    %3819 = vmatprep.subr.mxu0 0.0
    %3820 = vmatpush2.msra.mxu0 0.0
    %3821 = vmatprep.subr.mxu0 0.0
    %3822 = vmatpush2.msra.mxu0 0.0
    %3823 = vmatprep.subr.mxu0 0.0
    %3824 = vmatpush2.msra.mxu0 0.0
    %3825 = vmatprep.subr.mxu0 0.0
    %3826 = vmatpush2.msra.mxu0 0.0
    %3827 = vmatprep.subr.mxu0 0.0
    %3828 = vmatpush2.msra.mxu0 0.0
    %3829 = vmatprep.subr.mxu0 0.0
    %3830 = vmatpush2.msra.mxu0 0.0
    %3831 = vmatprep.subr.mxu0 0.0
    %3832 = vmatpush2.msra.mxu0 0.0
    %3833 = vmatprep.subr.mxu0 0.0
    %3834 = vmatpush2.msra.mxu0 0.0
    %3835 = vmatprep.subr.mxu0 0.0
    %3836 = vmatpush2.msra.mxu0 0.0
    %3837 = vmatprep.subr.mxu0 0.0
    %3838 = vmatpush2.msra.mxu0 0.0
    %3839 = vmatprep.subr.mxu0 0.0
    %3840 = vmatpush2.msra.mxu0 0.0
    %3841 = vmatprep.subr.mxu0 0.0
    %3842 = vmatpush2.msra.mxu0 0.0
    %3843 = vmatprep.subr.mxu0 0.0
    %3844 = vmatpush2.msra.mxu0 0.0
    %3845 = vmatprep.subr.mxu0 0.0
    %3846 = vmatpush2.msra.mxu0 0.0
    %3847 = vmatprep.subr.mxu0 0.0
    %3848 = vmatpush2.msra.mxu0 0.0
    %3849 = vmatprep.mubr.f32.mxu0 0.0
    %3850 = vmatmul.mubr.f32.gmra.mxu0 %v3713
    %v3851 = vpop.f32.mrf.mxu0
    %v3852 = vadd.f32 %v3782, %v3851
    %v3853 = vpop.f32.mrf.mxu0
    %3854 = vdwg.mxu0
    %v3856 = vrot.slane %v3852, 7
    %v3858 = vsel %vm2889, %v3366, %v3856
    %v3860 = vlaneseq
    %v3861 = vshrl.u32 %v3860, 7
    %v3862 = vsub.s32 0, %v3861
    %v3863 = vrot.slane %v174, %v3862
    %v3865 = vadd.f32 %v3858, %v3863
    %3866 = vst [vmem:[#allocation2] sm:$0x3] %v3865
    // Predicated region
    $region54: #{sample_conv_net_forward.1} parent=1 // pred_check
      _
    $region55: #{sample_conv_net_forward.1} parent=1 // pred_check_branch
      %3868 = sbr.rel (0) target = $region57
    $region56: #{sample_conv_net_forward.1} parent=1 // pred_region
      %s3870 = ssub.s32 32, 32
      %3871 = vsyncadd [#allocation3], %s3870
      %s3873 = sshll.u32 [#allocation2], 4
      %s3874 = int_to_ptr.vmem [resolvable:$true] %s3873
      %3876 = dma.vmem_to_hbm [thread:$0]  %s3874, 32, %s13, [#allocation3]
    $region57: #{sample_conv_net_forward.1} parent=1 // pred_fallthru
      _
    // Predicated region
    $region58: #{sample_conv_net_forward.1} parent=1 // pred_check
      _
    $region59: #{sample_conv_net_forward.1} parent=1 // pred_check_branch
      %3878 = sbr.rel (0) target = $region61
    $region60: #{sample_conv_net_forward.1} parent=1 // pred_region
      %3879 = dma.done [#allocation3], 32
    $region61: #{sample_conv_net_forward.1} parent=1 // pred_fallthru
      _
    %3880 = vsyncpa [#allocation3], 1

</llo_original>
